<compile_context>
chip_gen: v6e
topology: v6e:2x2x1
jax: 0.10.0
libtpu: 0.0.40
codegen_flags: <defaults>
</compile_context>

<pallas_src>
import jax
import jax.numpy as jnp
from jax import lax
from jax.experimental import pallas as pl
from jax.experimental.pallas import tpu as pltpu


def _round_up(n, m):
    return ((n + m - 1) // m) * m


# ----------------------------------------------------------------------------
# Pallas kernel: whole sequence in one grid step.
# ----------------------------------------------------------------------------
def lstm_kernel(x_ref, w1i_ref, w1h_ref, b1_ref,
                w2c_ref, b2_ref, wfc_ref, bfc_ref,
                out_ref, xp_ref):
    T, Bp, Dp = x_ref.shape
    Hp = w1h_ref.shape[0]
    G = 4 * Hp

    # ---- Phase 1: hoisted layer-1 input projection (one big MXU matmul). ----
    # (T*Bp, Dp) @ (Dp, 4Hp) + b1  -> stored time-major in VMEM scratch.
    x2d = x_ref[...].reshape(T * Bp, Dp)
    xp = (jnp.dot(x2d, w1i_ref[...], preferred_element_type=jnp.float32)
          + b1_ref[...])
    xp_ref[...] = xp.reshape(T, Bp, G)

    w1h = w1h_ref[...]          # (Hp, 4Hp)   layer-1 recurrent weight
    w2c = w2c_ref[...]          # (2Hp, 4Hp)  fused layer-2 [W_ih; W_hh]
    b2 = b2_ref[...]            # (1, 4Hp)

    def gates_to_hc(gates, c_prev):
        # Lane-aligned gate slices (Hp is a multiple of 128): i | f | g | o.
        i_g = jax.nn.sigmoid(gates[:, 0 * Hp:1 * Hp])
        f_g = jax.nn.sigmoid(gates[:, 1 * Hp:2 * Hp])
        g_g = jnp.tanh(gates[:, 2 * Hp:3 * Hp])
        o_g = jax.nn.sigmoid(gates[:, 3 * Hp:4 * Hp])
        c_new = f_g * c_prev + i_g * g_g
        h_new = o_g * jnp.tanh(c_new)
        return h_new, c_new

    # ---- Phase 2: recurrence over time, state carried in vregs. ----
    def step(t, carry):
        h1, c1, h2, c2 = carry
        # Layer 1: only the recurrent matmul remains on the serial path.
        g1 = xp_ref[t] + jnp.dot(h1, w1h, preferred_element_type=jnp.float32)
        h1, c1 = gates_to_hc(g1, c1)
        # Layer 2: fused single matmul [h1(t) | h2(t-1)] @ [[W2_ih^T];[W2_hh^T]].
        hh = jnp.concatenate([h1, h2], axis=-1)          # (Bp, 2Hp)
        g2 = jnp.dot(hh, w2c, preferred_element_type=jnp.float32) + b2
        h2, c2 = gates_to_hc(g2, c2)
        return (h1, c1, h2, c2)

    z = jnp.zeros((Bp, Hp), jnp.float32)                 # h0 = c0 = 0
    _, _, h2, _ = lax.fori_loop(0, T, step, (z, z, z, z), unroll=True)

    # ---- Phase 3: FC head on the last layer-2 hidden state (lane-dense). ----
    out_ref[...] = (jnp.dot(h2, wfc_ref[...], preferred_element_type=jnp.float32)
                    + bfc_ref[...]).astype(out_ref.dtype)


# ----------------------------------------------------------------------------
# Wrapper: padding / weight packing + pallas_call
# ----------------------------------------------------------------------------
def lstm_model_forward(x, params):
    """x: (B, T, D) float32 (batch_first, like the PyTorch module)."""
    B, T, D = x.shape
    H = params["w1h"].shape[0]
    O = params["wfc"].shape[1]

    Bp = _round_up(B, 8)
    Dp = _round_up(D, 128)
    Hp = _round_up(H, 128)
    Op = _round_up(O, 128)

    def pad_gate_cols(w):
        # (..., 4H) -> (..., 4Hp): pad each gate block i|f|g|o from H to Hp.
        lead = w.shape[:-1]
        w4 = w.reshape(lead + (4, H))
        w4 = jnp.pad(w4, [(0, 0)] * len(lead) + [(0, 0), (0, Hp - H)])
        return w4.reshape(lead + (4 * Hp,))

    w1i = pad_gate_cols(jnp.pad(params["w1i"], ((0, Dp - D), (0, 0))))
    w1h = pad_gate_cols(jnp.pad(params["w1h"], ((0, Hp - H), (0, 0))))
    b1 = pad_gate_cols(params["b1"])
    w2i = pad_gate_cols(jnp.pad(params["w2i"], ((0, Hp - H), (0, 0))))
    w2h = pad_gate_cols(jnp.pad(params["w2h"], ((0, Hp - H), (0, 0))))
    w2c = jnp.concatenate([w2i, w2h], axis=0)            # (2Hp, 4Hp) fused
    b2 = pad_gate_cols(params["b2"])
    wfc = jnp.pad(params["wfc"], ((0, Hp - H), (0, Op - O)))
    bfc = jnp.pad(params["bfc"], ((0, 0), (0, Op - O)))

    # Time-major, zero-padded input, resident in VMEM for the whole kernel.
    x_tm = jnp.transpose(x, (1, 0, 2))                    # (T, B, D)
    x_tm = jnp.pad(x_tm, ((0, 0), (0, Bp - B), (0, Dp - D)))

    kernel = pl.pallas_call(
        lstm_kernel,
        out_shape=jax.ShapeDtypeStruct((Bp, Op), jnp.float32),
        grid_spec=pltpu.PrefetchScalarGridSpec(
            num_scalar_prefetch=0,
            grid=(1,),
            in_specs=[
                pl.BlockSpec((T, Bp, Dp), lambda i: (0, 0, 0)),     # x (whole seq)
                pl.BlockSpec((Dp, 4 * Hp), lambda i: (0, 0)),       # W1_ih^T
                pl.BlockSpec((Hp, 4 * Hp), lambda i: (0, 0)),       # W1_hh^T
                pl.BlockSpec((1, 4 * Hp), lambda i: (0, 0)),        # b1
                pl.BlockSpec((2 * Hp, 4 * Hp), lambda i: (0, 0)),   # [W2_ih;W2_hh]^T
                pl.BlockSpec((1, 4 * Hp), lambda i: (0, 0)),        # b2
                pl.BlockSpec((Hp, Op), lambda i: (0, 0)),           # W_fc^T
                pl.BlockSpec((1, Op), lambda i: (0, 0)),            # b_fc
            ],
            out_specs=pl.BlockSpec((Bp, Op), lambda i: (0, 0)),
            scratch_shapes=[
                pltpu.VMEM((T, Bp, 4 * Hp), jnp.float32),   # precomputed x @ W1_ih
            ],
        ),
        compiler_params=pltpu.CompilerParams(
            dimension_semantics=("arbitrary",)),
    )
    out_p = kernel(x_tm, w1i, w1h, b1, w2c, b2, wfc, bfc)
    return out_p[:B, :O]


# ----------------------------------------------------------------------------
# Pure-JAX reference (mirrors torch.nn.LSTM + Linear semantics)
# ----------------------------------------------------------------------------
def lstm_model_ref(x, params):
    B, T, D = x.shape
    H = params["w1h"].shape[0]

    def cell(x_in, h, c, wi, wh, b):
        g = x_in @ wi + h @ wh + b
        i_g = jax.nn.sigmoid(g[:, :H])
        f_g = jax.nn.sigmoid(g[:, H:2 * H])
        g_g = jnp.tanh(g[:, 2 * H:3 * H])
        o_g = jax.nn.sigmoid(g[:, 3 * H:])
        c = f_g * c + i_g * g_g
        h = o_g * jnp.tanh(c)
        return h, c

    def step(carry, x_t):
        h1, c1, h2, c2 = carry
        h1, c1 = cell(x_t, h1, c1, params["w1i"], params["w1h"], params["b1"])
        h2, c2 = cell(h1, h2, c2, params["w2i"], params["w2h"], params["b2"])
        return (h1, c1, h2, c2), None

    z = jnp.zeros((B, H), jnp.float32)
    (h1, c1, h2, c2), _ = lax.scan(step, (z, z, z, z),
                                   jnp.transpose(x, (1, 0, 2)))
    return h2 @ params["wfc"] + params["bfc"]


# ----------------------------------------------------------------------------
# Deterministic parameter init (PyTorch-style uniform(-1/sqrt(H), 1/sqrt(H)))
# ----------------------------------------------------------------------------
def init_params(key, input_size, hidden_size, output_size):
    H, D, O = hidden_size, input_size, output_size
    k = 1.0 / jnp.sqrt(jnp.float32(H))
    keys = jax.random.split(key, 8)

    def u(kk, shape):
        return jax.random.uniform(kk, shape, jnp.float32, minval=-k, maxval=k)

    return {
        # layer 1: weights stored transposed for x @ W^T convenience
        "w1i": u(keys[0], (D, 4 * H)),
        "w1h": u(keys[1], (H, 4 * H)),
        "b1":  u(keys[2], (1, 4 * H)),   # combined (b_ih + b_hh)
        # layer 2
        "w2i": u(keys[3], (H, 4 * H)),
        "w2h": u(keys[4], (H, 4 * H)),
        "b2":  u(keys[5], (1, 4 * H)),
        # fc head
        "wfc": u(keys[6], (H, O)),
        "bfc": u(keys[7], (1, O)),
    }


if __name__ == "__main__":
    # Small shapes consistent with the module (input_size=13 kept from source;
    # hidden / seq / output scaled down).
    batch = 2
    seq_length = 8
    input_size = 13
    hidden_size = 32
    output_size = 8   # output_size == future_steps == seq_length in the module

    key = jax.random.PRNGKey(0)
    kx, kp = jax.random.split(key)
    x = jax.random.normal(kx, (batch, seq_length, input_size), jnp.float32)
    params = init_params(kp, input_size, hidden_size, output_size)

    out = lstm_model_forward(x, params)
    out = jax.block_until_ready(out)

    ref = lstm_model_ref(x, params)
    assert out.shape == (batch, output_size)
    assert jnp.allclose(out, ref, atol=1e-4, rtol=1e-4), (
        f"max abs err = {jnp.max(jnp.abs(out - ref))}")

    print("KERNEL_OK")
</pallas_src>

<mosaic_0001>
module attributes {stable_mosaic.version = 11 : i64} {
  func.func @lstm_kernel(%arg0: i32, %arg1: memref<8x8x128xf32, #tpu.memory_space<vmem>>, %arg2: memref<128x512xf32, #tpu.memory_space<vmem>>, %arg3: memref<128x512xf32, #tpu.memory_space<vmem>>, %arg4: memref<1x512xf32, #tpu.memory_space<vmem>>, %arg5: memref<256x512xf32, #tpu.memory_space<vmem>>, %arg6: memref<1x512xf32, #tpu.memory_space<vmem>>, %arg7: memref<128x128xf32, #tpu.memory_space<vmem>>, %arg8: memref<1x128xf32, #tpu.memory_space<vmem>>, %arg9: memref<8x128xf32, #tpu.memory_space<vmem>>, %arg10: memref<8x8x512xf32, #tpu.memory_space<vmem>>) attributes {dimension_semantics = [#tpu.dimension_semantics<arbitrary>], iteration_bounds = array<i64: 1>, scalar_prefetch = 0 : i64, scratch_operands = 1 : i64, tpu.core_type = #tpu.core_type<tc>, window_params = [{pipeline_mode = #tpu.pipeline_mode<synchronous>, transform_indices = @transform_0, window_bounds = array<i64: 8, 8, 128>}, {pipeline_mode = #tpu.pipeline_mode<synchronous>, transform_indices = @transform_1, window_bounds = array<i64: 128, 512>}, {pipeline_mode = #tpu.pipeline_mode<synchronous>, transform_indices = @transform_2, window_bounds = array<i64: 128, 512>}, {pipeline_mode = #tpu.pipeline_mode<synchronous>, transform_indices = @transform_3, window_bounds = array<i64: 1, 512>}, {pipeline_mode = #tpu.pipeline_mode<synchronous>, transform_indices = @transform_4, window_bounds = array<i64: 256, 512>}, {pipeline_mode = #tpu.pipeline_mode<synchronous>, transform_indices = @transform_5, window_bounds = array<i64: 1, 512>}, {pipeline_mode = #tpu.pipeline_mode<synchronous>, transform_indices = @transform_6, window_bounds = array<i64: 128, 128>}, {pipeline_mode = #tpu.pipeline_mode<synchronous>, transform_indices = @transform_7, window_bounds = array<i64: 1, 128>}, {pipeline_mode = #tpu.pipeline_mode<synchronous>, transform_indices = @transform_8, window_bounds = array<i64: 8, 128>}]} {
    %c0 = arith.constant 0 : index
    %c0_0 = arith.constant 0 : index
    %c0_1 = arith.constant 0 : index
    %0 = vector.load %arg1[%c0, %c0_0, %c0_1] : memref<8x8x128xf32, #tpu.memory_space<vmem>>, vector<8x8x128xf32>
    %1 = vector.shape_cast %0 : vector<8x8x128xf32> to vector<64x128xf32>
    %c0_2 = arith.constant 0 : index
    %c0_3 = arith.constant 0 : index
    %2 = vector.load %arg2[%c0_2, %c0_3] : memref<128x512xf32, #tpu.memory_space<vmem>>, vector<128x512xf32>
    %cst = arith.constant dense<0.000000e+00> : vector<64x512xf32>
    %3 = tpu.matmul %1, %2, %cst {dimension_numbers = #tpu.dot_dimension_numbers<[1], [0], [0], [1], [0, 0, 1, 1], [], []>} : vector<64x128xf32>, vector<128x512xf32>, vector<64x512xf32> -> vector<64x512xf32>
    %c0_4 = arith.constant 0 : index
    %c0_5 = arith.constant 0 : index
    %4 = vector.load %arg4[%c0_4, %c0_5] : memref<1x512xf32, #tpu.memory_space<vmem>>, vector<1x512xf32>
    %5 = vector.broadcast %4 : vector<1x512xf32> to vector<64x512xf32>
    %6 = arith.addf %3, %5 : vector<64x512xf32>
    %7 = vector.shape_cast %6 : vector<64x512xf32> to vector<8x8x512xf32>
    %c0_6 = arith.constant 0 : index
    %c0_7 = arith.constant 0 : index
    %c0_8 = arith.constant 0 : index
    %8 = vector.load %arg10[%c0_6, %c0_7, %c0_8] : memref<8x8x512xf32, #tpu.memory_space<vmem>>, vector<8x8x512xf32>
    tpu.vector_store %arg10[%c0_6, %c0_7, %c0_8], %7 {strides = array<i32>} : memref<8x8x512xf32, #tpu.memory_space<vmem>>, vector<8x8x512xf32>,
    %c0_9 = arith.constant 0 : index
    %c0_10 = arith.constant 0 : index
    %9 = vector.load %arg3[%c0_9, %c0_10] : memref<128x512xf32, #tpu.memory_space<vmem>>, vector<128x512xf32>
    %c0_11 = arith.constant 0 : index
    %c0_12 = arith.constant 0 : index
    %10 = vector.load %arg5[%c0_11, %c0_12] : memref<256x512xf32, #tpu.memory_space<vmem>>, vector<256x512xf32>
    %c0_13 = arith.constant 0 : index
    %c0_14 = arith.constant 0 : index
    %11 = vector.load %arg6[%c0_13, %c0_14] : memref<1x512xf32, #tpu.memory_space<vmem>>, vector<1x512xf32>
    %cst_15 = arith.constant 0.000000e+00 : f32
    %12 = vector.broadcast %cst_15 : f32 to vector<8x128xf32>
    %c0_i32 = arith.constant 0 : i32
    %13 = arith.index_cast %c0_i32 : i32 to index
    %c0_16 = arith.constant 0 : index
    %c0_17 = arith.constant 0 : index
    %14 = vector.load %arg10[%13, %c0_16, %c0_17] : memref<8x8x512xf32, #tpu.memory_space<vmem>>, vector<1x8x512xf32>
    %15 = vector.shape_cast %14 : vector<1x8x512xf32> to vector<8x512xf32>
    %cst_18 = arith.constant dense<0.000000e+00> : vector<8x512xf32>
    %16 = tpu.matmul %12, %9, %cst_18 {dimension_numbers = #tpu.dot_dimension_numbers<[1], [0], [0], [1], [0, 0, 1, 1], [], []>} : vector<8x128xf32>, vector<128x512xf32>, vector<8x512xf32> -> vector<8x512xf32>
    %17 = arith.addf %15, %16 : vector<8x512xf32>
    %18 = vector.extract_strided_slice %17 {offsets = [0, 0], sizes = [8, 128], strides = [1, 1]} : vector<8x512xf32> to vector<8x128xf32>
    %19 = arith.negf %18 : vector<8x128xf32>
    %20 = math.exp %19 : vector<8x128xf32>
    %cst_19 = arith.constant 1.000000e+00 : f32
    %21 = vector.broadcast %cst_19 : f32 to vector<8x128xf32>
    %22 = arith.addf %21, %20 : vector<8x128xf32>
    %23 = arith.divf %21, %22 : vector<8x128xf32>
    %24 = vector.extract_strided_slice %17 {offsets = [0, 128], sizes = [8, 128], strides = [1, 1]} : vector<8x512xf32> to vector<8x128xf32>
    %25 = arith.negf %24 : vector<8x128xf32>
    %26 = math.exp %25 : vector<8x128xf32>
    %cst_20 = arith.constant 1.000000e+00 : f32
    %27 = vector.broadcast %cst_20 : f32 to vector<8x128xf32>
    %28 = arith.addf %27, %26 : vector<8x128xf32>
    %29 = arith.divf %27, %28 : vector<8x128xf32>
    %30 = vector.extract_strided_slice %17 {offsets = [0, 256], sizes = [8, 128], strides = [1, 1]} : vector<8x512xf32> to vector<8x128xf32>
    %31 = math.tanh %30 : vector<8x128xf32>
    %32 = vector.extract_strided_slice %17 {offsets = [0, 384], sizes = [8, 128], strides = [1, 1]} : vector<8x512xf32> to vector<8x128xf32>
    %33 = arith.negf %32 : vector<8x128xf32>
    %34 = math.exp %33 : vector<8x128xf32>
    %cst_21 = arith.constant 1.000000e+00 : f32
    %35 = vector.broadcast %cst_21 : f32 to vector<8x128xf32>
    %36 = arith.addf %35, %34 : vector<8x128xf32>
    %37 = arith.divf %35, %36 : vector<8x128xf32>
    %38 = arith.mulf %29, %12 : vector<8x128xf32>
    %39 = arith.mulf %23, %31 : vector<8x128xf32>
    %40 = arith.addf %38, %39 : vector<8x128xf32>
    %41 = math.tanh %40 : vector<8x128xf32>
    %42 = arith.mulf %37, %41 : vector<8x128xf32>
    %43 = tpu.concatenate %42, %12 in 1 : vector<8x128xf32>, vector<8x128xf32> -> vector<8x256xf32>
    %cst_22 = arith.constant dense<0.000000e+00> : vector<8x512xf32>
    %44 = tpu.matmul %43, %10, %cst_22 {dimension_numbers = #tpu.dot_dimension_numbers<[1], [0], [0], [1], [0, 0, 1, 1], [], []>} : vector<8x256xf32>, vector<256x512xf32>, vector<8x512xf32> -> vector<8x512xf32>
    %45 = vector.broadcast %11 : vector<1x512xf32> to vector<8x512xf32>
    %46 = arith.addf %44, %45 : vector<8x512xf32>
    %47 = vector.extract_strided_slice %46 {offsets = [0, 0], sizes = [8, 128], strides = [1, 1]} : vector<8x512xf32> to vector<8x128xf32>
    %48 = arith.negf %47 : vector<8x128xf32>
    %49 = math.exp %48 : vector<8x128xf32>
    %cst_23 = arith.constant 1.000000e+00 : f32
    %50 = vector.broadcast %cst_23 : f32 to vector<8x128xf32>
    %51 = arith.addf %50, %49 : vector<8x128xf32>
    %52 = arith.divf %50, %51 : vector<8x128xf32>
    %53 = vector.extract_strided_slice %46 {offsets = [0, 128], sizes = [8, 128], strides = [1, 1]} : vector<8x512xf32> to vector<8x128xf32>
    %54 = arith.negf %53 : vector<8x128xf32>
    %55 = math.exp %54 : vector<8x128xf32>
    %cst_24 = arith.constant 1.000000e+00 : f32
    %56 = vector.broadcast %cst_24 : f32 to vector<8x128xf32>
    %57 = arith.addf %56, %55 : vector<8x128xf32>
    %58 = arith.divf %56, %57 : vector<8x128xf32>
    %59 = vector.extract_strided_slice %46 {offsets = [0, 256], sizes = [8, 128], strides = [1, 1]} : vector<8x512xf32> to vector<8x128xf32>
    %60 = math.tanh %59 : vector<8x128xf32>
    %61 = vector.extract_strided_slice %46 {offsets = [0, 384], sizes = [8, 128], strides = [1, 1]} : vector<8x512xf32> to vector<8x128xf32>
    %62 = arith.negf %61 : vector<8x128xf32>
    %63 = math.exp %62 : vector<8x128xf32>
    %cst_25 = arith.constant 1.000000e+00 : f32
    %64 = vector.broadcast %cst_25 : f32 to vector<8x128xf32>
    %65 = arith.addf %64, %63 : vector<8x128xf32>
    %66 = arith.divf %64, %65 : vector<8x128xf32>
    %67 = arith.mulf %58, %12 : vector<8x128xf32>
    %68 = arith.mulf %52, %60 : vector<8x128xf32>
    %69 = arith.addf %67, %68 : vector<8x128xf32>
    %70 = math.tanh %69 : vector<8x128xf32>
    %71 = arith.mulf %66, %70 : vector<8x128xf32>
    %c1_i32 = arith.constant 1 : i32
    %72 = arith.index_cast %c1_i32 : i32 to index
    %c0_26 = arith.constant 0 : index
    %c0_27 = arith.constant 0 : index
    %73 = vector.load %arg10[%72, %c0_26, %c0_27] : memref<8x8x512xf32, #tpu.memory_space<vmem>>, vector<1x8x512xf32>
    %74 = vector.shape_cast %73 : vector<1x8x512xf32> to vector<8x512xf32>
    %cst_28 = arith.constant dense<0.000000e+00> : vector<8x512xf32>
    %75 = tpu.matmul %42, %9, %cst_28 {dimension_numbers = #tpu.dot_dimension_numbers<[1], [0], [0], [1], [0, 0, 1, 1], [], []>} : vector<8x128xf32>, vector<128x512xf32>, vector<8x512xf32> -> vector<8x512xf32>
    %76 = arith.addf %74, %75 : vector<8x512xf32>
    %77 = vector.extract_strided_slice %76 {offsets = [0, 0], sizes = [8, 128], strides = [1, 1]} : vector<8x512xf32> to vector<8x128xf32>
    %78 = arith.negf %77 : vector<8x128xf32>
    %79 = math.exp %78 : vector<8x128xf32>
    %cst_29 = arith.constant 1.000000e+00 : f32
    %80 = vector.broadcast %cst_29 : f32 to vector<8x128xf32>
    %81 = arith.addf %80, %79 : vector<8x128xf32>
    %82 = arith.divf %80, %81 : vector<8x128xf32>
    %83 = vector.extract_strided_slice %76 {offsets = [0, 128], sizes = [8, 128], strides = [1, 1]} : vector<8x512xf32> to vector<8x128xf32>
    %84 = arith.negf %83 : vector<8x128xf32>
    %85 = math.exp %84 : vector<8x128xf32>
    %cst_30 = arith.constant 1.000000e+00 : f32
    %86 = vector.broadcast %cst_30 : f32 to vector<8x128xf32>
    %87 = arith.addf %86, %85 : vector<8x128xf32>
    %88 = arith.divf %86, %87 : vector<8x128xf32>
    %89 = vector.extract_strided_slice %76 {offsets = [0, 256], sizes = [8, 128], strides = [1, 1]} : vector<8x512xf32> to vector<8x128xf32>
    %90 = math.tanh %89 : vector<8x128xf32>
    %91 = vector.extract_strided_slice %76 {offsets = [0, 384], sizes = [8, 128], strides = [1, 1]} : vector<8x512xf32> to vector<8x128xf32>
    %92 = arith.negf %91 : vector<8x128xf32>
    %93 = math.exp %92 : vector<8x128xf32>
    %cst_31 = arith.constant 1.000000e+00 : f32
    %94 = vector.broadcast %cst_31 : f32 to vector<8x128xf32>
    %95 = arith.addf %94, %93 : vector<8x128xf32>
    %96 = arith.divf %94, %95 : vector<8x128xf32>
    %97 = arith.mulf %88, %40 : vector<8x128xf32>
    %98 = arith.mulf %82, %90 : vector<8x128xf32>
    %99 = arith.addf %97, %98 : vector<8x128xf32>
    %100 = math.tanh %99 : vector<8x128xf32>
    %101 = arith.mulf %96, %100 : vector<8x128xf32>
    %102 = tpu.concatenate %101, %71 in 1 : vector<8x128xf32>, vector<8x128xf32> -> vector<8x256xf32>
    %cst_32 = arith.constant dense<0.000000e+00> : vector<8x512xf32>
    %103 = tpu.matmul %102, %10, %cst_32 {dimension_numbers = #tpu.dot_dimension_numbers<[1], [0], [0], [1], [0, 0, 1, 1], [], []>} : vector<8x256xf32>, vector<256x512xf32>, vector<8x512xf32> -> vector<8x512xf32>
    %104 = vector.broadcast %11 : vector<1x512xf32> to vector<8x512xf32>
    %105 = arith.addf %103, %104 : vector<8x512xf32>
    %106 = vector.extract_strided_slice %105 {offsets = [0, 0], sizes = [8, 128], strides = [1, 1]} : vector<8x512xf32> to vector<8x128xf32>
    %107 = arith.negf %106 : vector<8x128xf32>
    %108 = math.exp %107 : vector<8x128xf32>
    %cst_33 = arith.constant 1.000000e+00 : f32
    %109 = vector.broadcast %cst_33 : f32 to vector<8x128xf32>
    %110 = arith.addf %109, %108 : vector<8x128xf32>
    %111 = arith.divf %109, %110 : vector<8x128xf32>
    %112 = vector.extract_strided_slice %105 {offsets = [0, 128], sizes = [8, 128], strides = [1, 1]} : vector<8x512xf32> to vector<8x128xf32>
    %113 = arith.negf %112 : vector<8x128xf32>
    %114 = math.exp %113 : vector<8x128xf32>
    %cst_34 = arith.constant 1.000000e+00 : f32
    %115 = vector.broadcast %cst_34 : f32 to vector<8x128xf32>
    %116 = arith.addf %115, %114 : vector<8x128xf32>
    %117 = arith.divf %115, %116 : vector<8x128xf32>
    %118 = vector.extract_strided_slice %105 {offsets = [0, 256], sizes = [8, 128], strides = [1, 1]} : vector<8x512xf32> to vector<8x128xf32>
    %119 = math.tanh %118 : vector<8x128xf32>
    %120 = vector.extract_strided_slice %105 {offsets = [0, 384], sizes = [8, 128], strides = [1, 1]} : vector<8x512xf32> to vector<8x128xf32>
    %121 = arith.negf %120 : vector<8x128xf32>
    %122 = math.exp %121 : vector<8x128xf32>
    %cst_35 = arith.constant 1.000000e+00 : f32
    %123 = vector.broadcast %cst_35 : f32 to vector<8x128xf32>
    %124 = arith.addf %123, %122 : vector<8x128xf32>
    %125 = arith.divf %123, %124 : vector<8x128xf32>
    %126 = arith.mulf %117, %69 : vector<8x128xf32>
    %127 = arith.mulf %111, %119 : vector<8x128xf32>
    %128 = arith.addf %126, %127 : vector<8x128xf32>
    %129 = math.tanh %128 : vector<8x128xf32>
    %130 = arith.mulf %125, %129 : vector<8x128xf32>
    %c2_i32 = arith.constant 2 : i32
    %131 = arith.index_cast %c2_i32 : i32 to index
    %c0_36 = arith.constant 0 : index
    %c0_37 = arith.constant 0 : index
    %132 = vector.load %arg10[%131, %c0_36, %c0_37] : memref<8x8x512xf32, #tpu.memory_space<vmem>>, vector<1x8x512xf32>
    %133 = vector.shape_cast %132 : vector<1x8x512xf32> to vector<8x512xf32>
    %cst_38 = arith.constant dense<0.000000e+00> : vector<8x512xf32>
    %134 = tpu.matmul %101, %9, %cst_38 {dimension_numbers = #tpu.dot_dimension_numbers<[1], [0], [0], [1], [0, 0, 1, 1], [], []>} : vector<8x128xf32>, vector<128x512xf32>, vector<8x512xf32> -> vector<8x512xf32>
    %135 = arith.addf %133, %134 : vector<8x512xf32>
    %136 = vector.extract_strided_slice %135 {offsets = [0, 0], sizes = [8, 128], strides = [1, 1]} : vector<8x512xf32> to vector<8x128xf32>
    %137 = arith.negf %136 : vector<8x128xf32>
    %138 = math.exp %137 : vector<8x128xf32>
    %cst_39 = arith.constant 1.000000e+00 : f32
    %139 = vector.broadcast %cst_39 : f32 to vector<8x128xf32>
    %140 = arith.addf %139, %138 : vector<8x128xf32>
    %141 = arith.divf %139, %140 : vector<8x128xf32>
    %142 = vector.extract_strided_slice %135 {offsets = [0, 128], sizes = [8, 128], strides = [1, 1]} : vector<8x512xf32> to vector<8x128xf32>
    %143 = arith.negf %142 : vector<8x128xf32>
    %144 = math.exp %143 : vector<8x128xf32>
    %cst_40 = arith.constant 1.000000e+00 : f32
    %145 = vector.broadcast %cst_40 : f32 to vector<8x128xf32>
    %146 = arith.addf %145, %144 : vector<8x128xf32>
    %147 = arith.divf %145, %146 : vector<8x128xf32>
    %148 = vector.extract_strided_slice %135 {offsets = [0, 256], sizes = [8, 128], strides = [1, 1]} : vector<8x512xf32> to vector<8x128xf32>
    %149 = math.tanh %148 : vector<8x128xf32>
    %150 = vector.extract_strided_slice %135 {offsets = [0, 384], sizes = [8, 128], strides = [1, 1]} : vector<8x512xf32> to vector<8x128xf32>
    %151 = arith.negf %150 : vector<8x128xf32>
    %152 = math.exp %151 : vector<8x128xf32>
    %cst_41 = arith.constant 1.000000e+00 : f32
    %153 = vector.broadcast %cst_41 : f32 to vector<8x128xf32>
    %154 = arith.addf %153, %152 : vector<8x128xf32>
    %155 = arith.divf %153, %154 : vector<8x128xf32>
    %156 = arith.mulf %147, %99 : vector<8x128xf32>
    %157 = arith.mulf %141, %149 : vector<8x128xf32>
    %158 = arith.addf %156, %157 : vector<8x128xf32>
    %159 = math.tanh %158 : vector<8x128xf32>
    %160 = arith.mulf %155, %159 : vector<8x128xf32>
    %161 = tpu.concatenate %160, %130 in 1 : vector<8x128xf32>, vector<8x128xf32> -> vector<8x256xf32>
    %cst_42 = arith.constant dense<0.000000e+00> : vector<8x512xf32>
    %162 = tpu.matmul %161, %10, %cst_42 {dimension_numbers = #tpu.dot_dimension_numbers<[1], [0], [0], [1], [0, 0, 1, 1], [], []>} : vector<8x256xf32>, vector<256x512xf32>, vector<8x512xf32> -> vector<8x512xf32>
    %163 = vector.broadcast %11 : vector<1x512xf32> to vector<8x512xf32>
    %164 = arith.addf %162, %163 : vector<8x512xf32>
    %165 = vector.extract_strided_slice %164 {offsets = [0, 0], sizes = [8, 128], strides = [1, 1]} : vector<8x512xf32> to vector<8x128xf32>
    %166 = arith.negf %165 : vector<8x128xf32>
    %167 = math.exp %166 : vector<8x128xf32>
    %cst_43 = arith.constant 1.000000e+00 : f32
    %168 = vector.broadcast %cst_43 : f32 to vector<8x128xf32>
    %169 = arith.addf %168, %167 : vector<8x128xf32>
    %170 = arith.divf %168, %169 : vector<8x128xf32>
    %171 = vector.extract_strided_slice %164 {offsets = [0, 128], sizes = [8, 128], strides = [1, 1]} : vector<8x512xf32> to vector<8x128xf32>
    %172 = arith.negf %171 : vector<8x128xf32>
    %173 = math.exp %172 : vector<8x128xf32>
    %cst_44 = arith.constant 1.000000e+00 : f32
    %174 = vector.broadcast %cst_44 : f32 to vector<8x128xf32>
    %175 = arith.addf %174, %173 : vector<8x128xf32>
    %176 = arith.divf %174, %175 : vector<8x128xf32>
    %177 = vector.extract_strided_slice %164 {offsets = [0, 256], sizes = [8, 128], strides = [1, 1]} : vector<8x512xf32> to vector<8x128xf32>
    %178 = math.tanh %177 : vector<8x128xf32>
    %179 = vector.extract_strided_slice %164 {offsets = [0, 384], sizes = [8, 128], strides = [1, 1]} : vector<8x512xf32> to vector<8x128xf32>
    %180 = arith.negf %179 : vector<8x128xf32>
    %181 = math.exp %180 : vector<8x128xf32>
    %cst_45 = arith.constant 1.000000e+00 : f32
    %182 = vector.broadcast %cst_45 : f32 to vector<8x128xf32>
    %183 = arith.addf %182, %181 : vector<8x128xf32>
    %184 = arith.divf %182, %183 : vector<8x128xf32>
    %185 = arith.mulf %176, %128 : vector<8x128xf32>
    %186 = arith.mulf %170, %178 : vector<8x128xf32>
    %187 = arith.addf %185, %186 : vector<8x128xf32>
    %188 = math.tanh %187 : vector<8x128xf32>
    %189 = arith.mulf %184, %188 : vector<8x128xf32>
    %c3_i32 = arith.constant 3 : i32
    %190 = arith.index_cast %c3_i32 : i32 to index
    %c0_46 = arith.constant 0 : index
    %c0_47 = arith.constant 0 : index
    %191 = vector.load %arg10[%190, %c0_46, %c0_47] : memref<8x8x512xf32, #tpu.memory_space<vmem>>, vector<1x8x512xf32>
    %192 = vector.shape_cast %191 : vector<1x8x512xf32> to vector<8x512xf32>
    %cst_48 = arith.constant dense<0.000000e+00> : vector<8x512xf32>
    %193 = tpu.matmul %160, %9, %cst_48 {dimension_numbers = #tpu.dot_dimension_numbers<[1], [0], [0], [1], [0, 0, 1, 1], [], []>} : vector<8x128xf32>, vector<128x512xf32>, vector<8x512xf32> -> vector<8x512xf32>
    %194 = arith.addf %192, %193 : vector<8x512xf32>
    %195 = vector.extract_strided_slice %194 {offsets = [0, 0], sizes = [8, 128], strides = [1, 1]} : vector<8x512xf32> to vector<8x128xf32>
    %196 = arith.negf %195 : vector<8x128xf32>
    %197 = math.exp %196 : vector<8x128xf32>
    %cst_49 = arith.constant 1.000000e+00 : f32
    %198 = vector.broadcast %cst_49 : f32 to vector<8x128xf32>
    %199 = arith.addf %198, %197 : vector<8x128xf32>
    %200 = arith.divf %198, %199 : vector<8x128xf32>
    %201 = vector.extract_strided_slice %194 {offsets = [0, 128], sizes = [8, 128], strides = [1, 1]} : vector<8x512xf32> to vector<8x128xf32>
    %202 = arith.negf %201 : vector<8x128xf32>
    %203 = math.exp %202 : vector<8x128xf32>
    %cst_50 = arith.constant 1.000000e+00 : f32
    %204 = vector.broadcast %cst_50 : f32 to vector<8x128xf32>
    %205 = arith.addf %204, %203 : vector<8x128xf32>
    %206 = arith.divf %204, %205 : vector<8x128xf32>
    %207 = vector.extract_strided_slice %194 {offsets = [0, 256], sizes = [8, 128], strides = [1, 1]} : vector<8x512xf32> to vector<8x128xf32>
    %208 = math.tanh %207 : vector<8x128xf32>
    %209 = vector.extract_strided_slice %194 {offsets = [0, 384], sizes = [8, 128], strides = [1, 1]} : vector<8x512xf32> to vector<8x128xf32>
    %210 = arith.negf %209 : vector<8x128xf32>
    %211 = math.exp %210 : vector<8x128xf32>
    %cst_51 = arith.constant 1.000000e+00 : f32
    %212 = vector.broadcast %cst_51 : f32 to vector<8x128xf32>
    %213 = arith.addf %212, %211 : vector<8x128xf32>
    %214 = arith.divf %212, %213 : vector<8x128xf32>
    %215 = arith.mulf %206, %158 : vector<8x128xf32>
    %216 = arith.mulf %200, %208 : vector<8x128xf32>
    %217 = arith.addf %215, %216 : vector<8x128xf32>
    %218 = math.tanh %217 : vector<8x128xf32>
    %219 = arith.mulf %214, %218 : vector<8x128xf32>
    %220 = tpu.concatenate %219, %189 in 1 : vector<8x128xf32>, vector<8x128xf32> -> vector<8x256xf32>
    %cst_52 = arith.constant dense<0.000000e+00> : vector<8x512xf32>
    %221 = tpu.matmul %220, %10, %cst_52 {dimension_numbers = #tpu.dot_dimension_numbers<[1], [0], [0], [1], [0, 0, 1, 1], [], []>} : vector<8x256xf32>, vector<256x512xf32>, vector<8x512xf32> -> vector<8x512xf32>
    %222 = vector.broadcast %11 : vector<1x512xf32> to vector<8x512xf32>
    %223 = arith.addf %221, %222 : vector<8x512xf32>
    %224 = vector.extract_strided_slice %223 {offsets = [0, 0], sizes = [8, 128], strides = [1, 1]} : vector<8x512xf32> to vector<8x128xf32>
    %225 = arith.negf %224 : vector<8x128xf32>
    %226 = math.exp %225 : vector<8x128xf32>
    %cst_53 = arith.constant 1.000000e+00 : f32
    %227 = vector.broadcast %cst_53 : f32 to vector<8x128xf32>
    %228 = arith.addf %227, %226 : vector<8x128xf32>
    %229 = arith.divf %227, %228 : vector<8x128xf32>
    %230 = vector.extract_strided_slice %223 {offsets = [0, 128], sizes = [8, 128], strides = [1, 1]} : vector<8x512xf32> to vector<8x128xf32>
    %231 = arith.negf %230 : vector<8x128xf32>
    %232 = math.exp %231 : vector<8x128xf32>
    %cst_54 = arith.constant 1.000000e+00 : f32
    %233 = vector.broadcast %cst_54 : f32 to vector<8x128xf32>
    %234 = arith.addf %233, %232 : vector<8x128xf32>
    %235 = arith.divf %233, %234 : vector<8x128xf32>
    %236 = vector.extract_strided_slice %223 {offsets = [0, 256], sizes = [8, 128], strides = [1, 1]} : vector<8x512xf32> to vector<8x128xf32>
    %237 = math.tanh %236 : vector<8x128xf32>
    %238 = vector.extract_strided_slice %223 {offsets = [0, 384], sizes = [8, 128], strides = [1, 1]} : vector<8x512xf32> to vector<8x128xf32>
    %239 = arith.negf %238 : vector<8x128xf32>
    %240 = math.exp %239 : vector<8x128xf32>
    %cst_55 = arith.constant 1.000000e+00 : f32
    %241 = vector.broadcast %cst_55 : f32 to vector<8x128xf32>
    %242 = arith.addf %241, %240 : vector<8x128xf32>
    %243 = arith.divf %241, %242 : vector<8x128xf32>
    %244 = arith.mulf %235, %187 : vector<8x128xf32>
    %245 = arith.mulf %229, %237 : vector<8x128xf32>
    %246 = arith.addf %244, %245 : vector<8x128xf32>
    %247 = math.tanh %246 : vector<8x128xf32>
    %248 = arith.mulf %243, %247 : vector<8x128xf32>
    %c4_i32 = arith.constant 4 : i32
    %249 = arith.index_cast %c4_i32 : i32 to index
    %c0_56 = arith.constant 0 : index
    %c0_57 = arith.constant 0 : index
    %250 = vector.load %arg10[%249, %c0_56, %c0_57] : memref<8x8x512xf32, #tpu.memory_space<vmem>>, vector<1x8x512xf32>
    %251 = vector.shape_cast %250 : vector<1x8x512xf32> to vector<8x512xf32>
    %cst_58 = arith.constant dense<0.000000e+00> : vector<8x512xf32>
    %252 = tpu.matmul %219, %9, %cst_58 {dimension_numbers = #tpu.dot_dimension_numbers<[1], [0], [0], [1], [0, 0, 1, 1], [], []>} : vector<8x128xf32>, vector<128x512xf32>, vector<8x512xf32> -> vector<8x512xf32>
    %253 = arith.addf %251, %252 : vector<8x512xf32>
    %254 = vector.extract_strided_slice %253 {offsets = [0, 0], sizes = [8, 128], strides = [1, 1]} : vector<8x512xf32> to vector<8x128xf32>
    %255 = arith.negf %254 : vector<8x128xf32>
    %256 = math.exp %255 : vector<8x128xf32>
    %cst_59 = arith.constant 1.000000e+00 : f32
    %257 = vector.broadcast %cst_59 : f32 to vector<8x128xf32>
    %258 = arith.addf %257, %256 : vector<8x128xf32>
    %259 = arith.divf %257, %258 : vector<8x128xf32>
    %260 = vector.extract_strided_slice %253 {offsets = [0, 128], sizes = [8, 128], strides = [1, 1]} : vector<8x512xf32> to vector<8x128xf32>
    %261 = arith.negf %260 : vector<8x128xf32>
    %262 = math.exp %261 : vector<8x128xf32>
    %cst_60 = arith.constant 1.000000e+00 : f32
    %263 = vector.broadcast %cst_60 : f32 to vector<8x128xf32>
    %264 = arith.addf %263, %262 : vector<8x128xf32>
    %265 = arith.divf %263, %264 : vector<8x128xf32>
    %266 = vector.extract_strided_slice %253 {offsets = [0, 256], sizes = [8, 128], strides = [1, 1]} : vector<8x512xf32> to vector<8x128xf32>
    %267 = math.tanh %266 : vector<8x128xf32>
    %268 = vector.extract_strided_slice %253 {offsets = [0, 384], sizes = [8, 128], strides = [1, 1]} : vector<8x512xf32> to vector<8x128xf32>
    %269 = arith.negf %268 : vector<8x128xf32>
    %270 = math.exp %269 : vector<8x128xf32>
    %cst_61 = arith.constant 1.000000e+00 : f32
    %271 = vector.broadcast %cst_61 : f32 to vector<8x128xf32>
    %272 = arith.addf %271, %270 : vector<8x128xf32>
    %273 = arith.divf %271, %272 : vector<8x128xf32>
    %274 = arith.mulf %265, %217 : vector<8x128xf32>
    %275 = arith.mulf %259, %267 : vector<8x128xf32>
    %276 = arith.addf %274, %275 : vector<8x128xf32>
    %277 = math.tanh %276 : vector<8x128xf32>
    %278 = arith.mulf %273, %277 : vector<8x128xf32>
    %279 = tpu.concatenate %278, %248 in 1 : vector<8x128xf32>, vector<8x128xf32> -> vector<8x256xf32>
    %cst_62 = arith.constant dense<0.000000e+00> : vector<8x512xf32>
    %280 = tpu.matmul %279, %10, %cst_62 {dimension_numbers = #tpu.dot_dimension_numbers<[1], [0], [0], [1], [0, 0, 1, 1], [], []>} : vector<8x256xf32>, vector<256x512xf32>, vector<8x512xf32> -> vector<8x512xf32>
    %281 = vector.broadcast %11 : vector<1x512xf32> to vector<8x512xf32>
    %282 = arith.addf %280, %281 : vector<8x512xf32>
    %283 = vector.extract_strided_slice %282 {offsets = [0, 0], sizes = [8, 128], strides = [1, 1]} : vector<8x512xf32> to vector<8x128xf32>
    %284 = arith.negf %283 : vector<8x128xf32>
    %285 = math.exp %284 : vector<8x128xf32>
    %cst_63 = arith.constant 1.000000e+00 : f32
    %286 = vector.broadcast %cst_63 : f32 to vector<8x128xf32>
    %287 = arith.addf %286, %285 : vector<8x128xf32>
    %288 = arith.divf %286, %287 : vector<8x128xf32>
    %289 = vector.extract_strided_slice %282 {offsets = [0, 128], sizes = [8, 128], strides = [1, 1]} : vector<8x512xf32> to vector<8x128xf32>
    %290 = arith.negf %289 : vector<8x128xf32>
    %291 = math.exp %290 : vector<8x128xf32>
    %cst_64 = arith.constant 1.000000e+00 : f32
    %292 = vector.broadcast %cst_64 : f32 to vector<8x128xf32>
    %293 = arith.addf %292, %291 : vector<8x128xf32>
    %294 = arith.divf %292, %293 : vector<8x128xf32>
    %295 = vector.extract_strided_slice %282 {offsets = [0, 256], sizes = [8, 128], strides = [1, 1]} : vector<8x512xf32> to vector<8x128xf32>
    %296 = math.tanh %295 : vector<8x128xf32>
    %297 = vector.extract_strided_slice %282 {offsets = [0, 384], sizes = [8, 128], strides = [1, 1]} : vector<8x512xf32> to vector<8x128xf32>
    %298 = arith.negf %297 : vector<8x128xf32>
    %299 = math.exp %298 : vector<8x128xf32>
    %cst_65 = arith.constant 1.000000e+00 : f32
    %300 = vector.broadcast %cst_65 : f32 to vector<8x128xf32>
    %301 = arith.addf %300, %299 : vector<8x128xf32>
    %302 = arith.divf %300, %301 : vector<8x128xf32>
    %303 = arith.mulf %294, %246 : vector<8x128xf32>
    %304 = arith.mulf %288, %296 : vector<8x128xf32>
    %305 = arith.addf %303, %304 : vector<8x128xf32>
    %306 = math.tanh %305 : vector<8x128xf32>
    %307 = arith.mulf %302, %306 : vector<8x128xf32>
    %c5_i32 = arith.constant 5 : i32
    %308 = arith.index_cast %c5_i32 : i32 to index
    %c0_66 = arith.constant 0 : index
    %c0_67 = arith.constant 0 : index
    %309 = vector.load %arg10[%308, %c0_66, %c0_67] : memref<8x8x512xf32, #tpu.memory_space<vmem>>, vector<1x8x512xf32>
    %310 = vector.shape_cast %309 : vector<1x8x512xf32> to vector<8x512xf32>
    %cst_68 = arith.constant dense<0.000000e+00> : vector<8x512xf32>
    %311 = tpu.matmul %278, %9, %cst_68 {dimension_numbers = #tpu.dot_dimension_numbers<[1], [0], [0], [1], [0, 0, 1, 1], [], []>} : vector<8x128xf32>, vector<128x512xf32>, vector<8x512xf32> -> vector<8x512xf32>
    %312 = arith.addf %310, %311 : vector<8x512xf32>
    %313 = vector.extract_strided_slice %312 {offsets = [0, 0], sizes = [8, 128], strides = [1, 1]} : vector<8x512xf32> to vector<8x128xf32>
    %314 = arith.negf %313 : vector<8x128xf32>
    %315 = math.exp %314 : vector<8x128xf32>
    %cst_69 = arith.constant 1.000000e+00 : f32
    %316 = vector.broadcast %cst_69 : f32 to vector<8x128xf32>
    %317 = arith.addf %316, %315 : vector<8x128xf32>
    %318 = arith.divf %316, %317 : vector<8x128xf32>
    %319 = vector.extract_strided_slice %312 {offsets = [0, 128], sizes = [8, 128], strides = [1, 1]} : vector<8x512xf32> to vector<8x128xf32>
    %320 = arith.negf %319 : vector<8x128xf32>
    %321 = math.exp %320 : vector<8x128xf32>
    %cst_70 = arith.constant 1.000000e+00 : f32
    %322 = vector.broadcast %cst_70 : f32 to vector<8x128xf32>
    %323 = arith.addf %322, %321 : vector<8x128xf32>
    %324 = arith.divf %322, %323 : vector<8x128xf32>
    %325 = vector.extract_strided_slice %312 {offsets = [0, 256], sizes = [8, 128], strides = [1, 1]} : vector<8x512xf32> to vector<8x128xf32>
    %326 = math.tanh %325 : vector<8x128xf32>
    %327 = vector.extract_strided_slice %312 {offsets = [0, 384], sizes = [8, 128], strides = [1, 1]} : vector<8x512xf32> to vector<8x128xf32>
    %328 = arith.negf %327 : vector<8x128xf32>
    %329 = math.exp %328 : vector<8x128xf32>
    %cst_71 = arith.constant 1.000000e+00 : f32
    %330 = vector.broadcast %cst_71 : f32 to vector<8x128xf32>
    %331 = arith.addf %330, %329 : vector<8x128xf32>
    %332 = arith.divf %330, %331 : vector<8x128xf32>
    %333 = arith.mulf %324, %276 : vector<8x128xf32>
    %334 = arith.mulf %318, %326 : vector<8x128xf32>
    %335 = arith.addf %333, %334 : vector<8x128xf32>
    %336 = math.tanh %335 : vector<8x128xf32>
    %337 = arith.mulf %332, %336 : vector<8x128xf32>
    %338 = tpu.concatenate %337, %307 in 1 : vector<8x128xf32>, vector<8x128xf32> -> vector<8x256xf32>
    %cst_72 = arith.constant dense<0.000000e+00> : vector<8x512xf32>
    %339 = tpu.matmul %338, %10, %cst_72 {dimension_numbers = #tpu.dot_dimension_numbers<[1], [0], [0], [1], [0, 0, 1, 1], [], []>} : vector<8x256xf32>, vector<256x512xf32>, vector<8x512xf32> -> vector<8x512xf32>
    %340 = vector.broadcast %11 : vector<1x512xf32> to vector<8x512xf32>
    %341 = arith.addf %339, %340 : vector<8x512xf32>
    %342 = vector.extract_strided_slice %341 {offsets = [0, 0], sizes = [8, 128], strides = [1, 1]} : vector<8x512xf32> to vector<8x128xf32>
    %343 = arith.negf %342 : vector<8x128xf32>
    %344 = math.exp %343 : vector<8x128xf32>
    %cst_73 = arith.constant 1.000000e+00 : f32
    %345 = vector.broadcast %cst_73 : f32 to vector<8x128xf32>
    %346 = arith.addf %345, %344 : vector<8x128xf32>
    %347 = arith.divf %345, %346 : vector<8x128xf32>
    %348 = vector.extract_strided_slice %341 {offsets = [0, 128], sizes = [8, 128], strides = [1, 1]} : vector<8x512xf32> to vector<8x128xf32>
    %349 = arith.negf %348 : vector<8x128xf32>
    %350 = math.exp %349 : vector<8x128xf32>
    %cst_74 = arith.constant 1.000000e+00 : f32
    %351 = vector.broadcast %cst_74 : f32 to vector<8x128xf32>
    %352 = arith.addf %351, %350 : vector<8x128xf32>
    %353 = arith.divf %351, %352 : vector<8x128xf32>
    %354 = vector.extract_strided_slice %341 {offsets = [0, 256], sizes = [8, 128], strides = [1, 1]} : vector<8x512xf32> to vector<8x128xf32>
    %355 = math.tanh %354 : vector<8x128xf32>
    %356 = vector.extract_strided_slice %341 {offsets = [0, 384], sizes = [8, 128], strides = [1, 1]} : vector<8x512xf32> to vector<8x128xf32>
    %357 = arith.negf %356 : vector<8x128xf32>
    %358 = math.exp %357 : vector<8x128xf32>
    %cst_75 = arith.constant 1.000000e+00 : f32
    %359 = vector.broadcast %cst_75 : f32 to vector<8x128xf32>
    %360 = arith.addf %359, %358 : vector<8x128xf32>
    %361 = arith.divf %359, %360 : vector<8x128xf32>
    %362 = arith.mulf %353, %305 : vector<8x128xf32>
    %363 = arith.mulf %347, %355 : vector<8x128xf32>
    %364 = arith.addf %362, %363 : vector<8x128xf32>
    %365 = math.tanh %364 : vector<8x128xf32>
    %366 = arith.mulf %361, %365 : vector<8x128xf32>
    %c6_i32 = arith.constant 6 : i32
    %367 = arith.index_cast %c6_i32 : i32 to index
    %c0_76 = arith.constant 0 : index
    %c0_77 = arith.constant 0 : index
    %368 = vector.load %arg10[%367, %c0_76, %c0_77] : memref<8x8x512xf32, #tpu.memory_space<vmem>>, vector<1x8x512xf32>
    %369 = vector.shape_cast %368 : vector<1x8x512xf32> to vector<8x512xf32>
    %cst_78 = arith.constant dense<0.000000e+00> : vector<8x512xf32>
    %370 = tpu.matmul %337, %9, %cst_78 {dimension_numbers = #tpu.dot_dimension_numbers<[1], [0], [0], [1], [0, 0, 1, 1], [], []>} : vector<8x128xf32>, vector<128x512xf32>, vector<8x512xf32> -> vector<8x512xf32>
    %371 = arith.addf %369, %370 : vector<8x512xf32>
    %372 = vector.extract_strided_slice %371 {offsets = [0, 0], sizes = [8, 128], strides = [1, 1]} : vector<8x512xf32> to vector<8x128xf32>
    %373 = arith.negf %372 : vector<8x128xf32>
    %374 = math.exp %373 : vector<8x128xf32>
    %cst_79 = arith.constant 1.000000e+00 : f32
    %375 = vector.broadcast %cst_79 : f32 to vector<8x128xf32>
    %376 = arith.addf %375, %374 : vector<8x128xf32>
    %377 = arith.divf %375, %376 : vector<8x128xf32>
    %378 = vector.extract_strided_slice %371 {offsets = [0, 128], sizes = [8, 128], strides = [1, 1]} : vector<8x512xf32> to vector<8x128xf32>
    %379 = arith.negf %378 : vector<8x128xf32>
    %380 = math.exp %379 : vector<8x128xf32>
    %cst_80 = arith.constant 1.000000e+00 : f32
    %381 = vector.broadcast %cst_80 : f32 to vector<8x128xf32>
    %382 = arith.addf %381, %380 : vector<8x128xf32>
    %383 = arith.divf %381, %382 : vector<8x128xf32>
    %384 = vector.extract_strided_slice %371 {offsets = [0, 256], sizes = [8, 128], strides = [1, 1]} : vector<8x512xf32> to vector<8x128xf32>
    %385 = math.tanh %384 : vector<8x128xf32>
    %386 = vector.extract_strided_slice %371 {offsets = [0, 384], sizes = [8, 128], strides = [1, 1]} : vector<8x512xf32> to vector<8x128xf32>
    %387 = arith.negf %386 : vector<8x128xf32>
    %388 = math.exp %387 : vector<8x128xf32>
    %cst_81 = arith.constant 1.000000e+00 : f32
    %389 = vector.broadcast %cst_81 : f32 to vector<8x128xf32>
    %390 = arith.addf %389, %388 : vector<8x128xf32>
    %391 = arith.divf %389, %390 : vector<8x128xf32>
    %392 = arith.mulf %383, %335 : vector<8x128xf32>
    %393 = arith.mulf %377, %385 : vector<8x128xf32>
    %394 = arith.addf %392, %393 : vector<8x128xf32>
    %395 = math.tanh %394 : vector<8x128xf32>
    %396 = arith.mulf %391, %395 : vector<8x128xf32>
    %397 = tpu.concatenate %396, %366 in 1 : vector<8x128xf32>, vector<8x128xf32> -> vector<8x256xf32>
    %cst_82 = arith.constant dense<0.000000e+00> : vector<8x512xf32>
    %398 = tpu.matmul %397, %10, %cst_82 {dimension_numbers = #tpu.dot_dimension_numbers<[1], [0], [0], [1], [0, 0, 1, 1], [], []>} : vector<8x256xf32>, vector<256x512xf32>, vector<8x512xf32> -> vector<8x512xf32>
    %399 = vector.broadcast %11 : vector<1x512xf32> to vector<8x512xf32>
    %400 = arith.addf %398, %399 : vector<8x512xf32>
    %401 = vector.extract_strided_slice %400 {offsets = [0, 0], sizes = [8, 128], strides = [1, 1]} : vector<8x512xf32> to vector<8x128xf32>
    %402 = arith.negf %401 : vector<8x128xf32>
    %403 = math.exp %402 : vector<8x128xf32>
    %cst_83 = arith.constant 1.000000e+00 : f32
    %404 = vector.broadcast %cst_83 : f32 to vector<8x128xf32>
    %405 = arith.addf %404, %403 : vector<8x128xf32>
    %406 = arith.divf %404, %405 : vector<8x128xf32>
    %407 = vector.extract_strided_slice %400 {offsets = [0, 128], sizes = [8, 128], strides = [1, 1]} : vector<8x512xf32> to vector<8x128xf32>
    %408 = arith.negf %407 : vector<8x128xf32>
    %409 = math.exp %408 : vector<8x128xf32>
    %cst_84 = arith.constant 1.000000e+00 : f32
    %410 = vector.broadcast %cst_84 : f32 to vector<8x128xf32>
    %411 = arith.addf %410, %409 : vector<8x128xf32>
    %412 = arith.divf %410, %411 : vector<8x128xf32>
    %413 = vector.extract_strided_slice %400 {offsets = [0, 256], sizes = [8, 128], strides = [1, 1]} : vector<8x512xf32> to vector<8x128xf32>
    %414 = math.tanh %413 : vector<8x128xf32>
    %415 = vector.extract_strided_slice %400 {offsets = [0, 384], sizes = [8, 128], strides = [1, 1]} : vector<8x512xf32> to vector<8x128xf32>
    %416 = arith.negf %415 : vector<8x128xf32>
    %417 = math.exp %416 : vector<8x128xf32>
    %cst_85 = arith.constant 1.000000e+00 : f32
    %418 = vector.broadcast %cst_85 : f32 to vector<8x128xf32>
    %419 = arith.addf %418, %417 : vector<8x128xf32>
    %420 = arith.divf %418, %419 : vector<8x128xf32>
    %421 = arith.mulf %412, %364 : vector<8x128xf32>
    %422 = arith.mulf %406, %414 : vector<8x128xf32>
    %423 = arith.addf %421, %422 : vector<8x128xf32>
    %424 = math.tanh %423 : vector<8x128xf32>
    %425 = arith.mulf %420, %424 : vector<8x128xf32>
    %c7_i32 = arith.constant 7 : i32
    %426 = arith.index_cast %c7_i32 : i32 to index
    %c0_86 = arith.constant 0 : index
    %c0_87 = arith.constant 0 : index
    %427 = vector.load %arg10[%426, %c0_86, %c0_87] : memref<8x8x512xf32, #tpu.memory_space<vmem>>, vector<1x8x512xf32>
    %428 = vector.shape_cast %427 : vector<1x8x512xf32> to vector<8x512xf32>
    %cst_88 = arith.constant dense<0.000000e+00> : vector<8x512xf32>
    %429 = tpu.matmul %396, %9, %cst_88 {dimension_numbers = #tpu.dot_dimension_numbers<[1], [0], [0], [1], [0, 0, 1, 1], [], []>} : vector<8x128xf32>, vector<128x512xf32>, vector<8x512xf32> -> vector<8x512xf32>
    %430 = arith.addf %428, %429 : vector<8x512xf32>
    %431 = vector.extract_strided_slice %430 {offsets = [0, 0], sizes = [8, 128], strides = [1, 1]} : vector<8x512xf32> to vector<8x128xf32>
    %432 = arith.negf %431 : vector<8x128xf32>
    %433 = math.exp %432 : vector<8x128xf32>
    %cst_89 = arith.constant 1.000000e+00 : f32
    %434 = vector.broadcast %cst_89 : f32 to vector<8x128xf32>
    %435 = arith.addf %434, %433 : vector<8x128xf32>
    %436 = arith.divf %434, %435 : vector<8x128xf32>
    %437 = vector.extract_strided_slice %430 {offsets = [0, 128], sizes = [8, 128], strides = [1, 1]} : vector<8x512xf32> to vector<8x128xf32>
    %438 = arith.negf %437 : vector<8x128xf32>
    %439 = math.exp %438 : vector<8x128xf32>
    %cst_90 = arith.constant 1.000000e+00 : f32
    %440 = vector.broadcast %cst_90 : f32 to vector<8x128xf32>
    %441 = arith.addf %440, %439 : vector<8x128xf32>
    %442 = arith.divf %440, %441 : vector<8x128xf32>
    %443 = vector.extract_strided_slice %430 {offsets = [0, 256], sizes = [8, 128], strides = [1, 1]} : vector<8x512xf32> to vector<8x128xf32>
    %444 = math.tanh %443 : vector<8x128xf32>
    %445 = vector.extract_strided_slice %430 {offsets = [0, 384], sizes = [8, 128], strides = [1, 1]} : vector<8x512xf32> to vector<8x128xf32>
    %446 = arith.negf %445 : vector<8x128xf32>
    %447 = math.exp %446 : vector<8x128xf32>
    %cst_91 = arith.constant 1.000000e+00 : f32
    %448 = vector.broadcast %cst_91 : f32 to vector<8x128xf32>
    %449 = arith.addf %448, %447 : vector<8x128xf32>
    %450 = arith.divf %448, %449 : vector<8x128xf32>
    %451 = arith.mulf %442, %394 : vector<8x128xf32>
    %452 = arith.mulf %436, %444 : vector<8x128xf32>
    %453 = arith.addf %451, %452 : vector<8x128xf32>
    %454 = math.tanh %453 : vector<8x128xf32>
    %455 = arith.mulf %450, %454 : vector<8x128xf32>
    %456 = tpu.concatenate %455, %425 in 1 : vector<8x128xf32>, vector<8x128xf32> -> vector<8x256xf32>
    %cst_92 = arith.constant dense<0.000000e+00> : vector<8x512xf32>
    %457 = tpu.matmul %456, %10, %cst_92 {dimension_numbers = #tpu.dot_dimension_numbers<[1], [0], [0], [1], [0, 0, 1, 1], [], []>} : vector<8x256xf32>, vector<256x512xf32>, vector<8x512xf32> -> vector<8x512xf32>
    %458 = vector.broadcast %11 : vector<1x512xf32> to vector<8x512xf32>
    %459 = arith.addf %457, %458 : vector<8x512xf32>
    %460 = vector.extract_strided_slice %459 {offsets = [0, 0], sizes = [8, 128], strides = [1, 1]} : vector<8x512xf32> to vector<8x128xf32>
    %461 = arith.negf %460 : vector<8x128xf32>
    %462 = math.exp %461 : vector<8x128xf32>
    %cst_93 = arith.constant 1.000000e+00 : f32
    %463 = vector.broadcast %cst_93 : f32 to vector<8x128xf32>
    %464 = arith.addf %463, %462 : vector<8x128xf32>
    %465 = arith.divf %463, %464 : vector<8x128xf32>
    %466 = vector.extract_strided_slice %459 {offsets = [0, 128], sizes = [8, 128], strides = [1, 1]} : vector<8x512xf32> to vector<8x128xf32>
    %467 = arith.negf %466 : vector<8x128xf32>
    %468 = math.exp %467 : vector<8x128xf32>
    %cst_94 = arith.constant 1.000000e+00 : f32
    %469 = vector.broadcast %cst_94 : f32 to vector<8x128xf32>
    %470 = arith.addf %469, %468 : vector<8x128xf32>
    %471 = arith.divf %469, %470 : vector<8x128xf32>
    %472 = vector.extract_strided_slice %459 {offsets = [0, 256], sizes = [8, 128], strides = [1, 1]} : vector<8x512xf32> to vector<8x128xf32>
    %473 = math.tanh %472 : vector<8x128xf32>
    %474 = vector.extract_strided_slice %459 {offsets = [0, 384], sizes = [8, 128], strides = [1, 1]} : vector<8x512xf32> to vector<8x128xf32>
    %475 = arith.negf %474 : vector<8x128xf32>
    %476 = math.exp %475 : vector<8x128xf32>
    %cst_95 = arith.constant 1.000000e+00 : f32
    %477 = vector.broadcast %cst_95 : f32 to vector<8x128xf32>
    %478 = arith.addf %477, %476 : vector<8x128xf32>
    %479 = arith.divf %477, %478 : vector<8x128xf32>
    %480 = arith.mulf %471, %423 : vector<8x128xf32>
    %481 = arith.mulf %465, %473 : vector<8x128xf32>
    %482 = arith.addf %480, %481 : vector<8x128xf32>
    %483 = math.tanh %482 : vector<8x128xf32>
    %484 = arith.mulf %479, %483 : vector<8x128xf32>
    %c8_i32 = arith.constant 8 : i32
    %c0_96 = arith.constant 0 : index
    %c0_97 = arith.constant 0 : index
    %485 = vector.load %arg7[%c0_96, %c0_97] : memref<128x128xf32, #tpu.memory_space<vmem>>, vector<128x128xf32>
    %cst_98 = arith.constant dense<0.000000e+00> : vector<8x128xf32>
    %486 = tpu.matmul %484, %485, %cst_98 {dimension_numbers = #tpu.dot_dimension_numbers<[1], [0], [0], [1], [0, 0, 1, 1], [], []>} : vector<8x128xf32>, vector<128x128xf32>, vector<8x128xf32> -> vector<8x128xf32>
    %c0_99 = arith.constant 0 : index
    %c0_100 = arith.constant 0 : index
    %487 = vector.load %arg8[%c0_99, %c0_100] : memref<1x128xf32, #tpu.memory_space<vmem>>, vector<1x128xf32>
    %488 = vector.broadcast %487 : vector<1x128xf32> to vector<8x128xf32>
    %489 = arith.addf %486, %488 : vector<8x128xf32>
    %c0_101 = arith.constant 0 : index
    %c0_102 = arith.constant 0 : index
    %490 = vector.load %arg9[%c0_101, %c0_102] : memref<8x128xf32, #tpu.memory_space<vmem>>, vector<8x128xf32>
    tpu.vector_store %arg9[%c0_101, %c0_102], %489 {strides = array<i32>} : memref<8x128xf32, #tpu.memory_space<vmem>>, vector<8x128xf32>,
    return
  }
  func.func @transform_0(%arg0: i32) -> (i32, i32, i32) {
    %c0_i32 = arith.constant 0 : i32
    %c0_i32_0 = arith.constant 0 : i32
    %c0_i32_1 = arith.constant 0 : i32
    %c0_i32_2 = arith.constant 0 : i32
    return %c0_i32, %c0_i32_0, %c0_i32_1 : i32, i32, i32
  }
  func.func @transform_1(%arg0: i32) -> (i32, i32) {
    %c0_i32 = arith.constant 0 : i32
    %c0_i32_0 = arith.constant 0 : i32
    %c0_i32_1 = arith.constant 0 : i32
    return %c0_i32, %c0_i32_0 : i32, i32
  }
  func.func @transform_2(%arg0: i32) -> (i32, i32) {
    %c0_i32 = arith.constant 0 : i32
    %c0_i32_0 = arith.constant 0 : i32
    %c0_i32_1 = arith.constant 0 : i32
    return %c0_i32, %c0_i32_0 : i32, i32
  }
  func.func @transform_3(%arg0: i32) -> (i32, i32) {
    %c0_i32 = arith.constant 0 : i32
    %c0_i32_0 = arith.constant 0 : i32
    %c0_i32_1 = arith.constant 0 : i32
    return %c0_i32, %c0_i32_0 : i32, i32
  }
  func.func @transform_4(%arg0: i32) -> (i32, i32) {
    %c0_i32 = arith.constant 0 : i32
    %c0_i32_0 = arith.constant 0 : i32
    %c0_i32_1 = arith.constant 0 : i32
    return %c0_i32, %c0_i32_0 : i32, i32
  }
  func.func @transform_5(%arg0: i32) -> (i32, i32) {
    %c0_i32 = arith.constant 0 : i32
    %c0_i32_0 = arith.constant 0 : i32
    %c0_i32_1 = arith.constant 0 : i32
    return %c0_i32, %c0_i32_0 : i32, i32
  }
  func.func @transform_6(%arg0: i32) -> (i32, i32) {
    %c0_i32 = arith.constant 0 : i32
    %c0_i32_0 = arith.constant 0 : i32
    %c0_i32_1 = arith.constant 0 : i32
    return %c0_i32, %c0_i32_0 : i32, i32
  }
  func.func @transform_7(%arg0: i32) -> (i32, i32) {
    %c0_i32 = arith.constant 0 : i32
    %c0_i32_0 = arith.constant 0 : i32
    %c0_i32_1 = arith.constant 0 : i32
    return %c0_i32, %c0_i32_0 : i32, i32
  }
  func.func @transform_8(%arg0: i32) -> (i32, i32) {
    %c0_i32 = arith.constant 0 : i32
    %c0_i32_0 = arith.constant 0 : i32
    %c0_i32_1 = arith.constant 0 : i32
    return %c0_i32, %c0_i32_0 : i32, i32
  }
}

</mosaic_0001>

<llo_original>
// kernel: tpu_custom_call.1
$region0: #{tpu_custom_call.1}
  #allocation0 [shape = 'u32[]', space=smem, size = 0x4, offset = 0x4, fixed_abs, tag = 'smem constant byte address 0x4 - core index']
  #allocation1 [shape = 'u32[144,128]{1,0:T(1,128)}', space=vmem, size = 0x12000, scoped, tag = 'internal scratch']
  #allocation2 [shape = 'f32[8,8,512]{2,1,0:T(8,128)}', space=vmem, size = 0x20000, scoped, tag = 'scratch operand']
  %s0 = inlined_call_operand.hbm [shape: f32[8,8,128], index: 0, kind: input, shape index: {}]
  %s1 = inlined_call_operand.hbm [shape: f32[128,512], index: 1, kind: input, shape index: {}]
  %s2 = inlined_call_operand.hbm [shape: f32[128,512], index: 2, kind: input, shape index: {}]
  %s3 = inlined_call_operand.vmem [shape: f32[1,512], index: 3, kind: input, shape index: {}]
  %s4 = inlined_call_operand.hbm [shape: f32[256,512], index: 4, kind: input, shape index: {}]
  %s5 = inlined_call_operand.vmem [shape: f32[1,512], index: 5, kind: input, shape index: {}]
  %s6 = inlined_call_operand.hbm [shape: f32[128,128], index: 6, kind: input, shape index: {}]
  %s7 = inlined_call_operand.vmem [shape: f32[1,128], index: 7, kind: input, shape index: {}]
  %s8 = inlined_call_operand.hbm [shape: f32[8,128], index: 8, kind: output, shape index: {}]
  %s9 = sld [smem:[#allocation0]]
  $region62: #{tpu_custom_call.1} parent=0
    _
  %s11 = ssub.s32 1, %s9
  %s12 = scalar_select 0, %s11, %s9
  $region1: #{tpu_custom_call.1} parent=0
    #allocation3 [shape = 'u8[32768]{0}', space=vmem, size = 0x8000, scoped, tag = 'input window, operand 0, single buffered']
    #allocation4 [shape = 's32[1]{0}', space=sflag, size = 0x4, scoped, tag = 'scoped memory for tpu_custom_call.1']
    #allocation5 [shape = 's32[1]{0}', space=sflag, size = 0x4, scoped, tag = 'scoped memory for tpu_custom_call.1']
    #allocation6 [shape = 'u8[262144]{0}', space=vmem, size = 0x40000, scoped, tag = 'input window, operand 1, single buffered']
    #allocation7 [shape = 's32[1]{0}', space=sflag, size = 0x4, scoped, tag = 'scoped memory for tpu_custom_call.1']
    #allocation8 [shape = 'u8[262144]{0}', space=vmem, size = 0x40000, scoped, tag = 'input window, operand 2, single buffered']
    #allocation9 [shape = 'u8[524288]{0}', space=vmem, size = 0x80000, scoped, tag = 'input window, operand 4, single buffered']
    #allocation10 [shape = 's32[1]{0}', space=sflag, size = 0x4, scoped, tag = 'scoped memory for tpu_custom_call.1']
    #allocation11 [shape = 'u8[65536]{0}', space=vmem, size = 0x10000, scoped, tag = 'input window, operand 6, single buffered']
    #allocation12 [shape = 'u8[4096]{0}', space=vmem, size = 0x1000, scoped, tag = 'output window, operand 0, single buffered']
    %13 = vsyncpa [#allocation4], 0
    %14 = vsyncpa [#allocation7], 0
    %15 = vsyncpa [#allocation10], 0
    %16 = vsyncpa [#allocation5], 0
    // Predicated region
    $region2: #{tpu_custom_call.1} parent=1 // pred_check
      _
    $region3: #{tpu_custom_call.1} parent=1 // pred_check_branch
      %18 = sbr.rel (0) target = $region5
    $region4: #{tpu_custom_call.1} parent=1 // pred_region
      %s20 = ssub.s32 1024, 1024
      %21 = vsyncadd [#allocation4], %s20
      %s22 = sshll.u32 [#allocation3], 4
      %s23 = int_to_ptr.vmem [resolvable:$true] %s22
      %28 = dma.hbm_to_vmem [thread:$0]  %s0, 1024, %s23, [#allocation4], 128, 128, 8
    $region5: #{tpu_custom_call.1} parent=1 // pred_fallthru
      _
    // Predicated region
    $region6: #{tpu_custom_call.1} parent=1 // pred_check
      _
    $region7: #{tpu_custom_call.1} parent=1 // pred_check_branch
      %30 = sbr.rel (0) target = $region9
    $region8: #{tpu_custom_call.1} parent=1 // pred_region
      %s32 = ssub.s32 8192, 8192
      %33 = vsyncadd [#allocation7], %s32
      %s34 = sshll.u32 [#allocation6], 4
      %s35 = int_to_ptr.vmem [resolvable:$true] %s34
      %40 = dma.hbm_to_vmem [thread:$0]  %s1, 8192, %s35, [#allocation7], 512, 512, 32
    $region9: #{tpu_custom_call.1} parent=1 // pred_fallthru
      _
    // Predicated region
    $region10: #{tpu_custom_call.1} parent=1 // pred_check
      _
    $region11: #{tpu_custom_call.1} parent=1 // pred_check_branch
      %42 = sbr.rel (0) target = $region13
    $region12: #{tpu_custom_call.1} parent=1 // pred_region
      %s44 = ssub.s32 8192, 8192
      %45 = vsyncadd [#allocation7], %s44
      %s46 = sshll.u32 [#allocation8], 4
      %s47 = int_to_ptr.vmem [resolvable:$true] %s46
      %52 = dma.hbm_to_vmem [thread:$0]  %s2, 8192, %s47, [#allocation7], 512, 512, 32
    $region13: #{tpu_custom_call.1} parent=1 // pred_fallthru
      _
    // Predicated region
    $region14: #{tpu_custom_call.1} parent=1 // pred_check
      _
    $region15: #{tpu_custom_call.1} parent=1 // pred_check_branch
      %54 = sbr.rel (0) target = $region17
    $region16: #{tpu_custom_call.1} parent=1 // pred_region
      _
    $region17: #{tpu_custom_call.1} parent=1 // pred_fallthru
      _
    // Predicated region
    $region18: #{tpu_custom_call.1} parent=1 // pred_check
      _
    $region19: #{tpu_custom_call.1} parent=1 // pred_check_branch
      %56 = sbr.rel (0) target = $region21
    $region20: #{tpu_custom_call.1} parent=1 // pred_region
      %s58 = ssub.s32 16384, 16384
      %59 = vsyncadd [#allocation10], %s58
      %s60 = sshll.u32 [#allocation9], 4
      %s61 = int_to_ptr.vmem [resolvable:$true] %s60
      %66 = dma.hbm_to_vmem [thread:$0]  %s4, 16384, %s61, [#allocation10], 512, 512, 32
    $region21: #{tpu_custom_call.1} parent=1 // pred_fallthru
      _
    // Predicated region
    $region22: #{tpu_custom_call.1} parent=1 // pred_check
      _
    $region23: #{tpu_custom_call.1} parent=1 // pred_check_branch
      %68 = sbr.rel (0) target = $region25
    $region24: #{tpu_custom_call.1} parent=1 // pred_region
      _
    $region25: #{tpu_custom_call.1} parent=1 // pred_fallthru
      _
    // Predicated region
    $region26: #{tpu_custom_call.1} parent=1 // pred_check
      _
    $region27: #{tpu_custom_call.1} parent=1 // pred_check_branch
      %70 = sbr.rel (0) target = $region29
    $region28: #{tpu_custom_call.1} parent=1 // pred_region
      %s72 = ssub.s32 2048, 2048
      %73 = vsyncadd [#allocation10], %s72
      %s74 = sshll.u32 [#allocation11], 4
      %s75 = int_to_ptr.vmem [resolvable:$true] %s74
      %80 = dma.hbm_to_vmem [thread:$0]  %s6, 2048, %s75, [#allocation10], 128, 128, 8
    $region29: #{tpu_custom_call.1} parent=1 // pred_fallthru
      _
    // Predicated region
    $region30: #{tpu_custom_call.1} parent=1 // pred_check
      _
    $region31: #{tpu_custom_call.1} parent=1 // pred_check_branch
      %82 = sbr.rel (0) target = $region33
    $region32: #{tpu_custom_call.1} parent=1 // pred_region
      _
    $region33: #{tpu_custom_call.1} parent=1 // pred_fallthru
      _
    // Predicated region
    $region34: #{tpu_custom_call.1} parent=1 // pred_check
      _
    $region35: #{tpu_custom_call.1} parent=1 // pred_check_branch
      %84 = sbr.rel (0) target = $region37
    $region36: #{tpu_custom_call.1} parent=1 // pred_region
      %85 = dma.done [#allocation4], 1024
    $region37: #{tpu_custom_call.1} parent=1 // pred_fallthru
      _
    // Predicated region
    $region38: #{tpu_custom_call.1} parent=1 // pred_check
      _
    $region39: #{tpu_custom_call.1} parent=1 // pred_check_branch
      %87 = sbr.rel (0) target = $region41
    $region40: #{tpu_custom_call.1} parent=1 // pred_region
      %88 = dma.done [#allocation7], 8192
    $region41: #{tpu_custom_call.1} parent=1 // pred_fallthru
      _
    // Predicated region
    $region42: #{tpu_custom_call.1} parent=1 // pred_check
      _
    $region43: #{tpu_custom_call.1} parent=1 // pred_check_branch
      %90 = sbr.rel (0) target = $region45
    $region44: #{tpu_custom_call.1} parent=1 // pred_region
      %91 = dma.done [#allocation7], 8192
    $region45: #{tpu_custom_call.1} parent=1 // pred_fallthru
      _
    // Predicated region
    $region46: #{tpu_custom_call.1} parent=1 // pred_check
      _
    $region47: #{tpu_custom_call.1} parent=1 // pred_check_branch
      %93 = sbr.rel (0) target = $region49
    $region48: #{tpu_custom_call.1} parent=1 // pred_region
      %94 = dma.done [#allocation10], 16384
    $region49: #{tpu_custom_call.1} parent=1 // pred_fallthru
      _
    // Predicated region
    $region50: #{tpu_custom_call.1} parent=1 // pred_check
      _
    $region51: #{tpu_custom_call.1} parent=1 // pred_check_branch
      %96 = sbr.rel (0) target = $region53
    $region52: #{tpu_custom_call.1} parent=1 // pred_region
      %97 = dma.done [#allocation10], 2048
    $region53: #{tpu_custom_call.1} parent=1 // pred_fallthru
      _
    %v98 = vld [vmem:[#allocation3] sm:$0xff]
    %v99 = vld [vmem:[#allocation3 + $0x8] sm:$0xff]
    %v100 = vld [vmem:[#allocation3 + $0x10] sm:$0xff]
    %v101 = vld [vmem:[#allocation3 + $0x18] sm:$0xff]
    %v102 = vld [vmem:[#allocation3 + $0x20] sm:$0xff]
    %v103 = vld [vmem:[#allocation3 + $0x28] sm:$0xff]
    %v104 = vld [vmem:[#allocation3 + $0x30] sm:$0xff]
    %v105 = vld [vmem:[#allocation3 + $0x38] sm:$0xff]
    %v106 = vld [vmem:[#allocation6] sm:$0xff]
    %v107 = vld [vmem:[#allocation6 + $0x8] sm:$0xff]
    %v108 = vld [vmem:[#allocation6 + $0x10] sm:$0xff]
    %v109 = vld [vmem:[#allocation6 + $0x18] sm:$0xff]
    %v110 = vld [vmem:[#allocation6 + $0x20] sm:$0xff]
    %v111 = vld [vmem:[#allocation6 + $0x28] sm:$0xff]
    %v112 = vld [vmem:[#allocation6 + $0x30] sm:$0xff]
    %v113 = vld [vmem:[#allocation6 + $0x38] sm:$0xff]
    %v114 = vld [vmem:[#allocation6 + $0x40] sm:$0xff]
    %v115 = vld [vmem:[#allocation6 + $0x48] sm:$0xff]
    %v116 = vld [vmem:[#allocation6 + $0x50] sm:$0xff]
    %v117 = vld [vmem:[#allocation6 + $0x58] sm:$0xff]
    %v118 = vld [vmem:[#allocation6 + $0x60] sm:$0xff]
    %v119 = vld [vmem:[#allocation6 + $0x68] sm:$0xff]
    %v120 = vld [vmem:[#allocation6 + $0x70] sm:$0xff]
    %v121 = vld [vmem:[#allocation6 + $0x78] sm:$0xff]
    %v122 = vld [vmem:[#allocation6 + $0x80] sm:$0xff]
    %v123 = vld [vmem:[#allocation6 + $0x88] sm:$0xff]
    %v124 = vld [vmem:[#allocation6 + $0x90] sm:$0xff]
    %v125 = vld [vmem:[#allocation6 + $0x98] sm:$0xff]
    %v126 = vld [vmem:[#allocation6 + $0xa0] sm:$0xff]
    %v127 = vld [vmem:[#allocation6 + $0xa8] sm:$0xff]
    %v128 = vld [vmem:[#allocation6 + $0xb0] sm:$0xff]
    %v129 = vld [vmem:[#allocation6 + $0xb8] sm:$0xff]
    %v130 = vld [vmem:[#allocation6 + $0xc0] sm:$0xff]
    %v131 = vld [vmem:[#allocation6 + $0xc8] sm:$0xff]
    %v132 = vld [vmem:[#allocation6 + $0xd0] sm:$0xff]
    %v133 = vld [vmem:[#allocation6 + $0xd8] sm:$0xff]
    %v134 = vld [vmem:[#allocation6 + $0xe0] sm:$0xff]
    %v135 = vld [vmem:[#allocation6 + $0xe8] sm:$0xff]
    %v136 = vld [vmem:[#allocation6 + $0xf0] sm:$0xff]
    %v137 = vld [vmem:[#allocation6 + $0xf8] sm:$0xff]
    %v138 = vld [vmem:[#allocation6 + $0x100] sm:$0xff]
    %v139 = vld [vmem:[#allocation6 + $0x108] sm:$0xff]
    %v140 = vld [vmem:[#allocation6 + $0x110] sm:$0xff]
    %v141 = vld [vmem:[#allocation6 + $0x118] sm:$0xff]
    %v142 = vld [vmem:[#allocation6 + $0x120] sm:$0xff]
    %v143 = vld [vmem:[#allocation6 + $0x128] sm:$0xff]
    %v144 = vld [vmem:[#allocation6 + $0x130] sm:$0xff]
    %v145 = vld [vmem:[#allocation6 + $0x138] sm:$0xff]
    %v146 = vld [vmem:[#allocation6 + $0x140] sm:$0xff]
    %v147 = vld [vmem:[#allocation6 + $0x148] sm:$0xff]
    %v148 = vld [vmem:[#allocation6 + $0x150] sm:$0xff]
    %v149 = vld [vmem:[#allocation6 + $0x158] sm:$0xff]
    %v150 = vld [vmem:[#allocation6 + $0x160] sm:$0xff]
    %v151 = vld [vmem:[#allocation6 + $0x168] sm:$0xff]
    %v152 = vld [vmem:[#allocation6 + $0x170] sm:$0xff]
    %v153 = vld [vmem:[#allocation6 + $0x178] sm:$0xff]
    %v154 = vld [vmem:[#allocation6 + $0x180] sm:$0xff]
    %v155 = vld [vmem:[#allocation6 + $0x188] sm:$0xff]
    %v156 = vld [vmem:[#allocation6 + $0x190] sm:$0xff]
    %v157 = vld [vmem:[#allocation6 + $0x198] sm:$0xff]
    %v158 = vld [vmem:[#allocation6 + $0x1a0] sm:$0xff]
    %v159 = vld [vmem:[#allocation6 + $0x1a8] sm:$0xff]
    %v160 = vld [vmem:[#allocation6 + $0x1b0] sm:$0xff]
    %v161 = vld [vmem:[#allocation6 + $0x1b8] sm:$0xff]
    %v162 = vld [vmem:[#allocation6 + $0x1c0] sm:$0xff]
    %v163 = vld [vmem:[#allocation6 + $0x1c8] sm:$0xff]
    %v164 = vld [vmem:[#allocation6 + $0x1d0] sm:$0xff]
    %v165 = vld [vmem:[#allocation6 + $0x1d8] sm:$0xff]
    %v166 = vld [vmem:[#allocation6 + $0x1e0] sm:$0xff]
    %v167 = vld [vmem:[#allocation6 + $0x1e8] sm:$0xff]
    %v168 = vld [vmem:[#allocation6 + $0x1f0] sm:$0xff]
    %v169 = vld [vmem:[#allocation6 + $0x1f8] sm:$0xff]
    %v170 = vld [vmem:[%s3] sm:$0xf]
    %v172 = vlaneseq
    %v173 = vshrl.u32 %v172, 7
    %v174 = vsub.s32 0, %v173
    %v175 = vrot.slane %v170, %v174
    %v176 = vlaneseq
    %v177 = vshrl.u32 %v176, 7
    %v178 = vsub.s32 1, %v177
    %v179 = vrot.slane %v170, %v178
    %v180 = vlaneseq
    %v181 = vshrl.u32 %v180, 7
    %v182 = vsub.s32 2, %v181
    %v183 = vrot.slane %v170, %v182
    %v184 = vlaneseq
    %v185 = vshrl.u32 %v184, 7
    %v186 = vsub.s32 3, %v185
    %v187 = vrot.slane %v170, %v186
    %192 = vmatprep.subr.mxu0 %v167
    %193 = vmatpush1.msra.mxu0 %v166
    %194 = vmatprep.subr.mxu0 %v163
    %195 = vmatpush1.msra.mxu0 %v162
    %196 = vmatprep.subr.mxu0 %v159
    %197 = vmatpush1.msra.mxu0 %v158
    %198 = vmatprep.subr.mxu0 %v155
    %199 = vmatpush1.msra.mxu0 %v154
    %200 = vmatprep.subr.mxu0 %v151
    %201 = vmatpush1.msra.mxu0 %v150
    %202 = vmatprep.subr.mxu0 %v147
    %203 = vmatpush1.msra.mxu0 %v146
    %204 = vmatprep.subr.mxu0 %v143
    %205 = vmatpush1.msra.mxu0 %v142
    %206 = vmatprep.subr.mxu0 %v139
    %207 = vmatpush1.msra.mxu0 %v138
    %208 = vmatprep.subr.mxu0 %v135
    %209 = vmatpush1.msra.mxu0 %v134
    %210 = vmatprep.subr.mxu0 %v131
    %211 = vmatpush1.msra.mxu0 %v130
    %212 = vmatprep.subr.mxu0 %v127
    %213 = vmatpush1.msra.mxu0 %v126
    %214 = vmatprep.subr.mxu0 %v123
    %215 = vmatpush1.msra.mxu0 %v122
    %216 = vmatprep.subr.mxu0 %v119
    %217 = vmatpush1.msra.mxu0 %v118
    %218 = vmatprep.subr.mxu0 %v115
    %219 = vmatpush1.msra.mxu0 %v114
    %220 = vmatprep.subr.mxu0 %v111
    %221 = vmatpush1.msra.mxu0 %v110
    %222 = vmatprep.subr.mxu0 %v107
    %223 = vmatpush1.msra.mxu0 %v106
    %224 = vmatprep.subr.mxu0 0.0
    %225 = vmatpush2.msra.mxu0 0.0
    %226 = vmatprep.subr.mxu0 0.0
    %227 = vmatpush2.msra.mxu0 0.0
    %228 = vmatprep.subr.mxu0 0.0
    %229 = vmatpush2.msra.mxu0 0.0
    %230 = vmatprep.subr.mxu0 0.0
    %231 = vmatpush2.msra.mxu0 0.0
    %232 = vmatprep.subr.mxu0 0.0
    %233 = vmatpush2.msra.mxu0 0.0
    %234 = vmatprep.subr.mxu0 0.0
    %235 = vmatpush2.msra.mxu0 0.0
    %236 = vmatprep.subr.mxu0 0.0
    %237 = vmatpush2.msra.mxu0 0.0
    %238 = vmatprep.subr.mxu0 0.0
    %239 = vmatpush2.msra.mxu0 0.0
    %240 = vmatprep.subr.mxu0 0.0
    %241 = vmatpush2.msra.mxu0 0.0
    %242 = vmatprep.subr.mxu0 0.0
    %243 = vmatpush2.msra.mxu0 0.0
    %244 = vmatprep.subr.mxu0 0.0
    %245 = vmatpush2.msra.mxu0 0.0
    %246 = vmatprep.subr.mxu0 0.0
    %247 = vmatpush2.msra.mxu0 0.0
    %248 = vmatprep.subr.mxu0 0.0
    %249 = vmatpush2.msra.mxu0 0.0
    %250 = vmatprep.subr.mxu0 0.0
    %251 = vmatpush2.msra.mxu0 0.0
    %252 = vmatprep.subr.mxu0 0.0
    %253 = vmatpush2.msra.mxu0 0.0
    %254 = vmatprep.subr.mxu0 0.0
    %255 = vmatpush2.msra.mxu0 0.0
    %256 = vmatprep.mubr.f32.mxu0 0.0
    %257 = vmatmul.mubr.f32.gmra.mxu0 %v98
    %v258 = vpop.f32.mrf.mxu0
    %v259 = vadd.f32 %v175, %v258
    %v260 = vpop.f32.mrf.mxu0
    %v261 = vadd.f32 %v179, %v260
    %262 = vmatprep.mubr.f32.mxu0 0.0
    %263 = vmatmul.mubr.f32.gmra.mxu0 %v99
    %v264 = vpop.f32.mrf.mxu0
    %v265 = vadd.f32 %v175, %v264
    %v266 = vpop.f32.mrf.mxu0
    %v267 = vadd.f32 %v179, %v266
    %268 = vmatprep.mubr.f32.mxu0 0.0
    %269 = vmatmul.mubr.f32.gmra.mxu0 %v100
    %v270 = vpop.f32.mrf.mxu0
    %v271 = vadd.f32 %v175, %v270
    %v272 = vpop.f32.mrf.mxu0
    %v273 = vadd.f32 %v179, %v272
    %274 = vmatprep.mubr.f32.mxu0 0.0
    %275 = vmatmul.mubr.f32.gmra.mxu0 %v101
    %v276 = vpop.f32.mrf.mxu0
    %v277 = vadd.f32 %v175, %v276
    %v278 = vpop.f32.mrf.mxu0
    %v279 = vadd.f32 %v179, %v278
    %280 = vmatprep.mubr.f32.mxu0 0.0
    %281 = vmatmul.mubr.f32.gmra.mxu0 %v102
    %v282 = vpop.f32.mrf.mxu0
    %v283 = vadd.f32 %v175, %v282
    %v284 = vpop.f32.mrf.mxu0
    %v285 = vadd.f32 %v179, %v284
    %286 = vmatprep.mubr.f32.mxu0 0.0
    %287 = vmatmul.mubr.f32.gmra.mxu0 %v103
    %v288 = vpop.f32.mrf.mxu0
    %v289 = vadd.f32 %v175, %v288
    %v290 = vpop.f32.mrf.mxu0
    %v291 = vadd.f32 %v179, %v290
    %292 = vmatprep.mubr.f32.mxu0 0.0
    %293 = vmatmul.mubr.f32.gmra.mxu0 %v104
    %v294 = vpop.f32.mrf.mxu0
    %v295 = vadd.f32 %v175, %v294
    %v296 = vpop.f32.mrf.mxu0
    %v297 = vadd.f32 %v179, %v296
    %298 = vmatprep.mubr.f32.mxu0 0.0
    %299 = vmatmul.mubr.f32.gmra.mxu0 %v105
    %v300 = vpop.f32.mrf.mxu0
    %v301 = vadd.f32 %v175, %v300
    %v302 = vpop.f32.mrf.mxu0
    %v303 = vadd.f32 %v179, %v302
    %304 = vdwg.mxu0
    %305 = vmatprep.subr.mxu0 %v169
    %306 = vmatpush1.msra.mxu0 %v168
    %307 = vmatprep.subr.mxu0 %v165
    %308 = vmatpush1.msra.mxu0 %v164
    %309 = vmatprep.subr.mxu0 %v161
    %310 = vmatpush1.msra.mxu0 %v160
    %311 = vmatprep.subr.mxu0 %v157
    %312 = vmatpush1.msra.mxu0 %v156
    %313 = vmatprep.subr.mxu0 %v153
    %314 = vmatpush1.msra.mxu0 %v152
    %315 = vmatprep.subr.mxu0 %v149
    %316 = vmatpush1.msra.mxu0 %v148
    %317 = vmatprep.subr.mxu0 %v145
    %318 = vmatpush1.msra.mxu0 %v144
    %319 = vmatprep.subr.mxu0 %v141
    %320 = vmatpush1.msra.mxu0 %v140
    %321 = vmatprep.subr.mxu0 %v137
    %322 = vmatpush1.msra.mxu0 %v136
    %323 = vmatprep.subr.mxu0 %v133
    %324 = vmatpush1.msra.mxu0 %v132
    %325 = vmatprep.subr.mxu0 %v129
    %326 = vmatpush1.msra.mxu0 %v128
    %327 = vmatprep.subr.mxu0 %v125
    %328 = vmatpush1.msra.mxu0 %v124
    %329 = vmatprep.subr.mxu0 %v121
    %330 = vmatpush1.msra.mxu0 %v120
    %331 = vmatprep.subr.mxu0 %v117
    %332 = vmatpush1.msra.mxu0 %v116
    %333 = vmatprep.subr.mxu0 %v113
    %334 = vmatpush1.msra.mxu0 %v112
    %335 = vmatprep.subr.mxu0 %v109
    %336 = vmatpush1.msra.mxu0 %v108
    %337 = vmatprep.subr.mxu0 0.0
    %338 = vmatpush2.msra.mxu0 0.0
    %339 = vmatprep.subr.mxu0 0.0
    %340 = vmatpush2.msra.mxu0 0.0
    %341 = vmatprep.subr.mxu0 0.0
    %342 = vmatpush2.msra.mxu0 0.0
    %343 = vmatprep.subr.mxu0 0.0
    %344 = vmatpush2.msra.mxu0 0.0
    %345 = vmatprep.subr.mxu0 0.0
    %346 = vmatpush2.msra.mxu0 0.0
    %347 = vmatprep.subr.mxu0 0.0
    %348 = vmatpush2.msra.mxu0 0.0
    %349 = vmatprep.subr.mxu0 0.0
    %350 = vmatpush2.msra.mxu0 0.0
    %351 = vmatprep.subr.mxu0 0.0
    %352 = vmatpush2.msra.mxu0 0.0
    %353 = vmatprep.subr.mxu0 0.0
    %354 = vmatpush2.msra.mxu0 0.0
    %355 = vmatprep.subr.mxu0 0.0
    %356 = vmatpush2.msra.mxu0 0.0
    %357 = vmatprep.subr.mxu0 0.0
    %358 = vmatpush2.msra.mxu0 0.0
    %359 = vmatprep.subr.mxu0 0.0
    %360 = vmatpush2.msra.mxu0 0.0
    %361 = vmatprep.subr.mxu0 0.0
    %362 = vmatpush2.msra.mxu0 0.0
    %363 = vmatprep.subr.mxu0 0.0
    %364 = vmatpush2.msra.mxu0 0.0
    %365 = vmatprep.subr.mxu0 0.0
    %366 = vmatpush2.msra.mxu0 0.0
    %367 = vmatprep.subr.mxu0 0.0
    %368 = vmatpush2.msra.mxu0 0.0
    %369 = vmatprep.mubr.f32.mxu0 0.0
    %370 = vmatmul.mubr.f32.gmra.mxu0 %v98
    %v371 = vpop.f32.mrf.mxu0
    %v372 = vadd.f32 %v183, %v371
    %v373 = vpop.f32.mrf.mxu0
    %v374 = vadd.f32 %v187, %v373
    %375 = vmatprep.mubr.f32.mxu0 0.0
    %376 = vmatmul.mubr.f32.gmra.mxu0 %v99
    %v377 = vpop.f32.mrf.mxu0
    %v378 = vadd.f32 %v183, %v377
    %v379 = vpop.f32.mrf.mxu0
    %v380 = vadd.f32 %v187, %v379
    %381 = vmatprep.mubr.f32.mxu0 0.0
    %382 = vmatmul.mubr.f32.gmra.mxu0 %v100
    %v383 = vpop.f32.mrf.mxu0
    %v384 = vadd.f32 %v183, %v383
    %v385 = vpop.f32.mrf.mxu0
    %v386 = vadd.f32 %v187, %v385
    %387 = vmatprep.mubr.f32.mxu0 0.0
    %388 = vmatmul.mubr.f32.gmra.mxu0 %v101
    %v389 = vpop.f32.mrf.mxu0
    %v390 = vadd.f32 %v183, %v389
    %v391 = vpop.f32.mrf.mxu0
    %v392 = vadd.f32 %v187, %v391
    %393 = vmatprep.mubr.f32.mxu0 0.0
    %394 = vmatmul.mubr.f32.gmra.mxu0 %v102
    %v395 = vpop.f32.mrf.mxu0
    %v396 = vadd.f32 %v183, %v395
    %v397 = vpop.f32.mrf.mxu0
    %v398 = vadd.f32 %v187, %v397
    %399 = vmatprep.mubr.f32.mxu0 0.0
    %400 = vmatmul.mubr.f32.gmra.mxu0 %v103
    %v401 = vpop.f32.mrf.mxu0
    %v402 = vadd.f32 %v183, %v401
    %v403 = vpop.f32.mrf.mxu0
    %v404 = vadd.f32 %v187, %v403
    %405 = vmatprep.mubr.f32.mxu0 0.0
    %406 = vmatmul.mubr.f32.gmra.mxu0 %v104
    %v407 = vpop.f32.mrf.mxu0
    %v408 = vadd.f32 %v183, %v407
    %v409 = vpop.f32.mrf.mxu0
    %v410 = vadd.f32 %v187, %v409
    %411 = vmatprep.mubr.f32.mxu0 0.0
    %412 = vmatmul.mubr.f32.gmra.mxu0 %v105
    %v413 = vpop.f32.mrf.mxu0
    %v414 = vadd.f32 %v183, %v413
    %v415 = vpop.f32.mrf.mxu0
    %v416 = vadd.f32 %v187, %v415
    %417 = vdwg.mxu0
    %418 = vst [vmem:[#allocation2] sm:$0xff] %v259
    %419 = vst [vmem:[#allocation2 + $0x8] sm:$0xff] %v261
    %420 = vst [vmem:[#allocation2 + $0x10] sm:$0xff] %v372
    %421 = vst [vmem:[#allocation2 + $0x18] sm:$0xff] %v374
    %422 = vst [vmem:[#allocation2 + $0x20] sm:$0xff] %v265
    %423 = vst [vmem:[#allocation2 + $0x28] sm:$0xff] %v267
    %424 = vst [vmem:[#allocation2 + $0x30] sm:$0xff] %v378
    %425 = vst [vmem:[#allocation2 + $0x38] sm:$0xff] %v380
    %426 = vst [vmem:[#allocation2 + $0x40] sm:$0xff] %v271
    %427 = vst [vmem:[#allocation2 + $0x48] sm:$0xff] %v273
    %428 = vst [vmem:[#allocation2 + $0x50] sm:$0xff] %v384
    %429 = vst [vmem:[#allocation2 + $0x58] sm:$0xff] %v386
    %430 = vst [vmem:[#allocation2 + $0x60] sm:$0xff] %v277
    %431 = vst [vmem:[#allocation2 + $0x68] sm:$0xff] %v279
    %432 = vst [vmem:[#allocation2 + $0x70] sm:$0xff] %v390
    %433 = vst [vmem:[#allocation2 + $0x78] sm:$0xff] %v392
    %434 = vst [vmem:[#allocation2 + $0x80] sm:$0xff] %v283
    %435 = vst [vmem:[#allocation2 + $0x88] sm:$0xff] %v285
    %436 = vst [vmem:[#allocation2 + $0x90] sm:$0xff] %v396
    %437 = vst [vmem:[#allocation2 + $0x98] sm:$0xff] %v398
    %438 = vst [vmem:[#allocation2 + $0xa0] sm:$0xff] %v289
    %439 = vst [vmem:[#allocation2 + $0xa8] sm:$0xff] %v291
    %440 = vst [vmem:[#allocation2 + $0xb0] sm:$0xff] %v402
    %441 = vst [vmem:[#allocation2 + $0xb8] sm:$0xff] %v404
    %442 = vst [vmem:[#allocation2 + $0xc0] sm:$0xff] %v295
    %443 = vst [vmem:[#allocation2 + $0xc8] sm:$0xff] %v297
    %444 = vst [vmem:[#allocation2 + $0xd0] sm:$0xff] %v408
    %445 = vst [vmem:[#allocation2 + $0xd8] sm:$0xff] %v410
    %446 = vst [vmem:[#allocation2 + $0xe0] sm:$0xff] %v301
    %447 = vst [vmem:[#allocation2 + $0xe8] sm:$0xff] %v303
    %448 = vst [vmem:[#allocation2 + $0xf0] sm:$0xff] %v414
    %449 = vst [vmem:[#allocation2 + $0xf8] sm:$0xff] %v416
    %v450 = vld [vmem:[#allocation8] sm:$0xff]
    %v451 = vld [vmem:[#allocation8 + $0x8] sm:$0xff]
    %v452 = vld [vmem:[#allocation8 + $0x10] sm:$0xff]
    %v453 = vld [vmem:[#allocation8 + $0x18] sm:$0xff]
    %v454 = vld [vmem:[#allocation8 + $0x20] sm:$0xff]
    %v455 = vld [vmem:[#allocation8 + $0x28] sm:$0xff]
    %v456 = vld [vmem:[#allocation8 + $0x30] sm:$0xff]
    %v457 = vld [vmem:[#allocation8 + $0x38] sm:$0xff]
    %v458 = vld [vmem:[#allocation8 + $0x40] sm:$0xff]
    %v459 = vld [vmem:[#allocation8 + $0x48] sm:$0xff]
    %v460 = vld [vmem:[#allocation8 + $0x50] sm:$0xff]
    %v461 = vld [vmem:[#allocation8 + $0x58] sm:$0xff]
    %v462 = vld [vmem:[#allocation8 + $0x60] sm:$0xff]
    %v463 = vld [vmem:[#allocation8 + $0x68] sm:$0xff]
    %v464 = vld [vmem:[#allocation8 + $0x70] sm:$0xff]
    %v465 = vld [vmem:[#allocation8 + $0x78] sm:$0xff]
    %v466 = vld [vmem:[#allocation8 + $0x80] sm:$0xff]
    %v467 = vld [vmem:[#allocation8 + $0x88] sm:$0xff]
    %v468 = vld [vmem:[#allocation8 + $0x90] sm:$0xff]
    %v469 = vld [vmem:[#allocation8 + $0x98] sm:$0xff]
    %v470 = vld [vmem:[#allocation8 + $0xa0] sm:$0xff]
    %v471 = vld [vmem:[#allocation8 + $0xa8] sm:$0xff]
    %v472 = vld [vmem:[#allocation8 + $0xb0] sm:$0xff]
    %v473 = vld [vmem:[#allocation8 + $0xb8] sm:$0xff]
    %v474 = vld [vmem:[#allocation8 + $0xc0] sm:$0xff]
    %v475 = vld [vmem:[#allocation8 + $0xc8] sm:$0xff]
    %v476 = vld [vmem:[#allocation8 + $0xd0] sm:$0xff]
    %v477 = vld [vmem:[#allocation8 + $0xd8] sm:$0xff]
    %v478 = vld [vmem:[#allocation8 + $0xe0] sm:$0xff]
    %v479 = vld [vmem:[#allocation8 + $0xe8] sm:$0xff]
    %v480 = vld [vmem:[#allocation8 + $0xf0] sm:$0xff]
    %v481 = vld [vmem:[#allocation8 + $0xf8] sm:$0xff]
    %v482 = vld [vmem:[#allocation8 + $0x100] sm:$0xff]
    %v483 = vld [vmem:[#allocation8 + $0x108] sm:$0xff]
    %v484 = vld [vmem:[#allocation8 + $0x110] sm:$0xff]
    %v485 = vld [vmem:[#allocation8 + $0x118] sm:$0xff]
    %v486 = vld [vmem:[#allocation8 + $0x120] sm:$0xff]
    %v487 = vld [vmem:[#allocation8 + $0x128] sm:$0xff]
    %v488 = vld [vmem:[#allocation8 + $0x130] sm:$0xff]
    %v489 = vld [vmem:[#allocation8 + $0x138] sm:$0xff]
    %v490 = vld [vmem:[#allocation8 + $0x140] sm:$0xff]
    %v491 = vld [vmem:[#allocation8 + $0x148] sm:$0xff]
    %v492 = vld [vmem:[#allocation8 + $0x150] sm:$0xff]
    %v493 = vld [vmem:[#allocation8 + $0x158] sm:$0xff]
    %v494 = vld [vmem:[#allocation8 + $0x160] sm:$0xff]
    %v495 = vld [vmem:[#allocation8 + $0x168] sm:$0xff]
    %v496 = vld [vmem:[#allocation8 + $0x170] sm:$0xff]
    %v497 = vld [vmem:[#allocation8 + $0x178] sm:$0xff]
    %v498 = vld [vmem:[#allocation8 + $0x180] sm:$0xff]
    %v499 = vld [vmem:[#allocation8 + $0x188] sm:$0xff]
    %v500 = vld [vmem:[#allocation8 + $0x190] sm:$0xff]
    %v501 = vld [vmem:[#allocation8 + $0x198] sm:$0xff]
    %v502 = vld [vmem:[#allocation8 + $0x1a0] sm:$0xff]
    %v503 = vld [vmem:[#allocation8 + $0x1a8] sm:$0xff]
    %v504 = vld [vmem:[#allocation8 + $0x1b0] sm:$0xff]
    %v505 = vld [vmem:[#allocation8 + $0x1b8] sm:$0xff]
    %v506 = vld [vmem:[#allocation8 + $0x1c0] sm:$0xff]
    %v507 = vld [vmem:[#allocation8 + $0x1c8] sm:$0xff]
    %v508 = vld [vmem:[#allocation8 + $0x1d0] sm:$0xff]
    %v509 = vld [vmem:[#allocation8 + $0x1d8] sm:$0xff]
    %v510 = vld [vmem:[#allocation8 + $0x1e0] sm:$0xff]
    %v511 = vld [vmem:[#allocation8 + $0x1e8] sm:$0xff]
    %v512 = vld [vmem:[#allocation8 + $0x1f0] sm:$0xff]
    %v513 = vld [vmem:[#allocation8 + $0x1f8] sm:$0xff]
    %v514 = vld [vmem:[#allocation9] sm:$0xff]
    %v515 = vld [vmem:[#allocation9 + $0x8] sm:$0xff]
    %v516 = vld [vmem:[#allocation9 + $0x10] sm:$0xff]
    %v517 = vld [vmem:[#allocation9 + $0x18] sm:$0xff]
    %v518 = vld [vmem:[#allocation9 + $0x20] sm:$0xff]
    %v519 = vld [vmem:[#allocation9 + $0x28] sm:$0xff]
    %v520 = vld [vmem:[#allocation9 + $0x30] sm:$0xff]
    %v521 = vld [vmem:[#allocation9 + $0x38] sm:$0xff]
    %v522 = vld [vmem:[#allocation9 + $0x40] sm:$0xff]
    %v523 = vld [vmem:[#allocation9 + $0x48] sm:$0xff]
    %v524 = vld [vmem:[#allocation9 + $0x50] sm:$0xff]
    %v525 = vld [vmem:[#allocation9 + $0x58] sm:$0xff]
    %v526 = vld [vmem:[#allocation9 + $0x60] sm:$0xff]
    %v527 = vld [vmem:[#allocation9 + $0x68] sm:$0xff]
    %v528 = vld [vmem:[#allocation9 + $0x70] sm:$0xff]
    %v529 = vld [vmem:[#allocation9 + $0x78] sm:$0xff]
    %v530 = vld [vmem:[#allocation9 + $0x80] sm:$0xff]
    %v531 = vld [vmem:[#allocation9 + $0x88] sm:$0xff]
    %v532 = vld [vmem:[#allocation9 + $0x90] sm:$0xff]
    %v533 = vld [vmem:[#allocation9 + $0x98] sm:$0xff]
    %v534 = vld [vmem:[#allocation9 + $0xa0] sm:$0xff]
    %v535 = vld [vmem:[#allocation9 + $0xa8] sm:$0xff]
    %v536 = vld [vmem:[#allocation9 + $0xb0] sm:$0xff]
    %v537 = vld [vmem:[#allocation9 + $0xb8] sm:$0xff]
    %v538 = vld [vmem:[#allocation9 + $0xc0] sm:$0xff]
    %v539 = vld [vmem:[#allocation9 + $0xc8] sm:$0xff]
    %v540 = vld [vmem:[#allocation9 + $0xd0] sm:$0xff]
    %v541 = vld [vmem:[#allocation9 + $0xd8] sm:$0xff]
    %v542 = vld [vmem:[#allocation9 + $0xe0] sm:$0xff]
    %v543 = vld [vmem:[#allocation9 + $0xe8] sm:$0xff]
    %v544 = vld [vmem:[#allocation9 + $0xf0] sm:$0xff]
    %v545 = vld [vmem:[#allocation9 + $0xf8] sm:$0xff]
    %v546 = vld [vmem:[#allocation9 + $0x100] sm:$0xff]
    %v547 = vld [vmem:[#allocation9 + $0x108] sm:$0xff]
    %v548 = vld [vmem:[#allocation9 + $0x110] sm:$0xff]
    %v549 = vld [vmem:[#allocation9 + $0x118] sm:$0xff]
    %v550 = vld [vmem:[#allocation9 + $0x120] sm:$0xff]
    %v551 = vld [vmem:[#allocation9 + $0x128] sm:$0xff]
    %v552 = vld [vmem:[#allocation9 + $0x130] sm:$0xff]
    %v553 = vld [vmem:[#allocation9 + $0x138] sm:$0xff]
    %v554 = vld [vmem:[#allocation9 + $0x140] sm:$0xff]
    %v555 = vld [vmem:[#allocation9 + $0x148] sm:$0xff]
    %v556 = vld [vmem:[#allocation9 + $0x150] sm:$0xff]
    %v557 = vld [vmem:[#allocation9 + $0x158] sm:$0xff]
    %v558 = vld [vmem:[#allocation9 + $0x160] sm:$0xff]
    %v559 = vld [vmem:[#allocation9 + $0x168] sm:$0xff]
    %v560 = vld [vmem:[#allocation9 + $0x170] sm:$0xff]
    %v561 = vld [vmem:[#allocation9 + $0x178] sm:$0xff]
    %v562 = vld [vmem:[#allocation9 + $0x180] sm:$0xff]
    %v563 = vld [vmem:[#allocation9 + $0x188] sm:$0xff]
    %v564 = vld [vmem:[#allocation9 + $0x190] sm:$0xff]
    %v565 = vld [vmem:[#allocation9 + $0x198] sm:$0xff]
    %v566 = vld [vmem:[#allocation9 + $0x1a0] sm:$0xff]
    %v567 = vld [vmem:[#allocation9 + $0x1a8] sm:$0xff]
    %v568 = vld [vmem:[#allocation9 + $0x1b0] sm:$0xff]
    %v569 = vld [vmem:[#allocation9 + $0x1b8] sm:$0xff]
    %v570 = vld [vmem:[#allocation9 + $0x1c0] sm:$0xff]
    %v571 = vld [vmem:[#allocation9 + $0x1c8] sm:$0xff]
    %v572 = vld [vmem:[#allocation9 + $0x1d0] sm:$0xff]
    %v573 = vld [vmem:[#allocation9 + $0x1d8] sm:$0xff]
    %v574 = vld [vmem:[#allocation9 + $0x1e0] sm:$0xff]
    %v575 = vld [vmem:[#allocation9 + $0x1e8] sm:$0xff]
    %v576 = vld [vmem:[#allocation9 + $0x1f0] sm:$0xff]
    %v577 = vld [vmem:[#allocation9 + $0x1f8] sm:$0xff]
    %v578 = vld [vmem:[#allocation9 + $0x200] sm:$0xff]
    %v579 = vld [vmem:[#allocation9 + $0x208] sm:$0xff]
    %v580 = vld [vmem:[#allocation9 + $0x210] sm:$0xff]
    %v581 = vld [vmem:[#allocation9 + $0x218] sm:$0xff]
    %v582 = vld [vmem:[#allocation9 + $0x220] sm:$0xff]
    %v583 = vld [vmem:[#allocation9 + $0x228] sm:$0xff]
    %v584 = vld [vmem:[#allocation9 + $0x230] sm:$0xff]
    %v585 = vld [vmem:[#allocation9 + $0x238] sm:$0xff]
    %v586 = vld [vmem:[#allocation9 + $0x240] sm:$0xff]
    %v587 = vld [vmem:[#allocation9 + $0x248] sm:$0xff]
    %v588 = vld [vmem:[#allocation9 + $0x250] sm:$0xff]
    %v589 = vld [vmem:[#allocation9 + $0x258] sm:$0xff]
    %v590 = vld [vmem:[#allocation9 + $0x260] sm:$0xff]
    %v591 = vld [vmem:[#allocation9 + $0x268] sm:$0xff]
    %v592 = vld [vmem:[#allocation9 + $0x270] sm:$0xff]
    %v593 = vld [vmem:[#allocation9 + $0x278] sm:$0xff]
    %v594 = vld [vmem:[#allocation9 + $0x280] sm:$0xff]
    %v595 = vld [vmem:[#allocation9 + $0x288] sm:$0xff]
    %v596 = vld [vmem:[#allocation9 + $0x290] sm:$0xff]
    %v597 = vld [vmem:[#allocation9 + $0x298] sm:$0xff]
    %v598 = vld [vmem:[#allocation9 + $0x2a0] sm:$0xff]
    %v599 = vld [vmem:[#allocation9 + $0x2a8] sm:$0xff]
    %v600 = vld [vmem:[#allocation9 + $0x2b0] sm:$0xff]
    %v601 = vld [vmem:[#allocation9 + $0x2b8] sm:$0xff]
    %v602 = vld [vmem:[#allocation9 + $0x2c0] sm:$0xff]
    %v603 = vld [vmem:[#allocation9 + $0x2c8] sm:$0xff]
    %v604 = vld [vmem:[#allocation9 + $0x2d0] sm:$0xff]
    %v605 = vld [vmem:[#allocation9 + $0x2d8] sm:$0xff]
    %v606 = vld [vmem:[#allocation9 + $0x2e0] sm:$0xff]
    %v607 = vld [vmem:[#allocation9 + $0x2e8] sm:$0xff]
    %v608 = vld [vmem:[#allocation9 + $0x2f0] sm:$0xff]
    %v609 = vld [vmem:[#allocation9 + $0x2f8] sm:$0xff]
    %v610 = vld [vmem:[#allocation9 + $0x300] sm:$0xff]
    %v611 = vld [vmem:[#allocation9 + $0x308] sm:$0xff]
    %v612 = vld [vmem:[#allocation9 + $0x310] sm:$0xff]
    %v613 = vld [vmem:[#allocation9 + $0x318] sm:$0xff]
    %v614 = vld [vmem:[#allocation9 + $0x320] sm:$0xff]
    %v615 = vld [vmem:[#allocation9 + $0x328] sm:$0xff]
    %v616 = vld [vmem:[#allocation9 + $0x330] sm:$0xff]
    %v617 = vld [vmem:[#allocation9 + $0x338] sm:$0xff]
    %v618 = vld [vmem:[#allocation9 + $0x340] sm:$0xff]
    %v619 = vld [vmem:[#allocation9 + $0x348] sm:$0xff]
    %v620 = vld [vmem:[#allocation9 + $0x350] sm:$0xff]
    %v621 = vld [vmem:[#allocation9 + $0x358] sm:$0xff]
    %v622 = vld [vmem:[#allocation9 + $0x360] sm:$0xff]
    %v623 = vld [vmem:[#allocation9 + $0x368] sm:$0xff]
    %v624 = vld [vmem:[#allocation9 + $0x370] sm:$0xff]
    %v625 = vld [vmem:[#allocation9 + $0x378] sm:$0xff]
    %v626 = vld [vmem:[#allocation9 + $0x380] sm:$0xff]
    %v627 = vld [vmem:[#allocation9 + $0x388] sm:$0xff]
    %v628 = vld [vmem:[#allocation9 + $0x390] sm:$0xff]
    %v629 = vld [vmem:[#allocation9 + $0x398] sm:$0xff]
    %v630 = vld [vmem:[#allocation9 + $0x3a0] sm:$0xff]
    %v631 = vld [vmem:[#allocation9 + $0x3a8] sm:$0xff]
    %v632 = vld [vmem:[#allocation9 + $0x3b0] sm:$0xff]
    %v633 = vld [vmem:[#allocation9 + $0x3b8] sm:$0xff]
    %v634 = vld [vmem:[#allocation9 + $0x3c0] sm:$0xff]
    %v635 = vld [vmem:[#allocation9 + $0x3c8] sm:$0xff]
    %v636 = vld [vmem:[#allocation9 + $0x3d0] sm:$0xff]
    %v637 = vld [vmem:[#allocation9 + $0x3d8] sm:$0xff]
    %v638 = vld [vmem:[#allocation9 + $0x3e0] sm:$0xff]
    %v639 = vld [vmem:[#allocation9 + $0x3e8] sm:$0xff]
    %v640 = vld [vmem:[#allocation9 + $0x3f0] sm:$0xff]
    %v641 = vld [vmem:[#allocation9 + $0x3f8] sm:$0xff]
    %v642 = vld [vmem:[%s5] sm:$0xf]
    %v643 = vld [vmem:[#allocation2] sm:$0xff]
    %v644 = vld [vmem:[#allocation2 + $0x8] sm:$0xff]
    %v645 = vld [vmem:[#allocation2 + $0x10] sm:$0xff]
    %v646 = vld [vmem:[#allocation2 + $0x18] sm:$0xff]
    %647 = vmatprep.subr.mxu0 %v511
    %648 = vmatpush1.msra.mxu0 %v510
    %649 = vmatprep.subr.mxu0 %v507
    %650 = vmatpush1.msra.mxu0 %v506
    %651 = vmatprep.subr.mxu0 %v503
    %652 = vmatpush1.msra.mxu0 %v502
    %653 = vmatprep.subr.mxu0 %v499
    %654 = vmatpush1.msra.mxu0 %v498
    %655 = vmatprep.subr.mxu0 %v495
    %656 = vmatpush1.msra.mxu0 %v494
    %657 = vmatprep.subr.mxu0 %v491
    %658 = vmatpush1.msra.mxu0 %v490
    %659 = vmatprep.subr.mxu0 %v487
    %660 = vmatpush1.msra.mxu0 %v486
    %661 = vmatprep.subr.mxu0 %v483
    %662 = vmatpush1.msra.mxu0 %v482
    %663 = vmatprep.subr.mxu0 %v479
    %664 = vmatpush1.msra.mxu0 %v478
    %665 = vmatprep.subr.mxu0 %v475
    %666 = vmatpush1.msra.mxu0 %v474
    %667 = vmatprep.subr.mxu0 %v471
    %668 = vmatpush1.msra.mxu0 %v470
    %669 = vmatprep.subr.mxu0 %v467
    %670 = vmatpush1.msra.mxu0 %v466
    %671 = vmatprep.subr.mxu0 %v463
    %672 = vmatpush1.msra.mxu0 %v462
    %673 = vmatprep.subr.mxu0 %v459
    %674 = vmatpush1.msra.mxu0 %v458
    %675 = vmatprep.subr.mxu0 %v455
    %676 = vmatpush1.msra.mxu0 %v454
    %677 = vmatprep.subr.mxu0 %v451
    %678 = vmatpush1.msra.mxu0 %v450
    %679 = vmatprep.subr.mxu0 0.0
    %680 = vmatpush2.msra.mxu0 0.0
    %681 = vmatprep.subr.mxu0 0.0
    %682 = vmatpush2.msra.mxu0 0.0
    %683 = vmatprep.subr.mxu0 0.0
    %684 = vmatpush2.msra.mxu0 0.0
    %685 = vmatprep.subr.mxu0 0.0
    %686 = vmatpush2.msra.mxu0 0.0
    %687 = vmatprep.subr.mxu0 0.0
    %688 = vmatpush2.msra.mxu0 0.0
    %689 = vmatprep.subr.mxu0 0.0
    %690 = vmatpush2.msra.mxu0 0.0
    %691 = vmatprep.subr.mxu0 0.0
    %692 = vmatpush2.msra.mxu0 0.0
    %693 = vmatprep.subr.mxu0 0.0
    %694 = vmatpush2.msra.mxu0 0.0
    %695 = vmatprep.subr.mxu0 0.0
    %696 = vmatpush2.msra.mxu0 0.0
    %697 = vmatprep.subr.mxu0 0.0
    %698 = vmatpush2.msra.mxu0 0.0
    %699 = vmatprep.subr.mxu0 0.0
    %700 = vmatpush2.msra.mxu0 0.0
    %701 = vmatprep.subr.mxu0 0.0
    %702 = vmatpush2.msra.mxu0 0.0
    %703 = vmatprep.subr.mxu0 0.0
    %704 = vmatpush2.msra.mxu0 0.0
    %705 = vmatprep.subr.mxu0 0.0
    %706 = vmatpush2.msra.mxu0 0.0
    %707 = vmatprep.subr.mxu0 0.0
    %708 = vmatpush2.msra.mxu0 0.0
    %709 = vmatprep.subr.mxu0 0.0
    %710 = vmatpush2.msra.mxu0 0.0
    %711 = vmatprep.mubr.f32.mxu0 0.0
    %712 = vmatmul.mubr.f32.gmra.mxu0 0.0
    %v713 = vpop.f32.mrf.mxu0
    %v714 = vadd.f32 0.0, %v713
    %v715 = vpop.f32.mrf.mxu0
    %v716 = vadd.f32 0.0, %v715
    %717 = vdwg.mxu0
    %718 = vmatprep.subr.mxu0 %v513
    %719 = vmatpush1.msra.mxu0 %v512
    %720 = vmatprep.subr.mxu0 %v509
    %721 = vmatpush1.msra.mxu0 %v508
    %722 = vmatprep.subr.mxu0 %v505
    %723 = vmatpush1.msra.mxu0 %v504
    %724 = vmatprep.subr.mxu0 %v501
    %725 = vmatpush1.msra.mxu0 %v500
    %726 = vmatprep.subr.mxu0 %v497
    %727 = vmatpush1.msra.mxu0 %v496
    %728 = vmatprep.subr.mxu0 %v493
    %729 = vmatpush1.msra.mxu0 %v492
    %730 = vmatprep.subr.mxu0 %v489
    %731 = vmatpush1.msra.mxu0 %v488
    %732 = vmatprep.subr.mxu0 %v485
    %733 = vmatpush1.msra.mxu0 %v484
    %734 = vmatprep.subr.mxu0 %v481
    %735 = vmatpush1.msra.mxu0 %v480
    %736 = vmatprep.subr.mxu0 %v477
    %737 = vmatpush1.msra.mxu0 %v476
    %738 = vmatprep.subr.mxu0 %v473
    %739 = vmatpush1.msra.mxu0 %v472
    %740 = vmatprep.subr.mxu0 %v469
    %741 = vmatpush1.msra.mxu0 %v468
    %742 = vmatprep.subr.mxu0 %v465
    %743 = vmatpush1.msra.mxu0 %v464
    %744 = vmatprep.subr.mxu0 %v461
    %745 = vmatpush1.msra.mxu0 %v460
    %746 = vmatprep.subr.mxu0 %v457
    %747 = vmatpush1.msra.mxu0 %v456
    %748 = vmatprep.subr.mxu0 %v453
    %749 = vmatpush1.msra.mxu0 %v452
    %750 = vmatprep.subr.mxu0 0.0
    %751 = vmatpush2.msra.mxu0 0.0
    %752 = vmatprep.subr.mxu0 0.0
    %753 = vmatpush2.msra.mxu0 0.0
    %754 = vmatprep.subr.mxu0 0.0
    %755 = vmatpush2.msra.mxu0 0.0
    %756 = vmatprep.subr.mxu0 0.0
    %757 = vmatpush2.msra.mxu0 0.0
    %758 = vmatprep.subr.mxu0 0.0
    %759 = vmatpush2.msra.mxu0 0.0
    %760 = vmatprep.subr.mxu0 0.0
    %761 = vmatpush2.msra.mxu0 0.0
    %762 = vmatprep.subr.mxu0 0.0
    %763 = vmatpush2.msra.mxu0 0.0
    %764 = vmatprep.subr.mxu0 0.0
    %765 = vmatpush2.msra.mxu0 0.0
    %766 = vmatprep.subr.mxu0 0.0
    %767 = vmatpush2.msra.mxu0 0.0
    %768 = vmatprep.subr.mxu0 0.0
    %769 = vmatpush2.msra.mxu0 0.0
    %770 = vmatprep.subr.mxu0 0.0
    %771 = vmatpush2.msra.mxu0 0.0
    %772 = vmatprep.subr.mxu0 0.0
    %773 = vmatpush2.msra.mxu0 0.0
    %774 = vmatprep.subr.mxu0 0.0
    %775 = vmatpush2.msra.mxu0 0.0
    %776 = vmatprep.subr.mxu0 0.0
    %777 = vmatpush2.msra.mxu0 0.0
    %778 = vmatprep.subr.mxu0 0.0
    %779 = vmatpush2.msra.mxu0 0.0
    %780 = vmatprep.subr.mxu0 0.0
    %781 = vmatpush2.msra.mxu0 0.0
    %782 = vmatprep.mubr.f32.mxu0 0.0
    %783 = vmatmul.mubr.f32.gmra.mxu0 0.0
    %v784 = vpop.f32.mrf.mxu0
    %v785 = vadd.f32 0.0, %v784
    %v786 = vpop.f32.mrf.mxu0
    %v787 = vadd.f32 0.0, %v786
    %788 = vdwg.mxu0
    %v789 = vadd.f32 %v643, %v714
    %v790 = vadd.f32 %v644, %v716
    %v791 = vadd.f32 %v645, %v785
    %v792 = vadd.f32 %v646, %v787
    %v793 = vxor.u32 %v789, 2147483648
    %v794 = vmul.f32 %v793, 1.442695
    %v795 = vpow.pop %v794
    %v796 = vadd.f32 %v795, 1.0
    %v797 = vrcp.pop %v796
    %v798 = vmul.f32 1.0, %v797
    %v799 = vxor.u32 %v790, 2147483648
    %v800 = vmul.f32 %v799, 1.442695
    %v801 = vpow.pop %v800
    %v802 = vadd.f32 %v801, 1.0
    %v803 = vrcp.pop %v802
    %v804 = vmul.f32 1.0, %v803
    %v805 = vtanh.pop %v791
    %v806 = vxor.u32 %v792, 2147483648
    %v807 = vmul.f32 %v806, 1.442695
    %v808 = vpow.pop %v807
    %v809 = vadd.f32 %v808, 1.0
    %v810 = vrcp.pop %v809
    %v811 = vmul.f32 1.0, %v810
    %v812 = vmul.f32 %v804, 0.0
    %v813 = vmul.f32 %v798, %v805
    %v814 = vadd.f32 %v812, %v813
    %v815 = vtanh.pop %v814
    %v816 = vmul.f32 %v811, %v815
    %v818 = vlaneseq
    %v819 = vshrl.u32 %v818, 7
    %v820 = vsub.s32 0, %v819
    %v821 = vrot.slane %v642, %v820
    %v822 = vlaneseq
    %v823 = vshrl.u32 %v822, 7
    %v824 = vsub.s32 1, %v823
    %v825 = vrot.slane %v642, %v824
    %v826 = vlaneseq
    %v827 = vshrl.u32 %v826, 7
    %v828 = vsub.s32 2, %v827
    %v829 = vrot.slane %v642, %v828
    %v830 = vlaneseq
    %v831 = vshrl.u32 %v830, 7
    %v832 = vsub.s32 3, %v831
    %v833 = vrot.slane %v642, %v832
    %838 = vmatprep.subr.mxu0 %v575
    %839 = vmatpush1.msra.mxu0 %v574
    %840 = vmatprep.subr.mxu0 %v571
    %841 = vmatpush1.msra.mxu0 %v570
    %842 = vmatprep.subr.mxu0 %v567
    %843 = vmatpush1.msra.mxu0 %v566
    %844 = vmatprep.subr.mxu0 %v563
    %845 = vmatpush1.msra.mxu0 %v562
    %846 = vmatprep.subr.mxu0 %v559
    %847 = vmatpush1.msra.mxu0 %v558
    %848 = vmatprep.subr.mxu0 %v555
    %849 = vmatpush1.msra.mxu0 %v554
    %850 = vmatprep.subr.mxu0 %v551
    %851 = vmatpush1.msra.mxu0 %v550
    %852 = vmatprep.subr.mxu0 %v547
    %853 = vmatpush1.msra.mxu0 %v546
    %854 = vmatprep.subr.mxu0 %v543
    %855 = vmatpush1.msra.mxu0 %v542
    %856 = vmatprep.subr.mxu0 %v539
    %857 = vmatpush1.msra.mxu0 %v538
    %858 = vmatprep.subr.mxu0 %v535
    %859 = vmatpush1.msra.mxu0 %v534
    %860 = vmatprep.subr.mxu0 %v531
    %861 = vmatpush1.msra.mxu0 %v530
    %862 = vmatprep.subr.mxu0 %v527
    %863 = vmatpush1.msra.mxu0 %v526
    %864 = vmatprep.subr.mxu0 %v523
    %865 = vmatpush1.msra.mxu0 %v522
    %866 = vmatprep.subr.mxu0 %v519
    %867 = vmatpush1.msra.mxu0 %v518
    %868 = vmatprep.subr.mxu0 %v515
    %869 = vmatpush1.msra.mxu0 %v514
    %870 = vmatprep.subr.mxu0 %v639
    %871 = vmatpush2.msra.mxu0 %v638
    %872 = vmatprep.subr.mxu0 %v635
    %873 = vmatpush2.msra.mxu0 %v634
    %874 = vmatprep.subr.mxu0 %v631
    %875 = vmatpush2.msra.mxu0 %v630
    %876 = vmatprep.subr.mxu0 %v627
    %877 = vmatpush2.msra.mxu0 %v626
    %878 = vmatprep.subr.mxu0 %v623
    %879 = vmatpush2.msra.mxu0 %v622
    %880 = vmatprep.subr.mxu0 %v619
    %881 = vmatpush2.msra.mxu0 %v618
    %882 = vmatprep.subr.mxu0 %v615
    %883 = vmatpush2.msra.mxu0 %v614
    %884 = vmatprep.subr.mxu0 %v611
    %885 = vmatpush2.msra.mxu0 %v610
    %886 = vmatprep.subr.mxu0 %v607
    %887 = vmatpush2.msra.mxu0 %v606
    %888 = vmatprep.subr.mxu0 %v603
    %889 = vmatpush2.msra.mxu0 %v602
    %890 = vmatprep.subr.mxu0 %v599
    %891 = vmatpush2.msra.mxu0 %v598
    %892 = vmatprep.subr.mxu0 %v595
    %893 = vmatpush2.msra.mxu0 %v594
    %894 = vmatprep.subr.mxu0 %v591
    %895 = vmatpush2.msra.mxu0 %v590
    %896 = vmatprep.subr.mxu0 %v587
    %897 = vmatpush2.msra.mxu0 %v586
    %898 = vmatprep.subr.mxu0 %v583
    %899 = vmatpush2.msra.mxu0 %v582
    %900 = vmatprep.subr.mxu0 %v579
    %901 = vmatpush2.msra.mxu0 %v578
    %902 = vmatprep.mubr.f32.mxu0 0.0
    %903 = vmatmul.mubr.f32.gmra.mxu0 %v816
    %v904 = vpop.f32.mrf.mxu0
    %v905 = vadd.f32 %v821, %v904
    %v906 = vpop.f32.mrf.mxu0
    %v907 = vadd.f32 %v825, %v906
    %908 = vdwg.mxu0
    %909 = vmatprep.subr.mxu0 %v577
    %910 = vmatpush1.msra.mxu0 %v576
    %911 = vmatprep.subr.mxu0 %v573
    %912 = vmatpush1.msra.mxu0 %v572
    %913 = vmatprep.subr.mxu0 %v569
    %914 = vmatpush1.msra.mxu0 %v568
    %915 = vmatprep.subr.mxu0 %v565
    %916 = vmatpush1.msra.mxu0 %v564
    %917 = vmatprep.subr.mxu0 %v561
    %918 = vmatpush1.msra.mxu0 %v560
    %919 = vmatprep.subr.mxu0 %v557
    %920 = vmatpush1.msra.mxu0 %v556
    %921 = vmatprep.subr.mxu0 %v553
    %922 = vmatpush1.msra.mxu0 %v552
    %923 = vmatprep.subr.mxu0 %v549
    %924 = vmatpush1.msra.mxu0 %v548
    %925 = vmatprep.subr.mxu0 %v545
    %926 = vmatpush1.msra.mxu0 %v544
    %927 = vmatprep.subr.mxu0 %v541
    %928 = vmatpush1.msra.mxu0 %v540
    %929 = vmatprep.subr.mxu0 %v537
    %930 = vmatpush1.msra.mxu0 %v536
    %931 = vmatprep.subr.mxu0 %v533
    %932 = vmatpush1.msra.mxu0 %v532
    %933 = vmatprep.subr.mxu0 %v529
    %934 = vmatpush1.msra.mxu0 %v528
    %935 = vmatprep.subr.mxu0 %v525
    %936 = vmatpush1.msra.mxu0 %v524
    %937 = vmatprep.subr.mxu0 %v521
    %938 = vmatpush1.msra.mxu0 %v520
    %939 = vmatprep.subr.mxu0 %v517
    %940 = vmatpush1.msra.mxu0 %v516
    %941 = vmatprep.subr.mxu0 %v641
    %942 = vmatpush2.msra.mxu0 %v640
    %943 = vmatprep.subr.mxu0 %v637
    %944 = vmatpush2.msra.mxu0 %v636
    %945 = vmatprep.subr.mxu0 %v633
    %946 = vmatpush2.msra.mxu0 %v632
    %947 = vmatprep.subr.mxu0 %v629
    %948 = vmatpush2.msra.mxu0 %v628
    %949 = vmatprep.subr.mxu0 %v625
    %950 = vmatpush2.msra.mxu0 %v624
    %951 = vmatprep.subr.mxu0 %v621
    %952 = vmatpush2.msra.mxu0 %v620
    %953 = vmatprep.subr.mxu0 %v617
    %954 = vmatpush2.msra.mxu0 %v616
    %955 = vmatprep.subr.mxu0 %v613
    %956 = vmatpush2.msra.mxu0 %v612
    %957 = vmatprep.subr.mxu0 %v609
    %958 = vmatpush2.msra.mxu0 %v608
    %959 = vmatprep.subr.mxu0 %v605
    %960 = vmatpush2.msra.mxu0 %v604
    %961 = vmatprep.subr.mxu0 %v601
    %962 = vmatpush2.msra.mxu0 %v600
    %963 = vmatprep.subr.mxu0 %v597
    %964 = vmatpush2.msra.mxu0 %v596
    %965 = vmatprep.subr.mxu0 %v593
    %966 = vmatpush2.msra.mxu0 %v592
    %967 = vmatprep.subr.mxu0 %v589
    %968 = vmatpush2.msra.mxu0 %v588
    %969 = vmatprep.subr.mxu0 %v585
    %970 = vmatpush2.msra.mxu0 %v584
    %971 = vmatprep.subr.mxu0 %v581
    %972 = vmatpush2.msra.mxu0 %v580
    %973 = vmatprep.mubr.f32.mxu0 0.0
    %974 = vmatmul.mubr.f32.gmra.mxu0 %v816
    %v975 = vpop.f32.mrf.mxu0
    %v976 = vadd.f32 %v829, %v975
    %v977 = vpop.f32.mrf.mxu0
    %v978 = vadd.f32 %v833, %v977
    %979 = vdwg.mxu0
    %v980 = vxor.u32 %v905, 2147483648
    %v981 = vmul.f32 %v980, 1.442695
    %v982 = vpow.pop %v981
    %v983 = vadd.f32 %v982, 1.0
    %v984 = vrcp.pop %v983
    %v985 = vmul.f32 1.0, %v984
    %v986 = vxor.u32 %v907, 2147483648
    %v987 = vmul.f32 %v986, 1.442695
    %v988 = vpow.pop %v987
    %v989 = vadd.f32 %v988, 1.0
    %v990 = vrcp.pop %v989
    %v991 = vmul.f32 1.0, %v990
    %v992 = vtanh.pop %v976
    %v993 = vxor.u32 %v978, 2147483648
    %v994 = vmul.f32 %v993, 1.442695
    %v995 = vpow.pop %v994
    %v996 = vadd.f32 %v995, 1.0
    %v997 = vrcp.pop %v996
    %v998 = vmul.f32 1.0, %v997
    %v999 = vmul.f32 %v991, 0.0
    %v1000 = vmul.f32 %v985, %v992
    %v1001 = vadd.f32 %v999, %v1000
    %v1002 = vtanh.pop %v1001
    %v1003 = vmul.f32 %v998, %v1002
    %s1004 = scalar_lea.vmem [#allocation2], 32
    %v1005 = vld [vmem:[%s1004] sm:$0xff]
    %v1006 = vld [vmem:[%s1004 + $0x8] sm:$0xff]
    %v1007 = vld [vmem:[%s1004 + $0x10] sm:$0xff]
    %v1008 = vld [vmem:[%s1004 + $0x18] sm:$0xff]
    %1009 = vmatprep.subr.mxu0 %v511
    %1010 = vmatpush1.msra.mxu0 %v510
    %1011 = vmatprep.subr.mxu0 %v507
    %1012 = vmatpush1.msra.mxu0 %v506
    %1013 = vmatprep.subr.mxu0 %v503
    %1014 = vmatpush1.msra.mxu0 %v502
    %1015 = vmatprep.subr.mxu0 %v499
    %1016 = vmatpush1.msra.mxu0 %v498
    %1017 = vmatprep.subr.mxu0 %v495
    %1018 = vmatpush1.msra.mxu0 %v494
    %1019 = vmatprep.subr.mxu0 %v491
    %1020 = vmatpush1.msra.mxu0 %v490
    %1021 = vmatprep.subr.mxu0 %v487
    %1022 = vmatpush1.msra.mxu0 %v486
    %1023 = vmatprep.subr.mxu0 %v483
    %1024 = vmatpush1.msra.mxu0 %v482
    %1025 = vmatprep.subr.mxu0 %v479
    %1026 = vmatpush1.msra.mxu0 %v478
    %1027 = vmatprep.subr.mxu0 %v475
    %1028 = vmatpush1.msra.mxu0 %v474
    %1029 = vmatprep.subr.mxu0 %v471
    %1030 = vmatpush1.msra.mxu0 %v470
    %1031 = vmatprep.subr.mxu0 %v467
    %1032 = vmatpush1.msra.mxu0 %v466
    %1033 = vmatprep.subr.mxu0 %v463
    %1034 = vmatpush1.msra.mxu0 %v462
    %1035 = vmatprep.subr.mxu0 %v459
    %1036 = vmatpush1.msra.mxu0 %v458
    %1037 = vmatprep.subr.mxu0 %v455
    %1038 = vmatpush1.msra.mxu0 %v454
    %1039 = vmatprep.subr.mxu0 %v451
    %1040 = vmatpush1.msra.mxu0 %v450
    %1041 = vmatprep.subr.mxu0 0.0
    %1042 = vmatpush2.msra.mxu0 0.0
    %1043 = vmatprep.subr.mxu0 0.0
    %1044 = vmatpush2.msra.mxu0 0.0
    %1045 = vmatprep.subr.mxu0 0.0
    %1046 = vmatpush2.msra.mxu0 0.0
    %1047 = vmatprep.subr.mxu0 0.0
    %1048 = vmatpush2.msra.mxu0 0.0
    %1049 = vmatprep.subr.mxu0 0.0
    %1050 = vmatpush2.msra.mxu0 0.0
    %1051 = vmatprep.subr.mxu0 0.0
    %1052 = vmatpush2.msra.mxu0 0.0
    %1053 = vmatprep.subr.mxu0 0.0
    %1054 = vmatpush2.msra.mxu0 0.0
    %1055 = vmatprep.subr.mxu0 0.0
    %1056 = vmatpush2.msra.mxu0 0.0
    %1057 = vmatprep.subr.mxu0 0.0
    %1058 = vmatpush2.msra.mxu0 0.0
    %1059 = vmatprep.subr.mxu0 0.0
    %1060 = vmatpush2.msra.mxu0 0.0
    %1061 = vmatprep.subr.mxu0 0.0
    %1062 = vmatpush2.msra.mxu0 0.0
    %1063 = vmatprep.subr.mxu0 0.0
    %1064 = vmatpush2.msra.mxu0 0.0
    %1065 = vmatprep.subr.mxu0 0.0
    %1066 = vmatpush2.msra.mxu0 0.0
    %1067 = vmatprep.subr.mxu0 0.0
    %1068 = vmatpush2.msra.mxu0 0.0
    %1069 = vmatprep.subr.mxu0 0.0
    %1070 = vmatpush2.msra.mxu0 0.0
    %1071 = vmatprep.subr.mxu0 0.0
    %1072 = vmatpush2.msra.mxu0 0.0
    %1073 = vmatprep.mubr.f32.mxu0 0.0
    %1074 = vmatmul.mubr.f32.gmra.mxu0 %v816
    %v1075 = vpop.f32.mrf.mxu0
    %v1076 = vadd.f32 0.0, %v1075
    %v1077 = vpop.f32.mrf.mxu0
    %v1078 = vadd.f32 0.0, %v1077
    %1079 = vdwg.mxu0
    %1080 = vmatprep.subr.mxu0 %v513
    %1081 = vmatpush1.msra.mxu0 %v512
    %1082 = vmatprep.subr.mxu0 %v509
    %1083 = vmatpush1.msra.mxu0 %v508
    %1084 = vmatprep.subr.mxu0 %v505
    %1085 = vmatpush1.msra.mxu0 %v504
    %1086 = vmatprep.subr.mxu0 %v501
    %1087 = vmatpush1.msra.mxu0 %v500
    %1088 = vmatprep.subr.mxu0 %v497
    %1089 = vmatpush1.msra.mxu0 %v496
    %1090 = vmatprep.subr.mxu0 %v493
    %1091 = vmatpush1.msra.mxu0 %v492
    %1092 = vmatprep.subr.mxu0 %v489
    %1093 = vmatpush1.msra.mxu0 %v488
    %1094 = vmatprep.subr.mxu0 %v485
    %1095 = vmatpush1.msra.mxu0 %v484
    %1096 = vmatprep.subr.mxu0 %v481
    %1097 = vmatpush1.msra.mxu0 %v480
    %1098 = vmatprep.subr.mxu0 %v477
    %1099 = vmatpush1.msra.mxu0 %v476
    %1100 = vmatprep.subr.mxu0 %v473
    %1101 = vmatpush1.msra.mxu0 %v472
    %1102 = vmatprep.subr.mxu0 %v469
    %1103 = vmatpush1.msra.mxu0 %v468
    %1104 = vmatprep.subr.mxu0 %v465
    %1105 = vmatpush1.msra.mxu0 %v464
    %1106 = vmatprep.subr.mxu0 %v461
    %1107 = vmatpush1.msra.mxu0 %v460
    %1108 = vmatprep.subr.mxu0 %v457
    %1109 = vmatpush1.msra.mxu0 %v456
    %1110 = vmatprep.subr.mxu0 %v453
    %1111 = vmatpush1.msra.mxu0 %v452
    %1112 = vmatprep.subr.mxu0 0.0
    %1113 = vmatpush2.msra.mxu0 0.0
    %1114 = vmatprep.subr.mxu0 0.0
    %1115 = vmatpush2.msra.mxu0 0.0
    %1116 = vmatprep.subr.mxu0 0.0
    %1117 = vmatpush2.msra.mxu0 0.0
    %1118 = vmatprep.subr.mxu0 0.0
    %1119 = vmatpush2.msra.mxu0 0.0
    %1120 = vmatprep.subr.mxu0 0.0
    %1121 = vmatpush2.msra.mxu0 0.0
    %1122 = vmatprep.subr.mxu0 0.0
    %1123 = vmatpush2.msra.mxu0 0.0
    %1124 = vmatprep.subr.mxu0 0.0
    %1125 = vmatpush2.msra.mxu0 0.0
    %1126 = vmatprep.subr.mxu0 0.0
    %1127 = vmatpush2.msra.mxu0 0.0
    %1128 = vmatprep.subr.mxu0 0.0
    %1129 = vmatpush2.msra.mxu0 0.0
    %1130 = vmatprep.subr.mxu0 0.0
    %1131 = vmatpush2.msra.mxu0 0.0
    %1132 = vmatprep.subr.mxu0 0.0
    %1133 = vmatpush2.msra.mxu0 0.0
    %1134 = vmatprep.subr.mxu0 0.0
    %1135 = vmatpush2.msra.mxu0 0.0
    %1136 = vmatprep.subr.mxu0 0.0
    %1137 = vmatpush2.msra.mxu0 0.0
    %1138 = vmatprep.subr.mxu0 0.0
    %1139 = vmatpush2.msra.mxu0 0.0
    %1140 = vmatprep.subr.mxu0 0.0
    %1141 = vmatpush2.msra.mxu0 0.0
    %1142 = vmatprep.subr.mxu0 0.0
    %1143 = vmatpush2.msra.mxu0 0.0
    %1144 = vmatprep.mubr.f32.mxu0 0.0
    %1145 = vmatmul.mubr.f32.gmra.mxu0 %v816
    %v1146 = vpop.f32.mrf.mxu0
    %v1147 = vadd.f32 0.0, %v1146
    %v1148 = vpop.f32.mrf.mxu0
    %v1149 = vadd.f32 0.0, %v1148
    %1150 = vdwg.mxu0
    %v1151 = vadd.f32 %v1005, %v1076
    %v1152 = vadd.f32 %v1006, %v1078
    %v1153 = vadd.f32 %v1007, %v1147
    %v1154 = vadd.f32 %v1008, %v1149
    %v1155 = vxor.u32 %v1151, 2147483648
    %v1156 = vmul.f32 %v1155, 1.442695
    %v1157 = vpow.pop %v1156
    %v1158 = vadd.f32 %v1157, 1.0
    %v1159 = vrcp.pop %v1158
    %v1160 = vmul.f32 1.0, %v1159
    %v1161 = vxor.u32 %v1152, 2147483648
    %v1162 = vmul.f32 %v1161, 1.442695
    %v1163 = vpow.pop %v1162
    %v1164 = vadd.f32 %v1163, 1.0
    %v1165 = vrcp.pop %v1164
    %v1166 = vmul.f32 1.0, %v1165
    %v1167 = vtanh.pop %v1153
    %v1168 = vxor.u32 %v1154, 2147483648
    %v1169 = vmul.f32 %v1168, 1.442695
    %v1170 = vpow.pop %v1169
    %v1171 = vadd.f32 %v1170, 1.0
    %v1172 = vrcp.pop %v1171
    %v1173 = vmul.f32 1.0, %v1172
    %v1174 = vmul.f32 %v1166, %v814
    %v1175 = vmul.f32 %v1160, %v1167
    %v1176 = vadd.f32 %v1174, %v1175
    %v1177 = vtanh.pop %v1176
    %v1178 = vmul.f32 %v1173, %v1177
    %1179 = vmatprep.subr.mxu0 %v575
    %1180 = vmatpush1.msra.mxu0 %v574
    %1181 = vmatprep.subr.mxu0 %v571
    %1182 = vmatpush1.msra.mxu0 %v570
    %1183 = vmatprep.subr.mxu0 %v567
    %1184 = vmatpush1.msra.mxu0 %v566
    %1185 = vmatprep.subr.mxu0 %v563
    %1186 = vmatpush1.msra.mxu0 %v562
    %1187 = vmatprep.subr.mxu0 %v559
    %1188 = vmatpush1.msra.mxu0 %v558
    %1189 = vmatprep.subr.mxu0 %v555
    %1190 = vmatpush1.msra.mxu0 %v554
    %1191 = vmatprep.subr.mxu0 %v551
    %1192 = vmatpush1.msra.mxu0 %v550
    %1193 = vmatprep.subr.mxu0 %v547
    %1194 = vmatpush1.msra.mxu0 %v546
    %1195 = vmatprep.subr.mxu0 %v543
    %1196 = vmatpush1.msra.mxu0 %v542
    %1197 = vmatprep.subr.mxu0 %v539
    %1198 = vmatpush1.msra.mxu0 %v538
    %1199 = vmatprep.subr.mxu0 %v535
    %1200 = vmatpush1.msra.mxu0 %v534
    %1201 = vmatprep.subr.mxu0 %v531
    %1202 = vmatpush1.msra.mxu0 %v530
    %1203 = vmatprep.subr.mxu0 %v527
    %1204 = vmatpush1.msra.mxu0 %v526
    %1205 = vmatprep.subr.mxu0 %v523
    %1206 = vmatpush1.msra.mxu0 %v522
    %1207 = vmatprep.subr.mxu0 %v519
    %1208 = vmatpush1.msra.mxu0 %v518
    %1209 = vmatprep.subr.mxu0 %v515
    %1210 = vmatpush1.msra.mxu0 %v514
    %1211 = vmatprep.subr.mxu0 %v639
    %1212 = vmatpush2.msra.mxu0 %v638
    %1213 = vmatprep.subr.mxu0 %v635
    %1214 = vmatpush2.msra.mxu0 %v634
    %1215 = vmatprep.subr.mxu0 %v631
    %1216 = vmatpush2.msra.mxu0 %v630
    %1217 = vmatprep.subr.mxu0 %v627
    %1218 = vmatpush2.msra.mxu0 %v626
    %1219 = vmatprep.subr.mxu0 %v623
    %1220 = vmatpush2.msra.mxu0 %v622
    %1221 = vmatprep.subr.mxu0 %v619
    %1222 = vmatpush2.msra.mxu0 %v618
    %1223 = vmatprep.subr.mxu0 %v615
    %1224 = vmatpush2.msra.mxu0 %v614
    %1225 = vmatprep.subr.mxu0 %v611
    %1226 = vmatpush2.msra.mxu0 %v610
    %1227 = vmatprep.subr.mxu0 %v607
    %1228 = vmatpush2.msra.mxu0 %v606
    %1229 = vmatprep.subr.mxu0 %v603
    %1230 = vmatpush2.msra.mxu0 %v602
    %1231 = vmatprep.subr.mxu0 %v599
    %1232 = vmatpush2.msra.mxu0 %v598
    %1233 = vmatprep.subr.mxu0 %v595
    %1234 = vmatpush2.msra.mxu0 %v594
    %1235 = vmatprep.subr.mxu0 %v591
    %1236 = vmatpush2.msra.mxu0 %v590
    %1237 = vmatprep.subr.mxu0 %v587
    %1238 = vmatpush2.msra.mxu0 %v586
    %1239 = vmatprep.subr.mxu0 %v583
    %1240 = vmatpush2.msra.mxu0 %v582
    %1241 = vmatprep.subr.mxu0 %v579
    %1242 = vmatpush2.msra.mxu0 %v578
    %1243 = vmatprep.mubr.f32.mxu0 %v1003
    %1244 = vmatmul.mubr.f32.gmra.mxu0 %v1178
    %v1245 = vpop.f32.mrf.mxu0
    %v1246 = vadd.f32 %v821, %v1245
    %v1247 = vpop.f32.mrf.mxu0
    %v1248 = vadd.f32 %v825, %v1247
    %1249 = vdwg.mxu0
    %1250 = vmatprep.subr.mxu0 %v577
    %1251 = vmatpush1.msra.mxu0 %v576
    %1252 = vmatprep.subr.mxu0 %v573
    %1253 = vmatpush1.msra.mxu0 %v572
    %1254 = vmatprep.subr.mxu0 %v569
    %1255 = vmatpush1.msra.mxu0 %v568
    %1256 = vmatprep.subr.mxu0 %v565
    %1257 = vmatpush1.msra.mxu0 %v564
    %1258 = vmatprep.subr.mxu0 %v561
    %1259 = vmatpush1.msra.mxu0 %v560
    %1260 = vmatprep.subr.mxu0 %v557
    %1261 = vmatpush1.msra.mxu0 %v556
    %1262 = vmatprep.subr.mxu0 %v553
    %1263 = vmatpush1.msra.mxu0 %v552
    %1264 = vmatprep.subr.mxu0 %v549
    %1265 = vmatpush1.msra.mxu0 %v548
    %1266 = vmatprep.subr.mxu0 %v545
    %1267 = vmatpush1.msra.mxu0 %v544
    %1268 = vmatprep.subr.mxu0 %v541
    %1269 = vmatpush1.msra.mxu0 %v540
    %1270 = vmatprep.subr.mxu0 %v537
    %1271 = vmatpush1.msra.mxu0 %v536
    %1272 = vmatprep.subr.mxu0 %v533
    %1273 = vmatpush1.msra.mxu0 %v532
    %1274 = vmatprep.subr.mxu0 %v529
    %1275 = vmatpush1.msra.mxu0 %v528
    %1276 = vmatprep.subr.mxu0 %v525
    %1277 = vmatpush1.msra.mxu0 %v524
    %1278 = vmatprep.subr.mxu0 %v521
    %1279 = vmatpush1.msra.mxu0 %v520
    %1280 = vmatprep.subr.mxu0 %v517
    %1281 = vmatpush1.msra.mxu0 %v516
    %1282 = vmatprep.subr.mxu0 %v641
    %1283 = vmatpush2.msra.mxu0 %v640
    %1284 = vmatprep.subr.mxu0 %v637
    %1285 = vmatpush2.msra.mxu0 %v636
    %1286 = vmatprep.subr.mxu0 %v633
    %1287 = vmatpush2.msra.mxu0 %v632
    %1288 = vmatprep.subr.mxu0 %v629
    %1289 = vmatpush2.msra.mxu0 %v628
    %1290 = vmatprep.subr.mxu0 %v625
    %1291 = vmatpush2.msra.mxu0 %v624
    %1292 = vmatprep.subr.mxu0 %v621
    %1293 = vmatpush2.msra.mxu0 %v620
    %1294 = vmatprep.subr.mxu0 %v617
    %1295 = vmatpush2.msra.mxu0 %v616
    %1296 = vmatprep.subr.mxu0 %v613
    %1297 = vmatpush2.msra.mxu0 %v612
    %1298 = vmatprep.subr.mxu0 %v609
    %1299 = vmatpush2.msra.mxu0 %v608
    %1300 = vmatprep.subr.mxu0 %v605
    %1301 = vmatpush2.msra.mxu0 %v604
    %1302 = vmatprep.subr.mxu0 %v601
    %1303 = vmatpush2.msra.mxu0 %v600
    %1304 = vmatprep.subr.mxu0 %v597
    %1305 = vmatpush2.msra.mxu0 %v596
    %1306 = vmatprep.subr.mxu0 %v593
    %1307 = vmatpush2.msra.mxu0 %v592
    %1308 = vmatprep.subr.mxu0 %v589
    %1309 = vmatpush2.msra.mxu0 %v588
    %1310 = vmatprep.subr.mxu0 %v585
    %1311 = vmatpush2.msra.mxu0 %v584
    %1312 = vmatprep.subr.mxu0 %v581
    %1313 = vmatpush2.msra.mxu0 %v580
    %1314 = vmatprep.mubr.f32.mxu0 %v1003
    %1315 = vmatmul.mubr.f32.gmra.mxu0 %v1178
    %v1316 = vpop.f32.mrf.mxu0
    %v1317 = vadd.f32 %v829, %v1316
    %v1318 = vpop.f32.mrf.mxu0
    %v1319 = vadd.f32 %v833, %v1318
    %1320 = vdwg.mxu0
    %v1321 = vxor.u32 %v1246, 2147483648
    %v1322 = vmul.f32 %v1321, 1.442695
    %v1323 = vpow.pop %v1322
    %v1324 = vadd.f32 %v1323, 1.0
    %v1325 = vrcp.pop %v1324
    %v1326 = vmul.f32 1.0, %v1325
    %v1327 = vxor.u32 %v1248, 2147483648
    %v1328 = vmul.f32 %v1327, 1.442695
    %v1329 = vpow.pop %v1328
    %v1330 = vadd.f32 %v1329, 1.0
    %v1331 = vrcp.pop %v1330
    %v1332 = vmul.f32 1.0, %v1331
    %v1333 = vtanh.pop %v1317
    %v1334 = vxor.u32 %v1319, 2147483648
    %v1335 = vmul.f32 %v1334, 1.442695
    %v1336 = vpow.pop %v1335
    %v1337 = vadd.f32 %v1336, 1.0
    %v1338 = vrcp.pop %v1337
    %v1339 = vmul.f32 1.0, %v1338
    %v1340 = vmul.f32 %v1332, %v1001
    %v1341 = vmul.f32 %v1326, %v1333
    %v1342 = vadd.f32 %v1340, %v1341
    %v1343 = vtanh.pop %v1342
    %v1344 = vmul.f32 %v1339, %v1343
    %s1345 = scalar_lea.vmem [#allocation2], 64
    %v1346 = vld [vmem:[%s1345] sm:$0xff]
    %v1347 = vld [vmem:[%s1345 + $0x8] sm:$0xff]
    %v1348 = vld [vmem:[%s1345 + $0x10] sm:$0xff]
    %v1349 = vld [vmem:[%s1345 + $0x18] sm:$0xff]
    %1350 = vmatprep.subr.mxu0 %v511
    %1351 = vmatpush1.msra.mxu0 %v510
    %1352 = vmatprep.subr.mxu0 %v507
    %1353 = vmatpush1.msra.mxu0 %v506
    %1354 = vmatprep.subr.mxu0 %v503
    %1355 = vmatpush1.msra.mxu0 %v502
    %1356 = vmatprep.subr.mxu0 %v499
    %1357 = vmatpush1.msra.mxu0 %v498
    %1358 = vmatprep.subr.mxu0 %v495
    %1359 = vmatpush1.msra.mxu0 %v494
    %1360 = vmatprep.subr.mxu0 %v491
    %1361 = vmatpush1.msra.mxu0 %v490
    %1362 = vmatprep.subr.mxu0 %v487
    %1363 = vmatpush1.msra.mxu0 %v486
    %1364 = vmatprep.subr.mxu0 %v483
    %1365 = vmatpush1.msra.mxu0 %v482
    %1366 = vmatprep.subr.mxu0 %v479
    %1367 = vmatpush1.msra.mxu0 %v478
    %1368 = vmatprep.subr.mxu0 %v475
    %1369 = vmatpush1.msra.mxu0 %v474
    %1370 = vmatprep.subr.mxu0 %v471
    %1371 = vmatpush1.msra.mxu0 %v470
    %1372 = vmatprep.subr.mxu0 %v467
    %1373 = vmatpush1.msra.mxu0 %v466
    %1374 = vmatprep.subr.mxu0 %v463
    %1375 = vmatpush1.msra.mxu0 %v462
    %1376 = vmatprep.subr.mxu0 %v459
    %1377 = vmatpush1.msra.mxu0 %v458
    %1378 = vmatprep.subr.mxu0 %v455
    %1379 = vmatpush1.msra.mxu0 %v454
    %1380 = vmatprep.subr.mxu0 %v451
    %1381 = vmatpush1.msra.mxu0 %v450
    %1382 = vmatprep.subr.mxu0 0.0
    %1383 = vmatpush2.msra.mxu0 0.0
    %1384 = vmatprep.subr.mxu0 0.0
    %1385 = vmatpush2.msra.mxu0 0.0
    %1386 = vmatprep.subr.mxu0 0.0
    %1387 = vmatpush2.msra.mxu0 0.0
    %1388 = vmatprep.subr.mxu0 0.0
    %1389 = vmatpush2.msra.mxu0 0.0
    %1390 = vmatprep.subr.mxu0 0.0
    %1391 = vmatpush2.msra.mxu0 0.0
    %1392 = vmatprep.subr.mxu0 0.0
    %1393 = vmatpush2.msra.mxu0 0.0
    %1394 = vmatprep.subr.mxu0 0.0
    %1395 = vmatpush2.msra.mxu0 0.0
    %1396 = vmatprep.subr.mxu0 0.0
    %1397 = vmatpush2.msra.mxu0 0.0
    %1398 = vmatprep.subr.mxu0 0.0
    %1399 = vmatpush2.msra.mxu0 0.0
    %1400 = vmatprep.subr.mxu0 0.0
    %1401 = vmatpush2.msra.mxu0 0.0
    %1402 = vmatprep.subr.mxu0 0.0
    %1403 = vmatpush2.msra.mxu0 0.0
    %1404 = vmatprep.subr.mxu0 0.0
    %1405 = vmatpush2.msra.mxu0 0.0
    %1406 = vmatprep.subr.mxu0 0.0
    %1407 = vmatpush2.msra.mxu0 0.0
    %1408 = vmatprep.subr.mxu0 0.0
    %1409 = vmatpush2.msra.mxu0 0.0
    %1410 = vmatprep.subr.mxu0 0.0
    %1411 = vmatpush2.msra.mxu0 0.0
    %1412 = vmatprep.subr.mxu0 0.0
    %1413 = vmatpush2.msra.mxu0 0.0
    %1414 = vmatprep.mubr.f32.mxu0 0.0
    %1415 = vmatmul.mubr.f32.gmra.mxu0 %v1178
    %v1416 = vpop.f32.mrf.mxu0
    %v1417 = vadd.f32 0.0, %v1416
    %v1418 = vpop.f32.mrf.mxu0
    %v1419 = vadd.f32 0.0, %v1418
    %1420 = vdwg.mxu0
    %1421 = vmatprep.subr.mxu0 %v513
    %1422 = vmatpush1.msra.mxu0 %v512
    %1423 = vmatprep.subr.mxu0 %v509
    %1424 = vmatpush1.msra.mxu0 %v508
    %1425 = vmatprep.subr.mxu0 %v505
    %1426 = vmatpush1.msra.mxu0 %v504
    %1427 = vmatprep.subr.mxu0 %v501
    %1428 = vmatpush1.msra.mxu0 %v500
    %1429 = vmatprep.subr.mxu0 %v497
    %1430 = vmatpush1.msra.mxu0 %v496
    %1431 = vmatprep.subr.mxu0 %v493
    %1432 = vmatpush1.msra.mxu0 %v492
    %1433 = vmatprep.subr.mxu0 %v489
    %1434 = vmatpush1.msra.mxu0 %v488
    %1435 = vmatprep.subr.mxu0 %v485
    %1436 = vmatpush1.msra.mxu0 %v484
    %1437 = vmatprep.subr.mxu0 %v481
    %1438 = vmatpush1.msra.mxu0 %v480
    %1439 = vmatprep.subr.mxu0 %v477
    %1440 = vmatpush1.msra.mxu0 %v476
    %1441 = vmatprep.subr.mxu0 %v473
    %1442 = vmatpush1.msra.mxu0 %v472
    %1443 = vmatprep.subr.mxu0 %v469
    %1444 = vmatpush1.msra.mxu0 %v468
    %1445 = vmatprep.subr.mxu0 %v465
    %1446 = vmatpush1.msra.mxu0 %v464
    %1447 = vmatprep.subr.mxu0 %v461
    %1448 = vmatpush1.msra.mxu0 %v460
    %1449 = vmatprep.subr.mxu0 %v457
    %1450 = vmatpush1.msra.mxu0 %v456
    %1451 = vmatprep.subr.mxu0 %v453
    %1452 = vmatpush1.msra.mxu0 %v452
    %1453 = vmatprep.subr.mxu0 0.0
    %1454 = vmatpush2.msra.mxu0 0.0
    %1455 = vmatprep.subr.mxu0 0.0
    %1456 = vmatpush2.msra.mxu0 0.0
    %1457 = vmatprep.subr.mxu0 0.0
    %1458 = vmatpush2.msra.mxu0 0.0
    %1459 = vmatprep.subr.mxu0 0.0
    %1460 = vmatpush2.msra.mxu0 0.0
    %1461 = vmatprep.subr.mxu0 0.0
    %1462 = vmatpush2.msra.mxu0 0.0
    %1463 = vmatprep.subr.mxu0 0.0
    %1464 = vmatpush2.msra.mxu0 0.0
    %1465 = vmatprep.subr.mxu0 0.0
    %1466 = vmatpush2.msra.mxu0 0.0
    %1467 = vmatprep.subr.mxu0 0.0
    %1468 = vmatpush2.msra.mxu0 0.0
    %1469 = vmatprep.subr.mxu0 0.0
    %1470 = vmatpush2.msra.mxu0 0.0
    %1471 = vmatprep.subr.mxu0 0.0
    %1472 = vmatpush2.msra.mxu0 0.0
    %1473 = vmatprep.subr.mxu0 0.0
    %1474 = vmatpush2.msra.mxu0 0.0
    %1475 = vmatprep.subr.mxu0 0.0
    %1476 = vmatpush2.msra.mxu0 0.0
    %1477 = vmatprep.subr.mxu0 0.0
    %1478 = vmatpush2.msra.mxu0 0.0
    %1479 = vmatprep.subr.mxu0 0.0
    %1480 = vmatpush2.msra.mxu0 0.0
    %1481 = vmatprep.subr.mxu0 0.0
    %1482 = vmatpush2.msra.mxu0 0.0
    %1483 = vmatprep.subr.mxu0 0.0
    %1484 = vmatpush2.msra.mxu0 0.0
    %1485 = vmatprep.mubr.f32.mxu0 0.0
    %1486 = vmatmul.mubr.f32.gmra.mxu0 %v1178
    %v1487 = vpop.f32.mrf.mxu0
    %v1488 = vadd.f32 0.0, %v1487
    %v1489 = vpop.f32.mrf.mxu0
    %v1490 = vadd.f32 0.0, %v1489
    %1491 = vdwg.mxu0
    %v1492 = vadd.f32 %v1346, %v1417
    %v1493 = vadd.f32 %v1347, %v1419
    %v1494 = vadd.f32 %v1348, %v1488
    %v1495 = vadd.f32 %v1349, %v1490
    %v1496 = vxor.u32 %v1492, 2147483648
    %v1497 = vmul.f32 %v1496, 1.442695
    %v1498 = vpow.pop %v1497
    %v1499 = vadd.f32 %v1498, 1.0
    %v1500 = vrcp.pop %v1499
    %v1501 = vmul.f32 1.0, %v1500
    %v1502 = vxor.u32 %v1493, 2147483648
    %v1503 = vmul.f32 %v1502, 1.442695
    %v1504 = vpow.pop %v1503
    %v1505 = vadd.f32 %v1504, 1.0
    %v1506 = vrcp.pop %v1505
    %v1507 = vmul.f32 1.0, %v1506
    %v1508 = vtanh.pop %v1494
    %v1509 = vxor.u32 %v1495, 2147483648
    %v1510 = vmul.f32 %v1509, 1.442695
    %v1511 = vpow.pop %v1510
    %v1512 = vadd.f32 %v1511, 1.0
    %v1513 = vrcp.pop %v1512
    %v1514 = vmul.f32 1.0, %v1513
    %v1515 = vmul.f32 %v1507, %v1176
    %v1516 = vmul.f32 %v1501, %v1508
    %v1517 = vadd.f32 %v1515, %v1516
    %v1518 = vtanh.pop %v1517
    %v1519 = vmul.f32 %v1514, %v1518
    %1520 = vmatprep.subr.mxu0 %v575
    %1521 = vmatpush1.msra.mxu0 %v574
    %1522 = vmatprep.subr.mxu0 %v571
    %1523 = vmatpush1.msra.mxu0 %v570
    %1524 = vmatprep.subr.mxu0 %v567
    %1525 = vmatpush1.msra.mxu0 %v566
    %1526 = vmatprep.subr.mxu0 %v563
    %1527 = vmatpush1.msra.mxu0 %v562
    %1528 = vmatprep.subr.mxu0 %v559
    %1529 = vmatpush1.msra.mxu0 %v558
    %1530 = vmatprep.subr.mxu0 %v555
    %1531 = vmatpush1.msra.mxu0 %v554
    %1532 = vmatprep.subr.mxu0 %v551
    %1533 = vmatpush1.msra.mxu0 %v550
    %1534 = vmatprep.subr.mxu0 %v547
    %1535 = vmatpush1.msra.mxu0 %v546
    %1536 = vmatprep.subr.mxu0 %v543
    %1537 = vmatpush1.msra.mxu0 %v542
    %1538 = vmatprep.subr.mxu0 %v539
    %1539 = vmatpush1.msra.mxu0 %v538
    %1540 = vmatprep.subr.mxu0 %v535
    %1541 = vmatpush1.msra.mxu0 %v534
    %1542 = vmatprep.subr.mxu0 %v531
    %1543 = vmatpush1.msra.mxu0 %v530
    %1544 = vmatprep.subr.mxu0 %v527
    %1545 = vmatpush1.msra.mxu0 %v526
    %1546 = vmatprep.subr.mxu0 %v523
    %1547 = vmatpush1.msra.mxu0 %v522
    %1548 = vmatprep.subr.mxu0 %v519
    %1549 = vmatpush1.msra.mxu0 %v518
    %1550 = vmatprep.subr.mxu0 %v515
    %1551 = vmatpush1.msra.mxu0 %v514
    %1552 = vmatprep.subr.mxu0 %v639
    %1553 = vmatpush2.msra.mxu0 %v638
    %1554 = vmatprep.subr.mxu0 %v635
    %1555 = vmatpush2.msra.mxu0 %v634
    %1556 = vmatprep.subr.mxu0 %v631
    %1557 = vmatpush2.msra.mxu0 %v630
    %1558 = vmatprep.subr.mxu0 %v627
    %1559 = vmatpush2.msra.mxu0 %v626
    %1560 = vmatprep.subr.mxu0 %v623
    %1561 = vmatpush2.msra.mxu0 %v622
    %1562 = vmatprep.subr.mxu0 %v619
    %1563 = vmatpush2.msra.mxu0 %v618
    %1564 = vmatprep.subr.mxu0 %v615
    %1565 = vmatpush2.msra.mxu0 %v614
    %1566 = vmatprep.subr.mxu0 %v611
    %1567 = vmatpush2.msra.mxu0 %v610
    %1568 = vmatprep.subr.mxu0 %v607
    %1569 = vmatpush2.msra.mxu0 %v606
    %1570 = vmatprep.subr.mxu0 %v603
    %1571 = vmatpush2.msra.mxu0 %v602
    %1572 = vmatprep.subr.mxu0 %v599
    %1573 = vmatpush2.msra.mxu0 %v598
    %1574 = vmatprep.subr.mxu0 %v595
    %1575 = vmatpush2.msra.mxu0 %v594
    %1576 = vmatprep.subr.mxu0 %v591
    %1577 = vmatpush2.msra.mxu0 %v590
    %1578 = vmatprep.subr.mxu0 %v587
    %1579 = vmatpush2.msra.mxu0 %v586
    %1580 = vmatprep.subr.mxu0 %v583
    %1581 = vmatpush2.msra.mxu0 %v582
    %1582 = vmatprep.subr.mxu0 %v579
    %1583 = vmatpush2.msra.mxu0 %v578
    %1584 = vmatprep.mubr.f32.mxu0 %v1344
    %1585 = vmatmul.mubr.f32.gmra.mxu0 %v1519
    %v1586 = vpop.f32.mrf.mxu0
    %v1587 = vadd.f32 %v821, %v1586
    %v1588 = vpop.f32.mrf.mxu0
    %v1589 = vadd.f32 %v825, %v1588
    %1590 = vdwg.mxu0
    %1591 = vmatprep.subr.mxu0 %v577
    %1592 = vmatpush1.msra.mxu0 %v576
    %1593 = vmatprep.subr.mxu0 %v573
    %1594 = vmatpush1.msra.mxu0 %v572
    %1595 = vmatprep.subr.mxu0 %v569
    %1596 = vmatpush1.msra.mxu0 %v568
    %1597 = vmatprep.subr.mxu0 %v565
    %1598 = vmatpush1.msra.mxu0 %v564
    %1599 = vmatprep.subr.mxu0 %v561
    %1600 = vmatpush1.msra.mxu0 %v560
    %1601 = vmatprep.subr.mxu0 %v557
    %1602 = vmatpush1.msra.mxu0 %v556
    %1603 = vmatprep.subr.mxu0 %v553
    %1604 = vmatpush1.msra.mxu0 %v552
    %1605 = vmatprep.subr.mxu0 %v549
    %1606 = vmatpush1.msra.mxu0 %v548
    %1607 = vmatprep.subr.mxu0 %v545
    %1608 = vmatpush1.msra.mxu0 %v544
    %1609 = vmatprep.subr.mxu0 %v541
    %1610 = vmatpush1.msra.mxu0 %v540
    %1611 = vmatprep.subr.mxu0 %v537
    %1612 = vmatpush1.msra.mxu0 %v536
    %1613 = vmatprep.subr.mxu0 %v533
    %1614 = vmatpush1.msra.mxu0 %v532
    %1615 = vmatprep.subr.mxu0 %v529
    %1616 = vmatpush1.msra.mxu0 %v528
    %1617 = vmatprep.subr.mxu0 %v525
    %1618 = vmatpush1.msra.mxu0 %v524
    %1619 = vmatprep.subr.mxu0 %v521
    %1620 = vmatpush1.msra.mxu0 %v520
    %1621 = vmatprep.subr.mxu0 %v517
    %1622 = vmatpush1.msra.mxu0 %v516
    %1623 = vmatprep.subr.mxu0 %v641
    %1624 = vmatpush2.msra.mxu0 %v640
    %1625 = vmatprep.subr.mxu0 %v637
    %1626 = vmatpush2.msra.mxu0 %v636
    %1627 = vmatprep.subr.mxu0 %v633
    %1628 = vmatpush2.msra.mxu0 %v632
    %1629 = vmatprep.subr.mxu0 %v629
    %1630 = vmatpush2.msra.mxu0 %v628
    %1631 = vmatprep.subr.mxu0 %v625
    %1632 = vmatpush2.msra.mxu0 %v624
    %1633 = vmatprep.subr.mxu0 %v621
    %1634 = vmatpush2.msra.mxu0 %v620
    %1635 = vmatprep.subr.mxu0 %v617
    %1636 = vmatpush2.msra.mxu0 %v616
    %1637 = vmatprep.subr.mxu0 %v613
    %1638 = vmatpush2.msra.mxu0 %v612
    %1639 = vmatprep.subr.mxu0 %v609
    %1640 = vmatpush2.msra.mxu0 %v608
    %1641 = vmatprep.subr.mxu0 %v605
    %1642 = vmatpush2.msra.mxu0 %v604
    %1643 = vmatprep.subr.mxu0 %v601
    %1644 = vmatpush2.msra.mxu0 %v600
    %1645 = vmatprep.subr.mxu0 %v597
    %1646 = vmatpush2.msra.mxu0 %v596
    %1647 = vmatprep.subr.mxu0 %v593
    %1648 = vmatpush2.msra.mxu0 %v592
    %1649 = vmatprep.subr.mxu0 %v589
    %1650 = vmatpush2.msra.mxu0 %v588
    %1651 = vmatprep.subr.mxu0 %v585
    %1652 = vmatpush2.msra.mxu0 %v584
    %1653 = vmatprep.subr.mxu0 %v581
    %1654 = vmatpush2.msra.mxu0 %v580
    %1655 = vmatprep.mubr.f32.mxu0 %v1344
    %1656 = vmatmul.mubr.f32.gmra.mxu0 %v1519
    %v1657 = vpop.f32.mrf.mxu0
    %v1658 = vadd.f32 %v829, %v1657
    %v1659 = vpop.f32.mrf.mxu0
    %v1660 = vadd.f32 %v833, %v1659
    %1661 = vdwg.mxu0
    %v1662 = vxor.u32 %v1587, 2147483648
    %v1663 = vmul.f32 %v1662, 1.442695
    %v1664 = vpow.pop %v1663
    %v1665 = vadd.f32 %v1664, 1.0
    %v1666 = vrcp.pop %v1665
    %v1667 = vmul.f32 1.0, %v1666
    %v1668 = vxor.u32 %v1589, 2147483648
    %v1669 = vmul.f32 %v1668, 1.442695
    %v1670 = vpow.pop %v1669
    %v1671 = vadd.f32 %v1670, 1.0
    %v1672 = vrcp.pop %v1671
    %v1673 = vmul.f32 1.0, %v1672
    %v1674 = vtanh.pop %v1658
    %v1675 = vxor.u32 %v1660, 2147483648
    %v1676 = vmul.f32 %v1675, 1.442695
    %v1677 = vpow.pop %v1676
    %v1678 = vadd.f32 %v1677, 1.0
    %v1679 = vrcp.pop %v1678
    %v1680 = vmul.f32 1.0, %v1679
    %v1681 = vmul.f32 %v1673, %v1342
    %v1682 = vmul.f32 %v1667, %v1674
    %v1683 = vadd.f32 %v1681, %v1682
    %v1684 = vtanh.pop %v1683
    %v1685 = vmul.f32 %v1680, %v1684
    %s1686 = scalar_lea.vmem [#allocation2], 96
    %v1687 = vld [vmem:[%s1686] sm:$0xff]
    %v1688 = vld [vmem:[%s1686 + $0x8] sm:$0xff]
    %v1689 = vld [vmem:[%s1686 + $0x10] sm:$0xff]
    %v1690 = vld [vmem:[%s1686 + $0x18] sm:$0xff]
    %1691 = vmatprep.subr.mxu0 %v511
    %1692 = vmatpush1.msra.mxu0 %v510
    %1693 = vmatprep.subr.mxu0 %v507
    %1694 = vmatpush1.msra.mxu0 %v506
    %1695 = vmatprep.subr.mxu0 %v503
    %1696 = vmatpush1.msra.mxu0 %v502
    %1697 = vmatprep.subr.mxu0 %v499
    %1698 = vmatpush1.msra.mxu0 %v498
    %1699 = vmatprep.subr.mxu0 %v495
    %1700 = vmatpush1.msra.mxu0 %v494
    %1701 = vmatprep.subr.mxu0 %v491
    %1702 = vmatpush1.msra.mxu0 %v490
    %1703 = vmatprep.subr.mxu0 %v487
    %1704 = vmatpush1.msra.mxu0 %v486
    %1705 = vmatprep.subr.mxu0 %v483
    %1706 = vmatpush1.msra.mxu0 %v482
    %1707 = vmatprep.subr.mxu0 %v479
    %1708 = vmatpush1.msra.mxu0 %v478
    %1709 = vmatprep.subr.mxu0 %v475
    %1710 = vmatpush1.msra.mxu0 %v474
    %1711 = vmatprep.subr.mxu0 %v471
    %1712 = vmatpush1.msra.mxu0 %v470
    %1713 = vmatprep.subr.mxu0 %v467
    %1714 = vmatpush1.msra.mxu0 %v466
    %1715 = vmatprep.subr.mxu0 %v463
    %1716 = vmatpush1.msra.mxu0 %v462
    %1717 = vmatprep.subr.mxu0 %v459
    %1718 = vmatpush1.msra.mxu0 %v458
    %1719 = vmatprep.subr.mxu0 %v455
    %1720 = vmatpush1.msra.mxu0 %v454
    %1721 = vmatprep.subr.mxu0 %v451
    %1722 = vmatpush1.msra.mxu0 %v450
    %1723 = vmatprep.subr.mxu0 0.0
    %1724 = vmatpush2.msra.mxu0 0.0
    %1725 = vmatprep.subr.mxu0 0.0
    %1726 = vmatpush2.msra.mxu0 0.0
    %1727 = vmatprep.subr.mxu0 0.0
    %1728 = vmatpush2.msra.mxu0 0.0
    %1729 = vmatprep.subr.mxu0 0.0
    %1730 = vmatpush2.msra.mxu0 0.0
    %1731 = vmatprep.subr.mxu0 0.0
    %1732 = vmatpush2.msra.mxu0 0.0
    %1733 = vmatprep.subr.mxu0 0.0
    %1734 = vmatpush2.msra.mxu0 0.0
    %1735 = vmatprep.subr.mxu0 0.0
    %1736 = vmatpush2.msra.mxu0 0.0
    %1737 = vmatprep.subr.mxu0 0.0
    %1738 = vmatpush2.msra.mxu0 0.0
    %1739 = vmatprep.subr.mxu0 0.0
    %1740 = vmatpush2.msra.mxu0 0.0
    %1741 = vmatprep.subr.mxu0 0.0
    %1742 = vmatpush2.msra.mxu0 0.0
    %1743 = vmatprep.subr.mxu0 0.0
    %1744 = vmatpush2.msra.mxu0 0.0
    %1745 = vmatprep.subr.mxu0 0.0
    %1746 = vmatpush2.msra.mxu0 0.0
    %1747 = vmatprep.subr.mxu0 0.0
    %1748 = vmatpush2.msra.mxu0 0.0
    %1749 = vmatprep.subr.mxu0 0.0
    %1750 = vmatpush2.msra.mxu0 0.0
    %1751 = vmatprep.subr.mxu0 0.0
    %1752 = vmatpush2.msra.mxu0 0.0
    %1753 = vmatprep.subr.mxu0 0.0
    %1754 = vmatpush2.msra.mxu0 0.0
    %1755 = vmatprep.mubr.f32.mxu0 0.0
    %1756 = vmatmul.mubr.f32.gmra.mxu0 %v1519
    %v1757 = vpop.f32.mrf.mxu0
    %v1758 = vadd.f32 0.0, %v1757
    %v1759 = vpop.f32.mrf.mxu0
    %v1760 = vadd.f32 0.0, %v1759
    %1761 = vdwg.mxu0
    %1762 = vmatprep.subr.mxu0 %v513
    %1763 = vmatpush1.msra.mxu0 %v512
    %1764 = vmatprep.subr.mxu0 %v509
    %1765 = vmatpush1.msra.mxu0 %v508
    %1766 = vmatprep.subr.mxu0 %v505
    %1767 = vmatpush1.msra.mxu0 %v504
    %1768 = vmatprep.subr.mxu0 %v501
    %1769 = vmatpush1.msra.mxu0 %v500
    %1770 = vmatprep.subr.mxu0 %v497
    %1771 = vmatpush1.msra.mxu0 %v496
    %1772 = vmatprep.subr.mxu0 %v493
    %1773 = vmatpush1.msra.mxu0 %v492
    %1774 = vmatprep.subr.mxu0 %v489
    %1775 = vmatpush1.msra.mxu0 %v488
    %1776 = vmatprep.subr.mxu0 %v485
    %1777 = vmatpush1.msra.mxu0 %v484
    %1778 = vmatprep.subr.mxu0 %v481
    %1779 = vmatpush1.msra.mxu0 %v480
    %1780 = vmatprep.subr.mxu0 %v477
    %1781 = vmatpush1.msra.mxu0 %v476
    %1782 = vmatprep.subr.mxu0 %v473
    %1783 = vmatpush1.msra.mxu0 %v472
    %1784 = vmatprep.subr.mxu0 %v469
    %1785 = vmatpush1.msra.mxu0 %v468
    %1786 = vmatprep.subr.mxu0 %v465
    %1787 = vmatpush1.msra.mxu0 %v464
    %1788 = vmatprep.subr.mxu0 %v461
    %1789 = vmatpush1.msra.mxu0 %v460
    %1790 = vmatprep.subr.mxu0 %v457
    %1791 = vmatpush1.msra.mxu0 %v456
    %1792 = vmatprep.subr.mxu0 %v453
    %1793 = vmatpush1.msra.mxu0 %v452
    %1794 = vmatprep.subr.mxu0 0.0
    %1795 = vmatpush2.msra.mxu0 0.0
    %1796 = vmatprep.subr.mxu0 0.0
    %1797 = vmatpush2.msra.mxu0 0.0
    %1798 = vmatprep.subr.mxu0 0.0
    %1799 = vmatpush2.msra.mxu0 0.0
    %1800 = vmatprep.subr.mxu0 0.0
    %1801 = vmatpush2.msra.mxu0 0.0
    %1802 = vmatprep.subr.mxu0 0.0
    %1803 = vmatpush2.msra.mxu0 0.0
    %1804 = vmatprep.subr.mxu0 0.0
    %1805 = vmatpush2.msra.mxu0 0.0
    %1806 = vmatprep.subr.mxu0 0.0
    %1807 = vmatpush2.msra.mxu0 0.0
    %1808 = vmatprep.subr.mxu0 0.0
    %1809 = vmatpush2.msra.mxu0 0.0
    %1810 = vmatprep.subr.mxu0 0.0
    %1811 = vmatpush2.msra.mxu0 0.0
    %1812 = vmatprep.subr.mxu0 0.0
    %1813 = vmatpush2.msra.mxu0 0.0
    %1814 = vmatprep.subr.mxu0 0.0
    %1815 = vmatpush2.msra.mxu0 0.0
    %1816 = vmatprep.subr.mxu0 0.0
    %1817 = vmatpush2.msra.mxu0 0.0
    %1818 = vmatprep.subr.mxu0 0.0
    %1819 = vmatpush2.msra.mxu0 0.0
    %1820 = vmatprep.subr.mxu0 0.0
    %1821 = vmatpush2.msra.mxu0 0.0
    %1822 = vmatprep.subr.mxu0 0.0
    %1823 = vmatpush2.msra.mxu0 0.0
    %1824 = vmatprep.subr.mxu0 0.0
    %1825 = vmatpush2.msra.mxu0 0.0
    %1826 = vmatprep.mubr.f32.mxu0 0.0
    %1827 = vmatmul.mubr.f32.gmra.mxu0 %v1519
    %v1828 = vpop.f32.mrf.mxu0
    %v1829 = vadd.f32 0.0, %v1828
    %v1830 = vpop.f32.mrf.mxu0
    %v1831 = vadd.f32 0.0, %v1830
    %1832 = vdwg.mxu0
    %v1833 = vadd.f32 %v1687, %v1758
    %v1834 = vadd.f32 %v1688, %v1760
    %v1835 = vadd.f32 %v1689, %v1829
    %v1836 = vadd.f32 %v1690, %v1831
    %v1837 = vxor.u32 %v1833, 2147483648
    %v1838 = vmul.f32 %v1837, 1.442695
    %v1839 = vpow.pop %v1838
    %v1840 = vadd.f32 %v1839, 1.0
    %v1841 = vrcp.pop %v1840
    %v1842 = vmul.f32 1.0, %v1841
    %v1843 = vxor.u32 %v1834, 2147483648
    %v1844 = vmul.f32 %v1843, 1.442695
    %v1845 = vpow.pop %v1844
    %v1846 = vadd.f32 %v1845, 1.0
    %v1847 = vrcp.pop %v1846
    %v1848 = vmul.f32 1.0, %v1847
    %v1849 = vtanh.pop %v1835
    %v1850 = vxor.u32 %v1836, 2147483648
    %v1851 = vmul.f32 %v1850, 1.442695
    %v1852 = vpow.pop %v1851
    %v1853 = vadd.f32 %v1852, 1.0
    %v1854 = vrcp.pop %v1853
    %v1855 = vmul.f32 1.0, %v1854
    %v1856 = vmul.f32 %v1848, %v1517
    %v1857 = vmul.f32 %v1842, %v1849
    %v1858 = vadd.f32 %v1856, %v1857
    %v1859 = vtanh.pop %v1858
    %v1860 = vmul.f32 %v1855, %v1859
    %1861 = vmatprep.subr.mxu0 %v575
    %1862 = vmatpush1.msra.mxu0 %v574
    %1863 = vmatprep.subr.mxu0 %v571
    %1864 = vmatpush1.msra.mxu0 %v570
    %1865 = vmatprep.subr.mxu0 %v567
    %1866 = vmatpush1.msra.mxu0 %v566
    %1867 = vmatprep.subr.mxu0 %v563
    %1868 = vmatpush1.msra.mxu0 %v562
    %1869 = vmatprep.subr.mxu0 %v559
    %1870 = vmatpush1.msra.mxu0 %v558
    %1871 = vmatprep.subr.mxu0 %v555
    %1872 = vmatpush1.msra.mxu0 %v554
    %1873 = vmatprep.subr.mxu0 %v551
    %1874 = vmatpush1.msra.mxu0 %v550
    %1875 = vmatprep.subr.mxu0 %v547
    %1876 = vmatpush1.msra.mxu0 %v546
    %1877 = vmatprep.subr.mxu0 %v543
    %1878 = vmatpush1.msra.mxu0 %v542
    %1879 = vmatprep.subr.mxu0 %v539
    %1880 = vmatpush1.msra.mxu0 %v538
    %1881 = vmatprep.subr.mxu0 %v535
    %1882 = vmatpush1.msra.mxu0 %v534
    %1883 = vmatprep.subr.mxu0 %v531
    %1884 = vmatpush1.msra.mxu0 %v530
    %1885 = vmatprep.subr.mxu0 %v527
    %1886 = vmatpush1.msra.mxu0 %v526
    %1887 = vmatprep.subr.mxu0 %v523
    %1888 = vmatpush1.msra.mxu0 %v522
    %1889 = vmatprep.subr.mxu0 %v519
    %1890 = vmatpush1.msra.mxu0 %v518
    %1891 = vmatprep.subr.mxu0 %v515
    %1892 = vmatpush1.msra.mxu0 %v514
    %1893 = vmatprep.subr.mxu0 %v639
    %1894 = vmatpush2.msra.mxu0 %v638
    %1895 = vmatprep.subr.mxu0 %v635
    %1896 = vmatpush2.msra.mxu0 %v634
    %1897 = vmatprep.subr.mxu0 %v631
    %1898 = vmatpush2.msra.mxu0 %v630
    %1899 = vmatprep.subr.mxu0 %v627
    %1900 = vmatpush2.msra.mxu0 %v626
    %1901 = vmatprep.subr.mxu0 %v623
    %1902 = vmatpush2.msra.mxu0 %v622
    %1903 = vmatprep.subr.mxu0 %v619
    %1904 = vmatpush2.msra.mxu0 %v618
    %1905 = vmatprep.subr.mxu0 %v615
    %1906 = vmatpush2.msra.mxu0 %v614
    %1907 = vmatprep.subr.mxu0 %v611
    %1908 = vmatpush2.msra.mxu0 %v610
    %1909 = vmatprep.subr.mxu0 %v607
    %1910 = vmatpush2.msra.mxu0 %v606
    %1911 = vmatprep.subr.mxu0 %v603
    %1912 = vmatpush2.msra.mxu0 %v602
    %1913 = vmatprep.subr.mxu0 %v599
    %1914 = vmatpush2.msra.mxu0 %v598
    %1915 = vmatprep.subr.mxu0 %v595
    %1916 = vmatpush2.msra.mxu0 %v594
    %1917 = vmatprep.subr.mxu0 %v591
    %1918 = vmatpush2.msra.mxu0 %v590
    %1919 = vmatprep.subr.mxu0 %v587
    %1920 = vmatpush2.msra.mxu0 %v586
    %1921 = vmatprep.subr.mxu0 %v583
    %1922 = vmatpush2.msra.mxu0 %v582
    %1923 = vmatprep.subr.mxu0 %v579
    %1924 = vmatpush2.msra.mxu0 %v578
    %1925 = vmatprep.mubr.f32.mxu0 %v1685
    %1926 = vmatmul.mubr.f32.gmra.mxu0 %v1860
    %v1927 = vpop.f32.mrf.mxu0
    %v1928 = vadd.f32 %v821, %v1927
    %v1929 = vpop.f32.mrf.mxu0
    %v1930 = vadd.f32 %v825, %v1929
    %1931 = vdwg.mxu0
    %1932 = vmatprep.subr.mxu0 %v577
    %1933 = vmatpush1.msra.mxu0 %v576
    %1934 = vmatprep.subr.mxu0 %v573
    %1935 = vmatpush1.msra.mxu0 %v572
    %1936 = vmatprep.subr.mxu0 %v569
    %1937 = vmatpush1.msra.mxu0 %v568
    %1938 = vmatprep.subr.mxu0 %v565
    %1939 = vmatpush1.msra.mxu0 %v564
    %1940 = vmatprep.subr.mxu0 %v561
    %1941 = vmatpush1.msra.mxu0 %v560
    %1942 = vmatprep.subr.mxu0 %v557
    %1943 = vmatpush1.msra.mxu0 %v556
    %1944 = vmatprep.subr.mxu0 %v553
    %1945 = vmatpush1.msra.mxu0 %v552
    %1946 = vmatprep.subr.mxu0 %v549
    %1947 = vmatpush1.msra.mxu0 %v548
    %1948 = vmatprep.subr.mxu0 %v545
    %1949 = vmatpush1.msra.mxu0 %v544
    %1950 = vmatprep.subr.mxu0 %v541
    %1951 = vmatpush1.msra.mxu0 %v540
    %1952 = vmatprep.subr.mxu0 %v537
    %1953 = vmatpush1.msra.mxu0 %v536
    %1954 = vmatprep.subr.mxu0 %v533
    %1955 = vmatpush1.msra.mxu0 %v532
    %1956 = vmatprep.subr.mxu0 %v529
    %1957 = vmatpush1.msra.mxu0 %v528
    %1958 = vmatprep.subr.mxu0 %v525
    %1959 = vmatpush1.msra.mxu0 %v524
    %1960 = vmatprep.subr.mxu0 %v521
    %1961 = vmatpush1.msra.mxu0 %v520
    %1962 = vmatprep.subr.mxu0 %v517
    %1963 = vmatpush1.msra.mxu0 %v516
    %1964 = vmatprep.subr.mxu0 %v641
    %1965 = vmatpush2.msra.mxu0 %v640
    %1966 = vmatprep.subr.mxu0 %v637
    %1967 = vmatpush2.msra.mxu0 %v636
    %1968 = vmatprep.subr.mxu0 %v633
    %1969 = vmatpush2.msra.mxu0 %v632
    %1970 = vmatprep.subr.mxu0 %v629
    %1971 = vmatpush2.msra.mxu0 %v628
    %1972 = vmatprep.subr.mxu0 %v625
    %1973 = vmatpush2.msra.mxu0 %v624
    %1974 = vmatprep.subr.mxu0 %v621
    %1975 = vmatpush2.msra.mxu0 %v620
    %1976 = vmatprep.subr.mxu0 %v617
    %1977 = vmatpush2.msra.mxu0 %v616
    %1978 = vmatprep.subr.mxu0 %v613
    %1979 = vmatpush2.msra.mxu0 %v612
    %1980 = vmatprep.subr.mxu0 %v609
    %1981 = vmatpush2.msra.mxu0 %v608
    %1982 = vmatprep.subr.mxu0 %v605
    %1983 = vmatpush2.msra.mxu0 %v604
    %1984 = vmatprep.subr.mxu0 %v601
    %1985 = vmatpush2.msra.mxu0 %v600
    %1986 = vmatprep.subr.mxu0 %v597
    %1987 = vmatpush2.msra.mxu0 %v596
    %1988 = vmatprep.subr.mxu0 %v593
    %1989 = vmatpush2.msra.mxu0 %v592
    %1990 = vmatprep.subr.mxu0 %v589
    %1991 = vmatpush2.msra.mxu0 %v588
    %1992 = vmatprep.subr.mxu0 %v585
    %1993 = vmatpush2.msra.mxu0 %v584
    %1994 = vmatprep.subr.mxu0 %v581
    %1995 = vmatpush2.msra.mxu0 %v580
    %1996 = vmatprep.mubr.f32.mxu0 %v1685
    %1997 = vmatmul.mubr.f32.gmra.mxu0 %v1860
    %v1998 = vpop.f32.mrf.mxu0
    %v1999 = vadd.f32 %v829, %v1998
    %v2000 = vpop.f32.mrf.mxu0
    %v2001 = vadd.f32 %v833, %v2000
    %2002 = vdwg.mxu0
    %v2003 = vxor.u32 %v1928, 2147483648
    %v2004 = vmul.f32 %v2003, 1.442695
    %v2005 = vpow.pop %v2004
    %v2006 = vadd.f32 %v2005, 1.0
    %v2007 = vrcp.pop %v2006
    %v2008 = vmul.f32 1.0, %v2007
    %v2009 = vxor.u32 %v1930, 2147483648
    %v2010 = vmul.f32 %v2009, 1.442695
    %v2011 = vpow.pop %v2010
    %v2012 = vadd.f32 %v2011, 1.0
    %v2013 = vrcp.pop %v2012
    %v2014 = vmul.f32 1.0, %v2013
    %v2015 = vtanh.pop %v1999
    %v2016 = vxor.u32 %v2001, 2147483648
    %v2017 = vmul.f32 %v2016, 1.442695
    %v2018 = vpow.pop %v2017
    %v2019 = vadd.f32 %v2018, 1.0
    %v2020 = vrcp.pop %v2019
    %v2021 = vmul.f32 1.0, %v2020
    %v2022 = vmul.f32 %v2014, %v1683
    %v2023 = vmul.f32 %v2008, %v2015
    %v2024 = vadd.f32 %v2022, %v2023
    %v2025 = vtanh.pop %v2024
    %v2026 = vmul.f32 %v2021, %v2025
    %s2027 = scalar_lea.vmem [#allocation2], 128
    %v2028 = vld [vmem:[%s2027] sm:$0xff]
    %v2029 = vld [vmem:[%s2027 + $0x8] sm:$0xff]
    %v2030 = vld [vmem:[%s2027 + $0x10] sm:$0xff]
    %v2031 = vld [vmem:[%s2027 + $0x18] sm:$0xff]
    %2032 = vmatprep.subr.mxu0 %v511
    %2033 = vmatpush1.msra.mxu0 %v510
    %2034 = vmatprep.subr.mxu0 %v507
    %2035 = vmatpush1.msra.mxu0 %v506
    %2036 = vmatprep.subr.mxu0 %v503
    %2037 = vmatpush1.msra.mxu0 %v502
    %2038 = vmatprep.subr.mxu0 %v499
    %2039 = vmatpush1.msra.mxu0 %v498
    %2040 = vmatprep.subr.mxu0 %v495
    %2041 = vmatpush1.msra.mxu0 %v494
    %2042 = vmatprep.subr.mxu0 %v491
    %2043 = vmatpush1.msra.mxu0 %v490
    %2044 = vmatprep.subr.mxu0 %v487
    %2045 = vmatpush1.msra.mxu0 %v486
    %2046 = vmatprep.subr.mxu0 %v483
    %2047 = vmatpush1.msra.mxu0 %v482
    %2048 = vmatprep.subr.mxu0 %v479
    %2049 = vmatpush1.msra.mxu0 %v478
    %2050 = vmatprep.subr.mxu0 %v475
    %2051 = vmatpush1.msra.mxu0 %v474
    %2052 = vmatprep.subr.mxu0 %v471
    %2053 = vmatpush1.msra.mxu0 %v470
    %2054 = vmatprep.subr.mxu0 %v467
    %2055 = vmatpush1.msra.mxu0 %v466
    %2056 = vmatprep.subr.mxu0 %v463
    %2057 = vmatpush1.msra.mxu0 %v462
    %2058 = vmatprep.subr.mxu0 %v459
    %2059 = vmatpush1.msra.mxu0 %v458
    %2060 = vmatprep.subr.mxu0 %v455
    %2061 = vmatpush1.msra.mxu0 %v454
    %2062 = vmatprep.subr.mxu0 %v451
    %2063 = vmatpush1.msra.mxu0 %v450
    %2064 = vmatprep.subr.mxu0 0.0
    %2065 = vmatpush2.msra.mxu0 0.0
    %2066 = vmatprep.subr.mxu0 0.0
    %2067 = vmatpush2.msra.mxu0 0.0
    %2068 = vmatprep.subr.mxu0 0.0
    %2069 = vmatpush2.msra.mxu0 0.0
    %2070 = vmatprep.subr.mxu0 0.0
    %2071 = vmatpush2.msra.mxu0 0.0
    %2072 = vmatprep.subr.mxu0 0.0
    %2073 = vmatpush2.msra.mxu0 0.0
    %2074 = vmatprep.subr.mxu0 0.0
    %2075 = vmatpush2.msra.mxu0 0.0
    %2076 = vmatprep.subr.mxu0 0.0
    %2077 = vmatpush2.msra.mxu0 0.0
    %2078 = vmatprep.subr.mxu0 0.0
    %2079 = vmatpush2.msra.mxu0 0.0
    %2080 = vmatprep.subr.mxu0 0.0
    %2081 = vmatpush2.msra.mxu0 0.0
    %2082 = vmatprep.subr.mxu0 0.0
    %2083 = vmatpush2.msra.mxu0 0.0
    %2084 = vmatprep.subr.mxu0 0.0
    %2085 = vmatpush2.msra.mxu0 0.0
    %2086 = vmatprep.subr.mxu0 0.0
    %2087 = vmatpush2.msra.mxu0 0.0
    %2088 = vmatprep.subr.mxu0 0.0
    %2089 = vmatpush2.msra.mxu0 0.0
    %2090 = vmatprep.subr.mxu0 0.0
    %2091 = vmatpush2.msra.mxu0 0.0
    %2092 = vmatprep.subr.mxu0 0.0
    %2093 = vmatpush2.msra.mxu0 0.0
    %2094 = vmatprep.subr.mxu0 0.0
    %2095 = vmatpush2.msra.mxu0 0.0
    %2096 = vmatprep.mubr.f32.mxu0 0.0
    %2097 = vmatmul.mubr.f32.gmra.mxu0 %v1860
    %v2098 = vpop.f32.mrf.mxu0
    %v2099 = vadd.f32 0.0, %v2098
    %v2100 = vpop.f32.mrf.mxu0
    %v2101 = vadd.f32 0.0, %v2100
    %2102 = vdwg.mxu0
    %2103 = vmatprep.subr.mxu0 %v513
    %2104 = vmatpush1.msra.mxu0 %v512
    %2105 = vmatprep.subr.mxu0 %v509
    %2106 = vmatpush1.msra.mxu0 %v508
    %2107 = vmatprep.subr.mxu0 %v505
    %2108 = vmatpush1.msra.mxu0 %v504
    %2109 = vmatprep.subr.mxu0 %v501
    %2110 = vmatpush1.msra.mxu0 %v500
    %2111 = vmatprep.subr.mxu0 %v497
    %2112 = vmatpush1.msra.mxu0 %v496
    %2113 = vmatprep.subr.mxu0 %v493
    %2114 = vmatpush1.msra.mxu0 %v492
    %2115 = vmatprep.subr.mxu0 %v489
    %2116 = vmatpush1.msra.mxu0 %v488
    %2117 = vmatprep.subr.mxu0 %v485
    %2118 = vmatpush1.msra.mxu0 %v484
    %2119 = vmatprep.subr.mxu0 %v481
    %2120 = vmatpush1.msra.mxu0 %v480
    %2121 = vmatprep.subr.mxu0 %v477
    %2122 = vmatpush1.msra.mxu0 %v476
    %2123 = vmatprep.subr.mxu0 %v473
    %2124 = vmatpush1.msra.mxu0 %v472
    %2125 = vmatprep.subr.mxu0 %v469
    %2126 = vmatpush1.msra.mxu0 %v468
    %2127 = vmatprep.subr.mxu0 %v465
    %2128 = vmatpush1.msra.mxu0 %v464
    %2129 = vmatprep.subr.mxu0 %v461
    %2130 = vmatpush1.msra.mxu0 %v460
    %2131 = vmatprep.subr.mxu0 %v457
    %2132 = vmatpush1.msra.mxu0 %v456
    %2133 = vmatprep.subr.mxu0 %v453
    %2134 = vmatpush1.msra.mxu0 %v452
    %2135 = vmatprep.subr.mxu0 0.0
    %2136 = vmatpush2.msra.mxu0 0.0
    %2137 = vmatprep.subr.mxu0 0.0
    %2138 = vmatpush2.msra.mxu0 0.0
    %2139 = vmatprep.subr.mxu0 0.0
    %2140 = vmatpush2.msra.mxu0 0.0
    %2141 = vmatprep.subr.mxu0 0.0
    %2142 = vmatpush2.msra.mxu0 0.0
    %2143 = vmatprep.subr.mxu0 0.0
    %2144 = vmatpush2.msra.mxu0 0.0
    %2145 = vmatprep.subr.mxu0 0.0
    %2146 = vmatpush2.msra.mxu0 0.0
    %2147 = vmatprep.subr.mxu0 0.0
    %2148 = vmatpush2.msra.mxu0 0.0
    %2149 = vmatprep.subr.mxu0 0.0
    %2150 = vmatpush2.msra.mxu0 0.0
    %2151 = vmatprep.subr.mxu0 0.0
    %2152 = vmatpush2.msra.mxu0 0.0
    %2153 = vmatprep.subr.mxu0 0.0
    %2154 = vmatpush2.msra.mxu0 0.0
    %2155 = vmatprep.subr.mxu0 0.0
    %2156 = vmatpush2.msra.mxu0 0.0
    %2157 = vmatprep.subr.mxu0 0.0
    %2158 = vmatpush2.msra.mxu0 0.0
    %2159 = vmatprep.subr.mxu0 0.0
    %2160 = vmatpush2.msra.mxu0 0.0
    %2161 = vmatprep.subr.mxu0 0.0
    %2162 = vmatpush2.msra.mxu0 0.0
    %2163 = vmatprep.subr.mxu0 0.0
    %2164 = vmatpush2.msra.mxu0 0.0
    %2165 = vmatprep.subr.mxu0 0.0
    %2166 = vmatpush2.msra.mxu0 0.0
    %2167 = vmatprep.mubr.f32.mxu0 0.0
    %2168 = vmatmul.mubr.f32.gmra.mxu0 %v1860
    %v2169 = vpop.f32.mrf.mxu0
    %v2170 = vadd.f32 0.0, %v2169
    %v2171 = vpop.f32.mrf.mxu0
    %v2172 = vadd.f32 0.0, %v2171
    %2173 = vdwg.mxu0
    %v2174 = vadd.f32 %v2028, %v2099
    %v2175 = vadd.f32 %v2029, %v2101
    %v2176 = vadd.f32 %v2030, %v2170
    %v2177 = vadd.f32 %v2031, %v2172
    %v2178 = vxor.u32 %v2174, 2147483648
    %v2179 = vmul.f32 %v2178, 1.442695
    %v2180 = vpow.pop %v2179
    %v2181 = vadd.f32 %v2180, 1.0
    %v2182 = vrcp.pop %v2181
    %v2183 = vmul.f32 1.0, %v2182
    %v2184 = vxor.u32 %v2175, 2147483648
    %v2185 = vmul.f32 %v2184, 1.442695
    %v2186 = vpow.pop %v2185
    %v2187 = vadd.f32 %v2186, 1.0
    %v2188 = vrcp.pop %v2187
    %v2189 = vmul.f32 1.0, %v2188
    %v2190 = vtanh.pop %v2176
    %v2191 = vxor.u32 %v2177, 2147483648
    %v2192 = vmul.f32 %v2191, 1.442695
    %v2193 = vpow.pop %v2192
    %v2194 = vadd.f32 %v2193, 1.0
    %v2195 = vrcp.pop %v2194
    %v2196 = vmul.f32 1.0, %v2195
    %v2197 = vmul.f32 %v2189, %v1858
    %v2198 = vmul.f32 %v2183, %v2190
    %v2199 = vadd.f32 %v2197, %v2198
    %v2200 = vtanh.pop %v2199
    %v2201 = vmul.f32 %v2196, %v2200
    %2202 = vmatprep.subr.mxu0 %v575
    %2203 = vmatpush1.msra.mxu0 %v574
    %2204 = vmatprep.subr.mxu0 %v571
    %2205 = vmatpush1.msra.mxu0 %v570
    %2206 = vmatprep.subr.mxu0 %v567
    %2207 = vmatpush1.msra.mxu0 %v566
    %2208 = vmatprep.subr.mxu0 %v563
    %2209 = vmatpush1.msra.mxu0 %v562
    %2210 = vmatprep.subr.mxu0 %v559
    %2211 = vmatpush1.msra.mxu0 %v558
    %2212 = vmatprep.subr.mxu0 %v555
    %2213 = vmatpush1.msra.mxu0 %v554
    %2214 = vmatprep.subr.mxu0 %v551
    %2215 = vmatpush1.msra.mxu0 %v550
    %2216 = vmatprep.subr.mxu0 %v547
    %2217 = vmatpush1.msra.mxu0 %v546
    %2218 = vmatprep.subr.mxu0 %v543
    %2219 = vmatpush1.msra.mxu0 %v542
    %2220 = vmatprep.subr.mxu0 %v539
    %2221 = vmatpush1.msra.mxu0 %v538
    %2222 = vmatprep.subr.mxu0 %v535
    %2223 = vmatpush1.msra.mxu0 %v534
    %2224 = vmatprep.subr.mxu0 %v531
    %2225 = vmatpush1.msra.mxu0 %v530
    %2226 = vmatprep.subr.mxu0 %v527
    %2227 = vmatpush1.msra.mxu0 %v526
    %2228 = vmatprep.subr.mxu0 %v523
    %2229 = vmatpush1.msra.mxu0 %v522
    %2230 = vmatprep.subr.mxu0 %v519
    %2231 = vmatpush1.msra.mxu0 %v518
    %2232 = vmatprep.subr.mxu0 %v515
    %2233 = vmatpush1.msra.mxu0 %v514
    %2234 = vmatprep.subr.mxu0 %v639
    %2235 = vmatpush2.msra.mxu0 %v638
    %2236 = vmatprep.subr.mxu0 %v635
    %2237 = vmatpush2.msra.mxu0 %v634
    %2238 = vmatprep.subr.mxu0 %v631
    %2239 = vmatpush2.msra.mxu0 %v630
    %2240 = vmatprep.subr.mxu0 %v627
    %2241 = vmatpush2.msra.mxu0 %v626
    %2242 = vmatprep.subr.mxu0 %v623
    %2243 = vmatpush2.msra.mxu0 %v622
    %2244 = vmatprep.subr.mxu0 %v619
    %2245 = vmatpush2.msra.mxu0 %v618
    %2246 = vmatprep.subr.mxu0 %v615
    %2247 = vmatpush2.msra.mxu0 %v614
    %2248 = vmatprep.subr.mxu0 %v611
    %2249 = vmatpush2.msra.mxu0 %v610
    %2250 = vmatprep.subr.mxu0 %v607
    %2251 = vmatpush2.msra.mxu0 %v606
    %2252 = vmatprep.subr.mxu0 %v603
    %2253 = vmatpush2.msra.mxu0 %v602
    %2254 = vmatprep.subr.mxu0 %v599
    %2255 = vmatpush2.msra.mxu0 %v598
    %2256 = vmatprep.subr.mxu0 %v595
    %2257 = vmatpush2.msra.mxu0 %v594
    %2258 = vmatprep.subr.mxu0 %v591
    %2259 = vmatpush2.msra.mxu0 %v590
    %2260 = vmatprep.subr.mxu0 %v587
    %2261 = vmatpush2.msra.mxu0 %v586
    %2262 = vmatprep.subr.mxu0 %v583
    %2263 = vmatpush2.msra.mxu0 %v582
    %2264 = vmatprep.subr.mxu0 %v579
    %2265 = vmatpush2.msra.mxu0 %v578
    %2266 = vmatprep.mubr.f32.mxu0 %v2026
    %2267 = vmatmul.mubr.f32.gmra.mxu0 %v2201
    %v2268 = vpop.f32.mrf.mxu0
    %v2269 = vadd.f32 %v821, %v2268
    %v2270 = vpop.f32.mrf.mxu0
    %v2271 = vadd.f32 %v825, %v2270
    %2272 = vdwg.mxu0
    %2273 = vmatprep.subr.mxu0 %v577
    %2274 = vmatpush1.msra.mxu0 %v576
    %2275 = vmatprep.subr.mxu0 %v573
    %2276 = vmatpush1.msra.mxu0 %v572
    %2277 = vmatprep.subr.mxu0 %v569
    %2278 = vmatpush1.msra.mxu0 %v568
    %2279 = vmatprep.subr.mxu0 %v565
    %2280 = vmatpush1.msra.mxu0 %v564
    %2281 = vmatprep.subr.mxu0 %v561
    %2282 = vmatpush1.msra.mxu0 %v560
    %2283 = vmatprep.subr.mxu0 %v557
    %2284 = vmatpush1.msra.mxu0 %v556
    %2285 = vmatprep.subr.mxu0 %v553
    %2286 = vmatpush1.msra.mxu0 %v552
    %2287 = vmatprep.subr.mxu0 %v549
    %2288 = vmatpush1.msra.mxu0 %v548
    %2289 = vmatprep.subr.mxu0 %v545
    %2290 = vmatpush1.msra.mxu0 %v544
    %2291 = vmatprep.subr.mxu0 %v541
    %2292 = vmatpush1.msra.mxu0 %v540
    %2293 = vmatprep.subr.mxu0 %v537
    %2294 = vmatpush1.msra.mxu0 %v536
    %2295 = vmatprep.subr.mxu0 %v533
    %2296 = vmatpush1.msra.mxu0 %v532
    %2297 = vmatprep.subr.mxu0 %v529
    %2298 = vmatpush1.msra.mxu0 %v528
    %2299 = vmatprep.subr.mxu0 %v525
    %2300 = vmatpush1.msra.mxu0 %v524
    %2301 = vmatprep.subr.mxu0 %v521
    %2302 = vmatpush1.msra.mxu0 %v520
    %2303 = vmatprep.subr.mxu0 %v517
    %2304 = vmatpush1.msra.mxu0 %v516
    %2305 = vmatprep.subr.mxu0 %v641
    %2306 = vmatpush2.msra.mxu0 %v640
    %2307 = vmatprep.subr.mxu0 %v637
    %2308 = vmatpush2.msra.mxu0 %v636
    %2309 = vmatprep.subr.mxu0 %v633
    %2310 = vmatpush2.msra.mxu0 %v632
    %2311 = vmatprep.subr.mxu0 %v629
    %2312 = vmatpush2.msra.mxu0 %v628
    %2313 = vmatprep.subr.mxu0 %v625
    %2314 = vmatpush2.msra.mxu0 %v624
    %2315 = vmatprep.subr.mxu0 %v621
    %2316 = vmatpush2.msra.mxu0 %v620
    %2317 = vmatprep.subr.mxu0 %v617
    %2318 = vmatpush2.msra.mxu0 %v616
    %2319 = vmatprep.subr.mxu0 %v613
    %2320 = vmatpush2.msra.mxu0 %v612
    %2321 = vmatprep.subr.mxu0 %v609
    %2322 = vmatpush2.msra.mxu0 %v608
    %2323 = vmatprep.subr.mxu0 %v605
    %2324 = vmatpush2.msra.mxu0 %v604
    %2325 = vmatprep.subr.mxu0 %v601
    %2326 = vmatpush2.msra.mxu0 %v600
    %2327 = vmatprep.subr.mxu0 %v597
    %2328 = vmatpush2.msra.mxu0 %v596
    %2329 = vmatprep.subr.mxu0 %v593
    %2330 = vmatpush2.msra.mxu0 %v592
    %2331 = vmatprep.subr.mxu0 %v589
    %2332 = vmatpush2.msra.mxu0 %v588
    %2333 = vmatprep.subr.mxu0 %v585
    %2334 = vmatpush2.msra.mxu0 %v584
    %2335 = vmatprep.subr.mxu0 %v581
    %2336 = vmatpush2.msra.mxu0 %v580
    %2337 = vmatprep.mubr.f32.mxu0 %v2026
    %2338 = vmatmul.mubr.f32.gmra.mxu0 %v2201
    %v2339 = vpop.f32.mrf.mxu0
    %v2340 = vadd.f32 %v829, %v2339
    %v2341 = vpop.f32.mrf.mxu0
    %v2342 = vadd.f32 %v833, %v2341
    %2343 = vdwg.mxu0
    %v2344 = vxor.u32 %v2269, 2147483648
    %v2345 = vmul.f32 %v2344, 1.442695
    %v2346 = vpow.pop %v2345
    %v2347 = vadd.f32 %v2346, 1.0
    %v2348 = vrcp.pop %v2347
    %v2349 = vmul.f32 1.0, %v2348
    %v2350 = vxor.u32 %v2271, 2147483648
    %v2351 = vmul.f32 %v2350, 1.442695
    %v2352 = vpow.pop %v2351
    %v2353 = vadd.f32 %v2352, 1.0
    %v2354 = vrcp.pop %v2353
    %v2355 = vmul.f32 1.0, %v2354
    %v2356 = vtanh.pop %v2340
    %v2357 = vxor.u32 %v2342, 2147483648
    %v2358 = vmul.f32 %v2357, 1.442695
    %v2359 = vpow.pop %v2358
    %v2360 = vadd.f32 %v2359, 1.0
    %v2361 = vrcp.pop %v2360
    %v2362 = vmul.f32 1.0, %v2361
    %v2363 = vmul.f32 %v2355, %v2024
    %v2364 = vmul.f32 %v2349, %v2356
    %v2365 = vadd.f32 %v2363, %v2364
    %v2366 = vtanh.pop %v2365
    %v2367 = vmul.f32 %v2362, %v2366
    %s2368 = scalar_lea.vmem [#allocation2], 160
    %v2369 = vld [vmem:[%s2368] sm:$0xff]
    %v2370 = vld [vmem:[%s2368 + $0x8] sm:$0xff]
    %v2371 = vld [vmem:[%s2368 + $0x10] sm:$0xff]
    %v2372 = vld [vmem:[%s2368 + $0x18] sm:$0xff]
    %2373 = vmatprep.subr.mxu0 %v511
    %2374 = vmatpush1.msra.mxu0 %v510
    %2375 = vmatprep.subr.mxu0 %v507
    %2376 = vmatpush1.msra.mxu0 %v506
    %2377 = vmatprep.subr.mxu0 %v503
    %2378 = vmatpush1.msra.mxu0 %v502
    %2379 = vmatprep.subr.mxu0 %v499
    %2380 = vmatpush1.msra.mxu0 %v498
    %2381 = vmatprep.subr.mxu0 %v495
    %2382 = vmatpush1.msra.mxu0 %v494
    %2383 = vmatprep.subr.mxu0 %v491
    %2384 = vmatpush1.msra.mxu0 %v490
    %2385 = vmatprep.subr.mxu0 %v487
    %2386 = vmatpush1.msra.mxu0 %v486
    %2387 = vmatprep.subr.mxu0 %v483
    %2388 = vmatpush1.msra.mxu0 %v482
    %2389 = vmatprep.subr.mxu0 %v479
    %2390 = vmatpush1.msra.mxu0 %v478
    %2391 = vmatprep.subr.mxu0 %v475
    %2392 = vmatpush1.msra.mxu0 %v474
    %2393 = vmatprep.subr.mxu0 %v471
    %2394 = vmatpush1.msra.mxu0 %v470
    %2395 = vmatprep.subr.mxu0 %v467
    %2396 = vmatpush1.msra.mxu0 %v466
    %2397 = vmatprep.subr.mxu0 %v463
    %2398 = vmatpush1.msra.mxu0 %v462
    %2399 = vmatprep.subr.mxu0 %v459
    %2400 = vmatpush1.msra.mxu0 %v458
    %2401 = vmatprep.subr.mxu0 %v455
    %2402 = vmatpush1.msra.mxu0 %v454
    %2403 = vmatprep.subr.mxu0 %v451
    %2404 = vmatpush1.msra.mxu0 %v450
    %2405 = vmatprep.subr.mxu0 0.0
    %2406 = vmatpush2.msra.mxu0 0.0
    %2407 = vmatprep.subr.mxu0 0.0
    %2408 = vmatpush2.msra.mxu0 0.0
    %2409 = vmatprep.subr.mxu0 0.0
    %2410 = vmatpush2.msra.mxu0 0.0
    %2411 = vmatprep.subr.mxu0 0.0
    %2412 = vmatpush2.msra.mxu0 0.0
    %2413 = vmatprep.subr.mxu0 0.0
    %2414 = vmatpush2.msra.mxu0 0.0
    %2415 = vmatprep.subr.mxu0 0.0
    %2416 = vmatpush2.msra.mxu0 0.0
    %2417 = vmatprep.subr.mxu0 0.0
    %2418 = vmatpush2.msra.mxu0 0.0
    %2419 = vmatprep.subr.mxu0 0.0
    %2420 = vmatpush2.msra.mxu0 0.0
    %2421 = vmatprep.subr.mxu0 0.0
    %2422 = vmatpush2.msra.mxu0 0.0
    %2423 = vmatprep.subr.mxu0 0.0
    %2424 = vmatpush2.msra.mxu0 0.0
    %2425 = vmatprep.subr.mxu0 0.0
    %2426 = vmatpush2.msra.mxu0 0.0
    %2427 = vmatprep.subr.mxu0 0.0
    %2428 = vmatpush2.msra.mxu0 0.0
    %2429 = vmatprep.subr.mxu0 0.0
    %2430 = vmatpush2.msra.mxu0 0.0
    %2431 = vmatprep.subr.mxu0 0.0
    %2432 = vmatpush2.msra.mxu0 0.0
    %2433 = vmatprep.subr.mxu0 0.0
    %2434 = vmatpush2.msra.mxu0 0.0
    %2435 = vmatprep.subr.mxu0 0.0
    %2436 = vmatpush2.msra.mxu0 0.0
    %2437 = vmatprep.mubr.f32.mxu0 0.0
    %2438 = vmatmul.mubr.f32.gmra.mxu0 %v2201
    %v2439 = vpop.f32.mrf.mxu0
    %v2440 = vadd.f32 0.0, %v2439
    %v2441 = vpop.f32.mrf.mxu0
    %v2442 = vadd.f32 0.0, %v2441
    %2443 = vdwg.mxu0
    %2444 = vmatprep.subr.mxu0 %v513
    %2445 = vmatpush1.msra.mxu0 %v512
    %2446 = vmatprep.subr.mxu0 %v509
    %2447 = vmatpush1.msra.mxu0 %v508
    %2448 = vmatprep.subr.mxu0 %v505
    %2449 = vmatpush1.msra.mxu0 %v504
    %2450 = vmatprep.subr.mxu0 %v501
    %2451 = vmatpush1.msra.mxu0 %v500
    %2452 = vmatprep.subr.mxu0 %v497
    %2453 = vmatpush1.msra.mxu0 %v496
    %2454 = vmatprep.subr.mxu0 %v493
    %2455 = vmatpush1.msra.mxu0 %v492
    %2456 = vmatprep.subr.mxu0 %v489
    %2457 = vmatpush1.msra.mxu0 %v488
    %2458 = vmatprep.subr.mxu0 %v485
    %2459 = vmatpush1.msra.mxu0 %v484
    %2460 = vmatprep.subr.mxu0 %v481
    %2461 = vmatpush1.msra.mxu0 %v480
    %2462 = vmatprep.subr.mxu0 %v477
    %2463 = vmatpush1.msra.mxu0 %v476
    %2464 = vmatprep.subr.mxu0 %v473
    %2465 = vmatpush1.msra.mxu0 %v472
    %2466 = vmatprep.subr.mxu0 %v469
    %2467 = vmatpush1.msra.mxu0 %v468
    %2468 = vmatprep.subr.mxu0 %v465
    %2469 = vmatpush1.msra.mxu0 %v464
    %2470 = vmatprep.subr.mxu0 %v461
    %2471 = vmatpush1.msra.mxu0 %v460
    %2472 = vmatprep.subr.mxu0 %v457
    %2473 = vmatpush1.msra.mxu0 %v456
    %2474 = vmatprep.subr.mxu0 %v453
    %2475 = vmatpush1.msra.mxu0 %v452
    %2476 = vmatprep.subr.mxu0 0.0
    %2477 = vmatpush2.msra.mxu0 0.0
    %2478 = vmatprep.subr.mxu0 0.0
    %2479 = vmatpush2.msra.mxu0 0.0
    %2480 = vmatprep.subr.mxu0 0.0
    %2481 = vmatpush2.msra.mxu0 0.0
    %2482 = vmatprep.subr.mxu0 0.0
    %2483 = vmatpush2.msra.mxu0 0.0
    %2484 = vmatprep.subr.mxu0 0.0
    %2485 = vmatpush2.msra.mxu0 0.0
    %2486 = vmatprep.subr.mxu0 0.0
    %2487 = vmatpush2.msra.mxu0 0.0
    %2488 = vmatprep.subr.mxu0 0.0
    %2489 = vmatpush2.msra.mxu0 0.0
    %2490 = vmatprep.subr.mxu0 0.0
    %2491 = vmatpush2.msra.mxu0 0.0
    %2492 = vmatprep.subr.mxu0 0.0
    %2493 = vmatpush2.msra.mxu0 0.0
    %2494 = vmatprep.subr.mxu0 0.0
    %2495 = vmatpush2.msra.mxu0 0.0
    %2496 = vmatprep.subr.mxu0 0.0
    %2497 = vmatpush2.msra.mxu0 0.0
    %2498 = vmatprep.subr.mxu0 0.0
    %2499 = vmatpush2.msra.mxu0 0.0
    %2500 = vmatprep.subr.mxu0 0.0
    %2501 = vmatpush2.msra.mxu0 0.0
    %2502 = vmatprep.subr.mxu0 0.0
    %2503 = vmatpush2.msra.mxu0 0.0
    %2504 = vmatprep.subr.mxu0 0.0
    %2505 = vmatpush2.msra.mxu0 0.0
    %2506 = vmatprep.subr.mxu0 0.0
    %2507 = vmatpush2.msra.mxu0 0.0
    %2508 = vmatprep.mubr.f32.mxu0 0.0
    %2509 = vmatmul.mubr.f32.gmra.mxu0 %v2201
    %v2510 = vpop.f32.mrf.mxu0
    %v2511 = vadd.f32 0.0, %v2510
    %v2512 = vpop.f32.mrf.mxu0
    %v2513 = vadd.f32 0.0, %v2512
    %2514 = vdwg.mxu0
    %v2515 = vadd.f32 %v2369, %v2440
    %v2516 = vadd.f32 %v2370, %v2442
    %v2517 = vadd.f32 %v2371, %v2511
    %v2518 = vadd.f32 %v2372, %v2513
    %v2519 = vxor.u32 %v2515, 2147483648
    %v2520 = vmul.f32 %v2519, 1.442695
    %v2521 = vpow.pop %v2520
    %v2522 = vadd.f32 %v2521, 1.0
    %v2523 = vrcp.pop %v2522
    %v2524 = vmul.f32 1.0, %v2523
    %v2525 = vxor.u32 %v2516, 2147483648
    %v2526 = vmul.f32 %v2525, 1.442695
    %v2527 = vpow.pop %v2526
    %v2528 = vadd.f32 %v2527, 1.0
    %v2529 = vrcp.pop %v2528
    %v2530 = vmul.f32 1.0, %v2529
    %v2531 = vtanh.pop %v2517
    %v2532 = vxor.u32 %v2518, 2147483648
    %v2533 = vmul.f32 %v2532, 1.442695
    %v2534 = vpow.pop %v2533
    %v2535 = vadd.f32 %v2534, 1.0
    %v2536 = vrcp.pop %v2535
    %v2537 = vmul.f32 1.0, %v2536
    %v2538 = vmul.f32 %v2530, %v2199
    %v2539 = vmul.f32 %v2524, %v2531
    %v2540 = vadd.f32 %v2538, %v2539
    %v2541 = vtanh.pop %v2540
    %v2542 = vmul.f32 %v2537, %v2541
    %2543 = vmatprep.subr.mxu0 %v575
    %2544 = vmatpush1.msra.mxu0 %v574
    %2545 = vmatprep.subr.mxu0 %v571
    %2546 = vmatpush1.msra.mxu0 %v570
    %2547 = vmatprep.subr.mxu0 %v567
    %2548 = vmatpush1.msra.mxu0 %v566
    %2549 = vmatprep.subr.mxu0 %v563
    %2550 = vmatpush1.msra.mxu0 %v562
    %2551 = vmatprep.subr.mxu0 %v559
    %2552 = vmatpush1.msra.mxu0 %v558
    %2553 = vmatprep.subr.mxu0 %v555
    %2554 = vmatpush1.msra.mxu0 %v554
    %2555 = vmatprep.subr.mxu0 %v551
    %2556 = vmatpush1.msra.mxu0 %v550
    %2557 = vmatprep.subr.mxu0 %v547
    %2558 = vmatpush1.msra.mxu0 %v546
    %2559 = vmatprep.subr.mxu0 %v543
    %2560 = vmatpush1.msra.mxu0 %v542
    %2561 = vmatprep.subr.mxu0 %v539
    %2562 = vmatpush1.msra.mxu0 %v538
    %2563 = vmatprep.subr.mxu0 %v535
    %2564 = vmatpush1.msra.mxu0 %v534
    %2565 = vmatprep.subr.mxu0 %v531
    %2566 = vmatpush1.msra.mxu0 %v530
    %2567 = vmatprep.subr.mxu0 %v527
    %2568 = vmatpush1.msra.mxu0 %v526
    %2569 = vmatprep.subr.mxu0 %v523
    %2570 = vmatpush1.msra.mxu0 %v522
    %2571 = vmatprep.subr.mxu0 %v519
    %2572 = vmatpush1.msra.mxu0 %v518
    %2573 = vmatprep.subr.mxu0 %v515
    %2574 = vmatpush1.msra.mxu0 %v514
    %2575 = vmatprep.subr.mxu0 %v639
    %2576 = vmatpush2.msra.mxu0 %v638
    %2577 = vmatprep.subr.mxu0 %v635
    %2578 = vmatpush2.msra.mxu0 %v634
    %2579 = vmatprep.subr.mxu0 %v631
    %2580 = vmatpush2.msra.mxu0 %v630
    %2581 = vmatprep.subr.mxu0 %v627
    %2582 = vmatpush2.msra.mxu0 %v626
    %2583 = vmatprep.subr.mxu0 %v623
    %2584 = vmatpush2.msra.mxu0 %v622
    %2585 = vmatprep.subr.mxu0 %v619
    %2586 = vmatpush2.msra.mxu0 %v618
    %2587 = vmatprep.subr.mxu0 %v615
    %2588 = vmatpush2.msra.mxu0 %v614
    %2589 = vmatprep.subr.mxu0 %v611
    %2590 = vmatpush2.msra.mxu0 %v610
    %2591 = vmatprep.subr.mxu0 %v607
    %2592 = vmatpush2.msra.mxu0 %v606
    %2593 = vmatprep.subr.mxu0 %v603
    %2594 = vmatpush2.msra.mxu0 %v602
    %2595 = vmatprep.subr.mxu0 %v599
    %2596 = vmatpush2.msra.mxu0 %v598
    %2597 = vmatprep.subr.mxu0 %v595
    %2598 = vmatpush2.msra.mxu0 %v594
    %2599 = vmatprep.subr.mxu0 %v591
    %2600 = vmatpush2.msra.mxu0 %v590
    %2601 = vmatprep.subr.mxu0 %v587
    %2602 = vmatpush2.msra.mxu0 %v586
    %2603 = vmatprep.subr.mxu0 %v583
    %2604 = vmatpush2.msra.mxu0 %v582
    %2605 = vmatprep.subr.mxu0 %v579
    %2606 = vmatpush2.msra.mxu0 %v578
    %2607 = vmatprep.mubr.f32.mxu0 %v2367
    %2608 = vmatmul.mubr.f32.gmra.mxu0 %v2542
    %v2609 = vpop.f32.mrf.mxu0
    %v2610 = vadd.f32 %v821, %v2609
    %v2611 = vpop.f32.mrf.mxu0
    %v2612 = vadd.f32 %v825, %v2611
    %2613 = vdwg.mxu0
    %2614 = vmatprep.subr.mxu0 %v577
    %2615 = vmatpush1.msra.mxu0 %v576
    %2616 = vmatprep.subr.mxu0 %v573
    %2617 = vmatpush1.msra.mxu0 %v572
    %2618 = vmatprep.subr.mxu0 %v569
    %2619 = vmatpush1.msra.mxu0 %v568
    %2620 = vmatprep.subr.mxu0 %v565
    %2621 = vmatpush1.msra.mxu0 %v564
    %2622 = vmatprep.subr.mxu0 %v561
    %2623 = vmatpush1.msra.mxu0 %v560
    %2624 = vmatprep.subr.mxu0 %v557
    %2625 = vmatpush1.msra.mxu0 %v556
    %2626 = vmatprep.subr.mxu0 %v553
    %2627 = vmatpush1.msra.mxu0 %v552
    %2628 = vmatprep.subr.mxu0 %v549
    %2629 = vmatpush1.msra.mxu0 %v548
    %2630 = vmatprep.subr.mxu0 %v545
    %2631 = vmatpush1.msra.mxu0 %v544
    %2632 = vmatprep.subr.mxu0 %v541
    %2633 = vmatpush1.msra.mxu0 %v540
    %2634 = vmatprep.subr.mxu0 %v537
    %2635 = vmatpush1.msra.mxu0 %v536
    %2636 = vmatprep.subr.mxu0 %v533
    %2637 = vmatpush1.msra.mxu0 %v532
    %2638 = vmatprep.subr.mxu0 %v529
    %2639 = vmatpush1.msra.mxu0 %v528
    %2640 = vmatprep.subr.mxu0 %v525
    %2641 = vmatpush1.msra.mxu0 %v524
    %2642 = vmatprep.subr.mxu0 %v521
    %2643 = vmatpush1.msra.mxu0 %v520
    %2644 = vmatprep.subr.mxu0 %v517
    %2645 = vmatpush1.msra.mxu0 %v516
    %2646 = vmatprep.subr.mxu0 %v641
    %2647 = vmatpush2.msra.mxu0 %v640
    %2648 = vmatprep.subr.mxu0 %v637
    %2649 = vmatpush2.msra.mxu0 %v636
    %2650 = vmatprep.subr.mxu0 %v633
    %2651 = vmatpush2.msra.mxu0 %v632
    %2652 = vmatprep.subr.mxu0 %v629
    %2653 = vmatpush2.msra.mxu0 %v628
    %2654 = vmatprep.subr.mxu0 %v625
    %2655 = vmatpush2.msra.mxu0 %v624
    %2656 = vmatprep.subr.mxu0 %v621
    %2657 = vmatpush2.msra.mxu0 %v620
    %2658 = vmatprep.subr.mxu0 %v617
    %2659 = vmatpush2.msra.mxu0 %v616
    %2660 = vmatprep.subr.mxu0 %v613
    %2661 = vmatpush2.msra.mxu0 %v612
    %2662 = vmatprep.subr.mxu0 %v609
    %2663 = vmatpush2.msra.mxu0 %v608
    %2664 = vmatprep.subr.mxu0 %v605
    %2665 = vmatpush2.msra.mxu0 %v604
    %2666 = vmatprep.subr.mxu0 %v601
    %2667 = vmatpush2.msra.mxu0 %v600
    %2668 = vmatprep.subr.mxu0 %v597
    %2669 = vmatpush2.msra.mxu0 %v596
    %2670 = vmatprep.subr.mxu0 %v593
    %2671 = vmatpush2.msra.mxu0 %v592
    %2672 = vmatprep.subr.mxu0 %v589
    %2673 = vmatpush2.msra.mxu0 %v588
    %2674 = vmatprep.subr.mxu0 %v585
    %2675 = vmatpush2.msra.mxu0 %v584
    %2676 = vmatprep.subr.mxu0 %v581
    %2677 = vmatpush2.msra.mxu0 %v580
    %2678 = vmatprep.mubr.f32.mxu0 %v2367
    %2679 = vmatmul.mubr.f32.gmra.mxu0 %v2542
    %v2680 = vpop.f32.mrf.mxu0
    %v2681 = vadd.f32 %v829, %v2680
    %v2682 = vpop.f32.mrf.mxu0
    %v2683 = vadd.f32 %v833, %v2682
    %2684 = vdwg.mxu0
    %v2685 = vxor.u32 %v2610, 2147483648
    %v2686 = vmul.f32 %v2685, 1.442695
    %v2687 = vpow.pop %v2686
    %v2688 = vadd.f32 %v2687, 1.0
    %v2689 = vrcp.pop %v2688
    %v2690 = vmul.f32 1.0, %v2689
    %v2691 = vxor.u32 %v2612, 2147483648
    %v2692 = vmul.f32 %v2691, 1.442695
    %v2693 = vpow.pop %v2692
    %v2694 = vadd.f32 %v2693, 1.0
    %v2695 = vrcp.pop %v2694
    %v2696 = vmul.f32 1.0, %v2695
    %v2697 = vtanh.pop %v2681
    %v2698 = vxor.u32 %v2683, 2147483648
    %v2699 = vmul.f32 %v2698, 1.442695
    %v2700 = vpow.pop %v2699
    %v2701 = vadd.f32 %v2700, 1.0
    %v2702 = vrcp.pop %v2701
    %v2703 = vmul.f32 1.0, %v2702
    %v2704 = vmul.f32 %v2696, %v2365
    %v2705 = vmul.f32 %v2690, %v2697
    %v2706 = vadd.f32 %v2704, %v2705
    %v2707 = vtanh.pop %v2706
    %v2708 = vmul.f32 %v2703, %v2707
    %s2709 = scalar_lea.vmem [#allocation2], 192
    %v2710 = vld [vmem:[%s2709] sm:$0xff]
    %v2711 = vld [vmem:[%s2709 + $0x8] sm:$0xff]
    %v2712 = vld [vmem:[%s2709 + $0x10] sm:$0xff]
    %v2713 = vld [vmem:[%s2709 + $0x18] sm:$0xff]
    %2714 = vmatprep.subr.mxu0 %v511
    %2715 = vmatpush1.msra.mxu0 %v510
    %2716 = vmatprep.subr.mxu0 %v507
    %2717 = vmatpush1.msra.mxu0 %v506
    %2718 = vmatprep.subr.mxu0 %v503
    %2719 = vmatpush1.msra.mxu0 %v502
    %2720 = vmatprep.subr.mxu0 %v499
    %2721 = vmatpush1.msra.mxu0 %v498
    %2722 = vmatprep.subr.mxu0 %v495
    %2723 = vmatpush1.msra.mxu0 %v494
    %2724 = vmatprep.subr.mxu0 %v491
    %2725 = vmatpush1.msra.mxu0 %v490
    %2726 = vmatprep.subr.mxu0 %v487
    %2727 = vmatpush1.msra.mxu0 %v486
    %2728 = vmatprep.subr.mxu0 %v483
    %2729 = vmatpush1.msra.mxu0 %v482
    %2730 = vmatprep.subr.mxu0 %v479
    %2731 = vmatpush1.msra.mxu0 %v478
    %2732 = vmatprep.subr.mxu0 %v475
    %2733 = vmatpush1.msra.mxu0 %v474
    %2734 = vmatprep.subr.mxu0 %v471
    %2735 = vmatpush1.msra.mxu0 %v470
    %2736 = vmatprep.subr.mxu0 %v467
    %2737 = vmatpush1.msra.mxu0 %v466
    %2738 = vmatprep.subr.mxu0 %v463
    %2739 = vmatpush1.msra.mxu0 %v462
    %2740 = vmatprep.subr.mxu0 %v459
    %2741 = vmatpush1.msra.mxu0 %v458
    %2742 = vmatprep.subr.mxu0 %v455
    %2743 = vmatpush1.msra.mxu0 %v454
    %2744 = vmatprep.subr.mxu0 %v451
    %2745 = vmatpush1.msra.mxu0 %v450
    %2746 = vmatprep.subr.mxu0 0.0
    %2747 = vmatpush2.msra.mxu0 0.0
    %2748 = vmatprep.subr.mxu0 0.0
    %2749 = vmatpush2.msra.mxu0 0.0
    %2750 = vmatprep.subr.mxu0 0.0
    %2751 = vmatpush2.msra.mxu0 0.0
    %2752 = vmatprep.subr.mxu0 0.0
    %2753 = vmatpush2.msra.mxu0 0.0
    %2754 = vmatprep.subr.mxu0 0.0
    %2755 = vmatpush2.msra.mxu0 0.0
    %2756 = vmatprep.subr.mxu0 0.0
    %2757 = vmatpush2.msra.mxu0 0.0
    %2758 = vmatprep.subr.mxu0 0.0
    %2759 = vmatpush2.msra.mxu0 0.0
    %2760 = vmatprep.subr.mxu0 0.0
    %2761 = vmatpush2.msra.mxu0 0.0
    %2762 = vmatprep.subr.mxu0 0.0
    %2763 = vmatpush2.msra.mxu0 0.0
    %2764 = vmatprep.subr.mxu0 0.0
    %2765 = vmatpush2.msra.mxu0 0.0
    %2766 = vmatprep.subr.mxu0 0.0
    %2767 = vmatpush2.msra.mxu0 0.0
    %2768 = vmatprep.subr.mxu0 0.0
    %2769 = vmatpush2.msra.mxu0 0.0
    %2770 = vmatprep.subr.mxu0 0.0
    %2771 = vmatpush2.msra.mxu0 0.0
    %2772 = vmatprep.subr.mxu0 0.0
    %2773 = vmatpush2.msra.mxu0 0.0
    %2774 = vmatprep.subr.mxu0 0.0
    %2775 = vmatpush2.msra.mxu0 0.0
    %2776 = vmatprep.subr.mxu0 0.0
    %2777 = vmatpush2.msra.mxu0 0.0
    %2778 = vmatprep.mubr.f32.mxu0 0.0
    %2779 = vmatmul.mubr.f32.gmra.mxu0 %v2542
    %v2780 = vpop.f32.mrf.mxu0
    %v2781 = vadd.f32 0.0, %v2780
    %v2782 = vpop.f32.mrf.mxu0
    %v2783 = vadd.f32 0.0, %v2782
    %2784 = vdwg.mxu0
    %2785 = vmatprep.subr.mxu0 %v513
    %2786 = vmatpush1.msra.mxu0 %v512
    %2787 = vmatprep.subr.mxu0 %v509
    %2788 = vmatpush1.msra.mxu0 %v508
    %2789 = vmatprep.subr.mxu0 %v505
    %2790 = vmatpush1.msra.mxu0 %v504
    %2791 = vmatprep.subr.mxu0 %v501
    %2792 = vmatpush1.msra.mxu0 %v500
    %2793 = vmatprep.subr.mxu0 %v497
    %2794 = vmatpush1.msra.mxu0 %v496
    %2795 = vmatprep.subr.mxu0 %v493
    %2796 = vmatpush1.msra.mxu0 %v492
    %2797 = vmatprep.subr.mxu0 %v489
    %2798 = vmatpush1.msra.mxu0 %v488
    %2799 = vmatprep.subr.mxu0 %v485
    %2800 = vmatpush1.msra.mxu0 %v484
    %2801 = vmatprep.subr.mxu0 %v481
    %2802 = vmatpush1.msra.mxu0 %v480
    %2803 = vmatprep.subr.mxu0 %v477
    %2804 = vmatpush1.msra.mxu0 %v476
    %2805 = vmatprep.subr.mxu0 %v473
    %2806 = vmatpush1.msra.mxu0 %v472
    %2807 = vmatprep.subr.mxu0 %v469
    %2808 = vmatpush1.msra.mxu0 %v468
    %2809 = vmatprep.subr.mxu0 %v465
    %2810 = vmatpush1.msra.mxu0 %v464
    %2811 = vmatprep.subr.mxu0 %v461
    %2812 = vmatpush1.msra.mxu0 %v460
    %2813 = vmatprep.subr.mxu0 %v457
    %2814 = vmatpush1.msra.mxu0 %v456
    %2815 = vmatprep.subr.mxu0 %v453
    %2816 = vmatpush1.msra.mxu0 %v452
    %2817 = vmatprep.subr.mxu0 0.0
    %2818 = vmatpush2.msra.mxu0 0.0
    %2819 = vmatprep.subr.mxu0 0.0
    %2820 = vmatpush2.msra.mxu0 0.0
    %2821 = vmatprep.subr.mxu0 0.0
    %2822 = vmatpush2.msra.mxu0 0.0
    %2823 = vmatprep.subr.mxu0 0.0
    %2824 = vmatpush2.msra.mxu0 0.0
    %2825 = vmatprep.subr.mxu0 0.0
    %2826 = vmatpush2.msra.mxu0 0.0
    %2827 = vmatprep.subr.mxu0 0.0
    %2828 = vmatpush2.msra.mxu0 0.0
    %2829 = vmatprep.subr.mxu0 0.0
    %2830 = vmatpush2.msra.mxu0 0.0
    %2831 = vmatprep.subr.mxu0 0.0
    %2832 = vmatpush2.msra.mxu0 0.0
    %2833 = vmatprep.subr.mxu0 0.0
    %2834 = vmatpush2.msra.mxu0 0.0
    %2835 = vmatprep.subr.mxu0 0.0
    %2836 = vmatpush2.msra.mxu0 0.0
    %2837 = vmatprep.subr.mxu0 0.0
    %2838 = vmatpush2.msra.mxu0 0.0
    %2839 = vmatprep.subr.mxu0 0.0
    %2840 = vmatpush2.msra.mxu0 0.0
    %2841 = vmatprep.subr.mxu0 0.0
    %2842 = vmatpush2.msra.mxu0 0.0
    %2843 = vmatprep.subr.mxu0 0.0
    %2844 = vmatpush2.msra.mxu0 0.0
    %2845 = vmatprep.subr.mxu0 0.0
    %2846 = vmatpush2.msra.mxu0 0.0
    %2847 = vmatprep.subr.mxu0 0.0
    %2848 = vmatpush2.msra.mxu0 0.0
    %2849 = vmatprep.mubr.f32.mxu0 0.0
    %2850 = vmatmul.mubr.f32.gmra.mxu0 %v2542
    %v2851 = vpop.f32.mrf.mxu0
    %v2852 = vadd.f32 0.0, %v2851
    %v2853 = vpop.f32.mrf.mxu0
    %v2854 = vadd.f32 0.0, %v2853
    %2855 = vdwg.mxu0
    %v2856 = vadd.f32 %v2710, %v2781
    %v2857 = vadd.f32 %v2711, %v2783
    %v2858 = vadd.f32 %v2712, %v2852
    %v2859 = vadd.f32 %v2713, %v2854
    %v2860 = vxor.u32 %v2856, 2147483648
    %v2861 = vmul.f32 %v2860, 1.442695
    %v2862 = vpow.pop %v2861
    %v2863 = vadd.f32 %v2862, 1.0
    %v2864 = vrcp.pop %v2863
    %v2865 = vmul.f32 1.0, %v2864
    %v2866 = vxor.u32 %v2857, 2147483648
    %v2867 = vmul.f32 %v2866, 1.442695
    %v2868 = vpow.pop %v2867
    %v2869 = vadd.f32 %v2868, 1.0
    %v2870 = vrcp.pop %v2869
    %v2871 = vmul.f32 1.0, %v2870
    %v2872 = vtanh.pop %v2858
    %v2873 = vxor.u32 %v2859, 2147483648
    %v2874 = vmul.f32 %v2873, 1.442695
    %v2875 = vpow.pop %v2874
    %v2876 = vadd.f32 %v2875, 1.0
    %v2877 = vrcp.pop %v2876
    %v2878 = vmul.f32 1.0, %v2877
    %v2879 = vmul.f32 %v2871, %v2540
    %v2880 = vmul.f32 %v2865, %v2872
    %v2881 = vadd.f32 %v2879, %v2880
    %v2882 = vtanh.pop %v2881
    %v2883 = vmul.f32 %v2878, %v2882
    %2884 = vmatprep.subr.mxu0 %v575
    %2885 = vmatpush1.msra.mxu0 %v574
    %2886 = vmatprep.subr.mxu0 %v571
    %2887 = vmatpush1.msra.mxu0 %v570
    %2888 = vmatprep.subr.mxu0 %v567
    %2889 = vmatpush1.msra.mxu0 %v566
    %2890 = vmatprep.subr.mxu0 %v563
    %2891 = vmatpush1.msra.mxu0 %v562
    %2892 = vmatprep.subr.mxu0 %v559
    %2893 = vmatpush1.msra.mxu0 %v558
    %2894 = vmatprep.subr.mxu0 %v555
    %2895 = vmatpush1.msra.mxu0 %v554
    %2896 = vmatprep.subr.mxu0 %v551
    %2897 = vmatpush1.msra.mxu0 %v550
    %2898 = vmatprep.subr.mxu0 %v547
    %2899 = vmatpush1.msra.mxu0 %v546
    %2900 = vmatprep.subr.mxu0 %v543
    %2901 = vmatpush1.msra.mxu0 %v542
    %2902 = vmatprep.subr.mxu0 %v539
    %2903 = vmatpush1.msra.mxu0 %v538
    %2904 = vmatprep.subr.mxu0 %v535
    %2905 = vmatpush1.msra.mxu0 %v534
    %2906 = vmatprep.subr.mxu0 %v531
    %2907 = vmatpush1.msra.mxu0 %v530
    %2908 = vmatprep.subr.mxu0 %v527
    %2909 = vmatpush1.msra.mxu0 %v526
    %2910 = vmatprep.subr.mxu0 %v523
    %2911 = vmatpush1.msra.mxu0 %v522
    %2912 = vmatprep.subr.mxu0 %v519
    %2913 = vmatpush1.msra.mxu0 %v518
    %2914 = vmatprep.subr.mxu0 %v515
    %2915 = vmatpush1.msra.mxu0 %v514
    %2916 = vmatprep.subr.mxu0 %v639
    %2917 = vmatpush2.msra.mxu0 %v638
    %2918 = vmatprep.subr.mxu0 %v635
    %2919 = vmatpush2.msra.mxu0 %v634
    %2920 = vmatprep.subr.mxu0 %v631
    %2921 = vmatpush2.msra.mxu0 %v630
    %2922 = vmatprep.subr.mxu0 %v627
    %2923 = vmatpush2.msra.mxu0 %v626
    %2924 = vmatprep.subr.mxu0 %v623
    %2925 = vmatpush2.msra.mxu0 %v622
    %2926 = vmatprep.subr.mxu0 %v619
    %2927 = vmatpush2.msra.mxu0 %v618
    %2928 = vmatprep.subr.mxu0 %v615
    %2929 = vmatpush2.msra.mxu0 %v614
    %2930 = vmatprep.subr.mxu0 %v611
    %2931 = vmatpush2.msra.mxu0 %v610
    %2932 = vmatprep.subr.mxu0 %v607
    %2933 = vmatpush2.msra.mxu0 %v606
    %2934 = vmatprep.subr.mxu0 %v603
    %2935 = vmatpush2.msra.mxu0 %v602
    %2936 = vmatprep.subr.mxu0 %v599
    %2937 = vmatpush2.msra.mxu0 %v598
    %2938 = vmatprep.subr.mxu0 %v595
    %2939 = vmatpush2.msra.mxu0 %v594
    %2940 = vmatprep.subr.mxu0 %v591
    %2941 = vmatpush2.msra.mxu0 %v590
    %2942 = vmatprep.subr.mxu0 %v587
    %2943 = vmatpush2.msra.mxu0 %v586
    %2944 = vmatprep.subr.mxu0 %v583
    %2945 = vmatpush2.msra.mxu0 %v582
    %2946 = vmatprep.subr.mxu0 %v579
    %2947 = vmatpush2.msra.mxu0 %v578
    %2948 = vmatprep.mubr.f32.mxu0 %v2708
    %2949 = vmatmul.mubr.f32.gmra.mxu0 %v2883
    %v2950 = vpop.f32.mrf.mxu0
    %v2951 = vadd.f32 %v821, %v2950
    %v2952 = vpop.f32.mrf.mxu0
    %v2953 = vadd.f32 %v825, %v2952
    %2954 = vdwg.mxu0
    %2955 = vmatprep.subr.mxu0 %v577
    %2956 = vmatpush1.msra.mxu0 %v576
    %2957 = vmatprep.subr.mxu0 %v573
    %2958 = vmatpush1.msra.mxu0 %v572
    %2959 = vmatprep.subr.mxu0 %v569
    %2960 = vmatpush1.msra.mxu0 %v568
    %2961 = vmatprep.subr.mxu0 %v565
    %2962 = vmatpush1.msra.mxu0 %v564
    %2963 = vmatprep.subr.mxu0 %v561
    %2964 = vmatpush1.msra.mxu0 %v560
    %2965 = vmatprep.subr.mxu0 %v557
    %2966 = vmatpush1.msra.mxu0 %v556
    %2967 = vmatprep.subr.mxu0 %v553
    %2968 = vmatpush1.msra.mxu0 %v552
    %2969 = vmatprep.subr.mxu0 %v549
    %2970 = vmatpush1.msra.mxu0 %v548
    %2971 = vmatprep.subr.mxu0 %v545
    %2972 = vmatpush1.msra.mxu0 %v544
    %2973 = vmatprep.subr.mxu0 %v541
    %2974 = vmatpush1.msra.mxu0 %v540
    %2975 = vmatprep.subr.mxu0 %v537
    %2976 = vmatpush1.msra.mxu0 %v536
    %2977 = vmatprep.subr.mxu0 %v533
    %2978 = vmatpush1.msra.mxu0 %v532
    %2979 = vmatprep.subr.mxu0 %v529
    %2980 = vmatpush1.msra.mxu0 %v528
    %2981 = vmatprep.subr.mxu0 %v525
    %2982 = vmatpush1.msra.mxu0 %v524
    %2983 = vmatprep.subr.mxu0 %v521
    %2984 = vmatpush1.msra.mxu0 %v520
    %2985 = vmatprep.subr.mxu0 %v517
    %2986 = vmatpush1.msra.mxu0 %v516
    %2987 = vmatprep.subr.mxu0 %v641
    %2988 = vmatpush2.msra.mxu0 %v640
    %2989 = vmatprep.subr.mxu0 %v637
    %2990 = vmatpush2.msra.mxu0 %v636
    %2991 = vmatprep.subr.mxu0 %v633
    %2992 = vmatpush2.msra.mxu0 %v632
    %2993 = vmatprep.subr.mxu0 %v629
    %2994 = vmatpush2.msra.mxu0 %v628
    %2995 = vmatprep.subr.mxu0 %v625
    %2996 = vmatpush2.msra.mxu0 %v624
    %2997 = vmatprep.subr.mxu0 %v621
    %2998 = vmatpush2.msra.mxu0 %v620
    %2999 = vmatprep.subr.mxu0 %v617
    %3000 = vmatpush2.msra.mxu0 %v616
    %3001 = vmatprep.subr.mxu0 %v613
    %3002 = vmatpush2.msra.mxu0 %v612
    %3003 = vmatprep.subr.mxu0 %v609
    %3004 = vmatpush2.msra.mxu0 %v608
    %3005 = vmatprep.subr.mxu0 %v605
    %3006 = vmatpush2.msra.mxu0 %v604
    %3007 = vmatprep.subr.mxu0 %v601
    %3008 = vmatpush2.msra.mxu0 %v600
    %3009 = vmatprep.subr.mxu0 %v597
    %3010 = vmatpush2.msra.mxu0 %v596
    %3011 = vmatprep.subr.mxu0 %v593
    %3012 = vmatpush2.msra.mxu0 %v592
    %3013 = vmatprep.subr.mxu0 %v589
    %3014 = vmatpush2.msra.mxu0 %v588
    %3015 = vmatprep.subr.mxu0 %v585
    %3016 = vmatpush2.msra.mxu0 %v584
    %3017 = vmatprep.subr.mxu0 %v581
    %3018 = vmatpush2.msra.mxu0 %v580
    %3019 = vmatprep.mubr.f32.mxu0 %v2708
    %3020 = vmatmul.mubr.f32.gmra.mxu0 %v2883
    %v3021 = vpop.f32.mrf.mxu0
    %v3022 = vadd.f32 %v829, %v3021
    %v3023 = vpop.f32.mrf.mxu0
    %v3024 = vadd.f32 %v833, %v3023
    %3025 = vdwg.mxu0
    %v3026 = vxor.u32 %v2951, 2147483648
    %v3027 = vmul.f32 %v3026, 1.442695
    %v3028 = vpow.pop %v3027
    %v3029 = vadd.f32 %v3028, 1.0
    %v3030 = vrcp.pop %v3029
    %v3031 = vmul.f32 1.0, %v3030
    %v3032 = vxor.u32 %v2953, 2147483648
    %v3033 = vmul.f32 %v3032, 1.442695
    %v3034 = vpow.pop %v3033
    %v3035 = vadd.f32 %v3034, 1.0
    %v3036 = vrcp.pop %v3035
    %v3037 = vmul.f32 1.0, %v3036
    %v3038 = vtanh.pop %v3022
    %v3039 = vxor.u32 %v3024, 2147483648
    %v3040 = vmul.f32 %v3039, 1.442695
    %v3041 = vpow.pop %v3040
    %v3042 = vadd.f32 %v3041, 1.0
    %v3043 = vrcp.pop %v3042
    %v3044 = vmul.f32 1.0, %v3043
    %v3045 = vmul.f32 %v3037, %v2706
    %v3046 = vmul.f32 %v3031, %v3038
    %v3047 = vadd.f32 %v3045, %v3046
    %v3048 = vtanh.pop %v3047
    %v3049 = vmul.f32 %v3044, %v3048
    %s3050 = scalar_lea.vmem [#allocation2], 224
    %v3051 = vld [vmem:[%s3050] sm:$0xff]
    %v3052 = vld [vmem:[%s3050 + $0x8] sm:$0xff]
    %v3053 = vld [vmem:[%s3050 + $0x10] sm:$0xff]
    %v3054 = vld [vmem:[%s3050 + $0x18] sm:$0xff]
    %3055 = vmatprep.subr.mxu0 %v511
    %3056 = vmatpush1.msra.mxu0 %v510
    %3057 = vmatprep.subr.mxu0 %v507
    %3058 = vmatpush1.msra.mxu0 %v506
    %3059 = vmatprep.subr.mxu0 %v503
    %3060 = vmatpush1.msra.mxu0 %v502
    %3061 = vmatprep.subr.mxu0 %v499
    %3062 = vmatpush1.msra.mxu0 %v498
    %3063 = vmatprep.subr.mxu0 %v495
    %3064 = vmatpush1.msra.mxu0 %v494
    %3065 = vmatprep.subr.mxu0 %v491
    %3066 = vmatpush1.msra.mxu0 %v490
    %3067 = vmatprep.subr.mxu0 %v487
    %3068 = vmatpush1.msra.mxu0 %v486
    %3069 = vmatprep.subr.mxu0 %v483
    %3070 = vmatpush1.msra.mxu0 %v482
    %3071 = vmatprep.subr.mxu0 %v479
    %3072 = vmatpush1.msra.mxu0 %v478
    %3073 = vmatprep.subr.mxu0 %v475
    %3074 = vmatpush1.msra.mxu0 %v474
    %3075 = vmatprep.subr.mxu0 %v471
    %3076 = vmatpush1.msra.mxu0 %v470
    %3077 = vmatprep.subr.mxu0 %v467
    %3078 = vmatpush1.msra.mxu0 %v466
    %3079 = vmatprep.subr.mxu0 %v463
    %3080 = vmatpush1.msra.mxu0 %v462
    %3081 = vmatprep.subr.mxu0 %v459
    %3082 = vmatpush1.msra.mxu0 %v458
    %3083 = vmatprep.subr.mxu0 %v455
    %3084 = vmatpush1.msra.mxu0 %v454
    %3085 = vmatprep.subr.mxu0 %v451
    %3086 = vmatpush1.msra.mxu0 %v450
    %3087 = vmatprep.subr.mxu0 0.0
    %3088 = vmatpush2.msra.mxu0 0.0
    %3089 = vmatprep.subr.mxu0 0.0
    %3090 = vmatpush2.msra.mxu0 0.0
    %3091 = vmatprep.subr.mxu0 0.0
    %3092 = vmatpush2.msra.mxu0 0.0
    %3093 = vmatprep.subr.mxu0 0.0
    %3094 = vmatpush2.msra.mxu0 0.0
    %3095 = vmatprep.subr.mxu0 0.0
    %3096 = vmatpush2.msra.mxu0 0.0
    %3097 = vmatprep.subr.mxu0 0.0
    %3098 = vmatpush2.msra.mxu0 0.0
    %3099 = vmatprep.subr.mxu0 0.0
    %3100 = vmatpush2.msra.mxu0 0.0
    %3101 = vmatprep.subr.mxu0 0.0
    %3102 = vmatpush2.msra.mxu0 0.0
    %3103 = vmatprep.subr.mxu0 0.0
    %3104 = vmatpush2.msra.mxu0 0.0
    %3105 = vmatprep.subr.mxu0 0.0
    %3106 = vmatpush2.msra.mxu0 0.0
    %3107 = vmatprep.subr.mxu0 0.0
    %3108 = vmatpush2.msra.mxu0 0.0
    %3109 = vmatprep.subr.mxu0 0.0
    %3110 = vmatpush2.msra.mxu0 0.0
    %3111 = vmatprep.subr.mxu0 0.0
    %3112 = vmatpush2.msra.mxu0 0.0
    %3113 = vmatprep.subr.mxu0 0.0
    %3114 = vmatpush2.msra.mxu0 0.0
    %3115 = vmatprep.subr.mxu0 0.0
    %3116 = vmatpush2.msra.mxu0 0.0
    %3117 = vmatprep.subr.mxu0 0.0
    %3118 = vmatpush2.msra.mxu0 0.0
    %3119 = vmatprep.mubr.f32.mxu0 0.0
    %3120 = vmatmul.mubr.f32.gmra.mxu0 %v2883
    %v3121 = vpop.f32.mrf.mxu0
    %v3122 = vadd.f32 0.0, %v3121
    %v3123 = vpop.f32.mrf.mxu0
    %v3124 = vadd.f32 0.0, %v3123
    %3125 = vdwg.mxu0
    %3126 = vmatprep.subr.mxu0 %v513
    %3127 = vmatpush1.msra.mxu0 %v512
    %3128 = vmatprep.subr.mxu0 %v509
    %3129 = vmatpush1.msra.mxu0 %v508
    %3130 = vmatprep.subr.mxu0 %v505
    %3131 = vmatpush1.msra.mxu0 %v504
    %3132 = vmatprep.subr.mxu0 %v501
    %3133 = vmatpush1.msra.mxu0 %v500
    %3134 = vmatprep.subr.mxu0 %v497
    %3135 = vmatpush1.msra.mxu0 %v496
    %3136 = vmatprep.subr.mxu0 %v493
    %3137 = vmatpush1.msra.mxu0 %v492
    %3138 = vmatprep.subr.mxu0 %v489
    %3139 = vmatpush1.msra.mxu0 %v488
    %3140 = vmatprep.subr.mxu0 %v485
    %3141 = vmatpush1.msra.mxu0 %v484
    %3142 = vmatprep.subr.mxu0 %v481
    %3143 = vmatpush1.msra.mxu0 %v480
    %3144 = vmatprep.subr.mxu0 %v477
    %3145 = vmatpush1.msra.mxu0 %v476
    %3146 = vmatprep.subr.mxu0 %v473
    %3147 = vmatpush1.msra.mxu0 %v472
    %3148 = vmatprep.subr.mxu0 %v469
    %3149 = vmatpush1.msra.mxu0 %v468
    %3150 = vmatprep.subr.mxu0 %v465
    %3151 = vmatpush1.msra.mxu0 %v464
    %3152 = vmatprep.subr.mxu0 %v461
    %3153 = vmatpush1.msra.mxu0 %v460
    %3154 = vmatprep.subr.mxu0 %v457
    %3155 = vmatpush1.msra.mxu0 %v456
    %3156 = vmatprep.subr.mxu0 %v453
    %3157 = vmatpush1.msra.mxu0 %v452
    %3158 = vmatprep.subr.mxu0 0.0
    %3159 = vmatpush2.msra.mxu0 0.0
    %3160 = vmatprep.subr.mxu0 0.0
    %3161 = vmatpush2.msra.mxu0 0.0
    %3162 = vmatprep.subr.mxu0 0.0
    %3163 = vmatpush2.msra.mxu0 0.0
    %3164 = vmatprep.subr.mxu0 0.0
    %3165 = vmatpush2.msra.mxu0 0.0
    %3166 = vmatprep.subr.mxu0 0.0
    %3167 = vmatpush2.msra.mxu0 0.0
    %3168 = vmatprep.subr.mxu0 0.0
    %3169 = vmatpush2.msra.mxu0 0.0
    %3170 = vmatprep.subr.mxu0 0.0
    %3171 = vmatpush2.msra.mxu0 0.0
    %3172 = vmatprep.subr.mxu0 0.0
    %3173 = vmatpush2.msra.mxu0 0.0
    %3174 = vmatprep.subr.mxu0 0.0
    %3175 = vmatpush2.msra.mxu0 0.0
    %3176 = vmatprep.subr.mxu0 0.0
    %3177 = vmatpush2.msra.mxu0 0.0
    %3178 = vmatprep.subr.mxu0 0.0
    %3179 = vmatpush2.msra.mxu0 0.0
    %3180 = vmatprep.subr.mxu0 0.0
    %3181 = vmatpush2.msra.mxu0 0.0
    %3182 = vmatprep.subr.mxu0 0.0
    %3183 = vmatpush2.msra.mxu0 0.0
    %3184 = vmatprep.subr.mxu0 0.0
    %3185 = vmatpush2.msra.mxu0 0.0
    %3186 = vmatprep.subr.mxu0 0.0
    %3187 = vmatpush2.msra.mxu0 0.0
    %3188 = vmatprep.subr.mxu0 0.0
    %3189 = vmatpush2.msra.mxu0 0.0
    %3190 = vmatprep.mubr.f32.mxu0 0.0
    %3191 = vmatmul.mubr.f32.gmra.mxu0 %v2883
    %v3192 = vpop.f32.mrf.mxu0
    %v3193 = vadd.f32 0.0, %v3192
    %v3194 = vpop.f32.mrf.mxu0
    %v3195 = vadd.f32 0.0, %v3194
    %3196 = vdwg.mxu0
    %v3197 = vadd.f32 %v3051, %v3122
    %v3198 = vadd.f32 %v3052, %v3124
    %v3199 = vadd.f32 %v3053, %v3193
    %v3200 = vadd.f32 %v3054, %v3195
    %v3201 = vxor.u32 %v3197, 2147483648
    %v3202 = vmul.f32 %v3201, 1.442695
    %v3203 = vpow.pop %v3202
    %v3204 = vadd.f32 %v3203, 1.0
    %v3205 = vrcp.pop %v3204
    %v3206 = vmul.f32 1.0, %v3205
    %v3207 = vxor.u32 %v3198, 2147483648
    %v3208 = vmul.f32 %v3207, 1.442695
    %v3209 = vpow.pop %v3208
    %v3210 = vadd.f32 %v3209, 1.0
    %v3211 = vrcp.pop %v3210
    %v3212 = vmul.f32 1.0, %v3211
    %v3213 = vtanh.pop %v3199
    %v3214 = vxor.u32 %v3200, 2147483648
    %v3215 = vmul.f32 %v3214, 1.442695
    %v3216 = vpow.pop %v3215
    %v3217 = vadd.f32 %v3216, 1.0
    %v3218 = vrcp.pop %v3217
    %v3219 = vmul.f32 1.0, %v3218
    %v3220 = vmul.f32 %v3212, %v2881
    %v3221 = vmul.f32 %v3206, %v3213
    %v3222 = vadd.f32 %v3220, %v3221
    %v3223 = vtanh.pop %v3222
    %v3224 = vmul.f32 %v3219, %v3223
    %3225 = vmatprep.subr.mxu0 %v575
    %3226 = vmatpush1.msra.mxu0 %v574
    %3227 = vmatprep.subr.mxu0 %v571
    %3228 = vmatpush1.msra.mxu0 %v570
    %3229 = vmatprep.subr.mxu0 %v567
    %3230 = vmatpush1.msra.mxu0 %v566
    %3231 = vmatprep.subr.mxu0 %v563
    %3232 = vmatpush1.msra.mxu0 %v562
    %3233 = vmatprep.subr.mxu0 %v559
    %3234 = vmatpush1.msra.mxu0 %v558
    %3235 = vmatprep.subr.mxu0 %v555
    %3236 = vmatpush1.msra.mxu0 %v554
    %3237 = vmatprep.subr.mxu0 %v551
    %3238 = vmatpush1.msra.mxu0 %v550
    %3239 = vmatprep.subr.mxu0 %v547
    %3240 = vmatpush1.msra.mxu0 %v546
    %3241 = vmatprep.subr.mxu0 %v543
    %3242 = vmatpush1.msra.mxu0 %v542
    %3243 = vmatprep.subr.mxu0 %v539
    %3244 = vmatpush1.msra.mxu0 %v538
    %3245 = vmatprep.subr.mxu0 %v535
    %3246 = vmatpush1.msra.mxu0 %v534
    %3247 = vmatprep.subr.mxu0 %v531
    %3248 = vmatpush1.msra.mxu0 %v530
    %3249 = vmatprep.subr.mxu0 %v527
    %3250 = vmatpush1.msra.mxu0 %v526
    %3251 = vmatprep.subr.mxu0 %v523
    %3252 = vmatpush1.msra.mxu0 %v522
    %3253 = vmatprep.subr.mxu0 %v519
    %3254 = vmatpush1.msra.mxu0 %v518
    %3255 = vmatprep.subr.mxu0 %v515
    %3256 = vmatpush1.msra.mxu0 %v514
    %3257 = vmatprep.subr.mxu0 %v639
    %3258 = vmatpush2.msra.mxu0 %v638
    %3259 = vmatprep.subr.mxu0 %v635
    %3260 = vmatpush2.msra.mxu0 %v634
    %3261 = vmatprep.subr.mxu0 %v631
    %3262 = vmatpush2.msra.mxu0 %v630
    %3263 = vmatprep.subr.mxu0 %v627
    %3264 = vmatpush2.msra.mxu0 %v626
    %3265 = vmatprep.subr.mxu0 %v623
    %3266 = vmatpush2.msra.mxu0 %v622
    %3267 = vmatprep.subr.mxu0 %v619
    %3268 = vmatpush2.msra.mxu0 %v618
    %3269 = vmatprep.subr.mxu0 %v615
    %3270 = vmatpush2.msra.mxu0 %v614
    %3271 = vmatprep.subr.mxu0 %v611
    %3272 = vmatpush2.msra.mxu0 %v610
    %3273 = vmatprep.subr.mxu0 %v607
    %3274 = vmatpush2.msra.mxu0 %v606
    %3275 = vmatprep.subr.mxu0 %v603
    %3276 = vmatpush2.msra.mxu0 %v602
    %3277 = vmatprep.subr.mxu0 %v599
    %3278 = vmatpush2.msra.mxu0 %v598
    %3279 = vmatprep.subr.mxu0 %v595
    %3280 = vmatpush2.msra.mxu0 %v594
    %3281 = vmatprep.subr.mxu0 %v591
    %3282 = vmatpush2.msra.mxu0 %v590
    %3283 = vmatprep.subr.mxu0 %v587
    %3284 = vmatpush2.msra.mxu0 %v586
    %3285 = vmatprep.subr.mxu0 %v583
    %3286 = vmatpush2.msra.mxu0 %v582
    %3287 = vmatprep.subr.mxu0 %v579
    %3288 = vmatpush2.msra.mxu0 %v578
    %3289 = vmatprep.mubr.f32.mxu0 %v3049
    %3290 = vmatmul.mubr.f32.gmra.mxu0 %v3224
    %v3291 = vpop.f32.mrf.mxu0
    %v3292 = vadd.f32 %v821, %v3291
    %v3293 = vpop.f32.mrf.mxu0
    %v3294 = vadd.f32 %v825, %v3293
    %3295 = vdwg.mxu0
    %3296 = vmatprep.subr.mxu0 %v577
    %3297 = vmatpush1.msra.mxu0 %v576
    %3298 = vmatprep.subr.mxu0 %v573
    %3299 = vmatpush1.msra.mxu0 %v572
    %3300 = vmatprep.subr.mxu0 %v569
    %3301 = vmatpush1.msra.mxu0 %v568
    %3302 = vmatprep.subr.mxu0 %v565
    %3303 = vmatpush1.msra.mxu0 %v564
    %3304 = vmatprep.subr.mxu0 %v561
    %3305 = vmatpush1.msra.mxu0 %v560
    %3306 = vmatprep.subr.mxu0 %v557
    %3307 = vmatpush1.msra.mxu0 %v556
    %3308 = vmatprep.subr.mxu0 %v553
    %3309 = vmatpush1.msra.mxu0 %v552
    %3310 = vmatprep.subr.mxu0 %v549
    %3311 = vmatpush1.msra.mxu0 %v548
    %3312 = vmatprep.subr.mxu0 %v545
    %3313 = vmatpush1.msra.mxu0 %v544
    %3314 = vmatprep.subr.mxu0 %v541
    %3315 = vmatpush1.msra.mxu0 %v540
    %3316 = vmatprep.subr.mxu0 %v537
    %3317 = vmatpush1.msra.mxu0 %v536
    %3318 = vmatprep.subr.mxu0 %v533
    %3319 = vmatpush1.msra.mxu0 %v532
    %3320 = vmatprep.subr.mxu0 %v529
    %3321 = vmatpush1.msra.mxu0 %v528
    %3322 = vmatprep.subr.mxu0 %v525
    %3323 = vmatpush1.msra.mxu0 %v524
    %3324 = vmatprep.subr.mxu0 %v521
    %3325 = vmatpush1.msra.mxu0 %v520
    %3326 = vmatprep.subr.mxu0 %v517
    %3327 = vmatpush1.msra.mxu0 %v516
    %3328 = vmatprep.subr.mxu0 %v641
    %3329 = vmatpush2.msra.mxu0 %v640
    %3330 = vmatprep.subr.mxu0 %v637
    %3331 = vmatpush2.msra.mxu0 %v636
    %3332 = vmatprep.subr.mxu0 %v633
    %3333 = vmatpush2.msra.mxu0 %v632
    %3334 = vmatprep.subr.mxu0 %v629
    %3335 = vmatpush2.msra.mxu0 %v628
    %3336 = vmatprep.subr.mxu0 %v625
    %3337 = vmatpush2.msra.mxu0 %v624
    %3338 = vmatprep.subr.mxu0 %v621
    %3339 = vmatpush2.msra.mxu0 %v620
    %3340 = vmatprep.subr.mxu0 %v617
    %3341 = vmatpush2.msra.mxu0 %v616
    %3342 = vmatprep.subr.mxu0 %v613
    %3343 = vmatpush2.msra.mxu0 %v612
    %3344 = vmatprep.subr.mxu0 %v609
    %3345 = vmatpush2.msra.mxu0 %v608
    %3346 = vmatprep.subr.mxu0 %v605
    %3347 = vmatpush2.msra.mxu0 %v604
    %3348 = vmatprep.subr.mxu0 %v601
    %3349 = vmatpush2.msra.mxu0 %v600
    %3350 = vmatprep.subr.mxu0 %v597
    %3351 = vmatpush2.msra.mxu0 %v596
    %3352 = vmatprep.subr.mxu0 %v593
    %3353 = vmatpush2.msra.mxu0 %v592
    %3354 = vmatprep.subr.mxu0 %v589
    %3355 = vmatpush2.msra.mxu0 %v588
    %3356 = vmatprep.subr.mxu0 %v585
    %3357 = vmatpush2.msra.mxu0 %v584
    %3358 = vmatprep.subr.mxu0 %v581
    %3359 = vmatpush2.msra.mxu0 %v580
    %3360 = vmatprep.mubr.f32.mxu0 %v3049
    %3361 = vmatmul.mubr.f32.gmra.mxu0 %v3224
    %v3362 = vpop.f32.mrf.mxu0
    %v3363 = vadd.f32 %v829, %v3362
    %v3364 = vpop.f32.mrf.mxu0
    %v3365 = vadd.f32 %v833, %v3364
    %3366 = vdwg.mxu0
    %v3367 = vxor.u32 %v3292, 2147483648
    %v3368 = vmul.f32 %v3367, 1.442695
    %v3369 = vpow.pop %v3368
    %v3370 = vadd.f32 %v3369, 1.0
    %v3371 = vrcp.pop %v3370
    %v3372 = vmul.f32 1.0, %v3371
    %v3373 = vxor.u32 %v3294, 2147483648
    %v3374 = vmul.f32 %v3373, 1.442695
    %v3375 = vpow.pop %v3374
    %v3376 = vadd.f32 %v3375, 1.0
    %v3377 = vrcp.pop %v3376
    %v3378 = vmul.f32 1.0, %v3377
    %v3379 = vtanh.pop %v3363
    %v3380 = vxor.u32 %v3365, 2147483648
    %v3381 = vmul.f32 %v3380, 1.442695
    %v3382 = vpow.pop %v3381
    %v3383 = vadd.f32 %v3382, 1.0
    %v3384 = vrcp.pop %v3383
    %v3385 = vmul.f32 1.0, %v3384
    %v3386 = vmul.f32 %v3378, %v3047
    %v3387 = vmul.f32 %v3372, %v3379
    %v3388 = vadd.f32 %v3386, %v3387
    %v3389 = vtanh.pop %v3388
    %v3390 = vmul.f32 %v3385, %v3389
    %v3391 = vld [vmem:[#allocation11] sm:$0xff]
    %v3392 = vld [vmem:[#allocation11 + $0x8] sm:$0xff]
    %v3393 = vld [vmem:[#allocation11 + $0x10] sm:$0xff]
    %v3394 = vld [vmem:[#allocation11 + $0x18] sm:$0xff]
    %v3395 = vld [vmem:[#allocation11 + $0x20] sm:$0xff]
    %v3396 = vld [vmem:[#allocation11 + $0x28] sm:$0xff]
    %v3397 = vld [vmem:[#allocation11 + $0x30] sm:$0xff]
    %v3398 = vld [vmem:[#allocation11 + $0x38] sm:$0xff]
    %v3399 = vld [vmem:[#allocation11 + $0x40] sm:$0xff]
    %v3400 = vld [vmem:[#allocation11 + $0x48] sm:$0xff]
    %v3401 = vld [vmem:[#allocation11 + $0x50] sm:$0xff]
    %v3402 = vld [vmem:[#allocation11 + $0x58] sm:$0xff]
    %v3403 = vld [vmem:[#allocation11 + $0x60] sm:$0xff]
    %v3404 = vld [vmem:[#allocation11 + $0x68] sm:$0xff]
    %v3405 = vld [vmem:[#allocation11 + $0x70] sm:$0xff]
    %v3406 = vld [vmem:[#allocation11 + $0x78] sm:$0xff]
    %v3407 = vld [vmem:[%s7] sm:$0x1]
    %v3409 = vlaneseq
    %v3410 = vshrl.u32 %v3409, 7
    %v3411 = vsub.s32 0, %v3410
    %v3412 = vrot.slane %v3407, %v3411
    %3414 = vmatprep.subr.mxu0 0.0
    %3415 = vmatpush1.msra.mxu0 %v3406
    %3416 = vmatprep.subr.mxu0 0.0
    %3417 = vmatpush1.msra.mxu0 %v3405
    %3418 = vmatprep.subr.mxu0 0.0
    %3419 = vmatpush1.msra.mxu0 %v3404
    %3420 = vmatprep.subr.mxu0 0.0
    %3421 = vmatpush1.msra.mxu0 %v3403
    %3422 = vmatprep.subr.mxu0 0.0
    %3423 = vmatpush1.msra.mxu0 %v3402
    %3424 = vmatprep.subr.mxu0 0.0
    %3425 = vmatpush1.msra.mxu0 %v3401
    %3426 = vmatprep.subr.mxu0 0.0
    %3427 = vmatpush1.msra.mxu0 %v3400
    %3428 = vmatprep.subr.mxu0 0.0
    %3429 = vmatpush1.msra.mxu0 %v3399
    %3430 = vmatprep.subr.mxu0 0.0
    %3431 = vmatpush1.msra.mxu0 %v3398
    %3432 = vmatprep.subr.mxu0 0.0
    %3433 = vmatpush1.msra.mxu0 %v3397
    %3434 = vmatprep.subr.mxu0 0.0
    %3435 = vmatpush1.msra.mxu0 %v3396
    %3436 = vmatprep.subr.mxu0 0.0
    %3437 = vmatpush1.msra.mxu0 %v3395
    %3438 = vmatprep.subr.mxu0 0.0
    %3439 = vmatpush1.msra.mxu0 %v3394
    %3440 = vmatprep.subr.mxu0 0.0
    %3441 = vmatpush1.msra.mxu0 %v3393
    %3442 = vmatprep.subr.mxu0 0.0
    %3443 = vmatpush1.msra.mxu0 %v3392
    %3444 = vmatprep.subr.mxu0 0.0
    %3445 = vmatpush1.msra.mxu0 %v3391
    %3446 = vmatprep.subr.mxu0 0.0
    %3447 = vmatpush2.msra.mxu0 0.0
    %3448 = vmatprep.subr.mxu0 0.0
    %3449 = vmatpush2.msra.mxu0 0.0
    %3450 = vmatprep.subr.mxu0 0.0
    %3451 = vmatpush2.msra.mxu0 0.0
    %3452 = vmatprep.subr.mxu0 0.0
    %3453 = vmatpush2.msra.mxu0 0.0
    %3454 = vmatprep.subr.mxu0 0.0
    %3455 = vmatpush2.msra.mxu0 0.0
    %3456 = vmatprep.subr.mxu0 0.0
    %3457 = vmatpush2.msra.mxu0 0.0
    %3458 = vmatprep.subr.mxu0 0.0
    %3459 = vmatpush2.msra.mxu0 0.0
    %3460 = vmatprep.subr.mxu0 0.0
    %3461 = vmatpush2.msra.mxu0 0.0
    %3462 = vmatprep.subr.mxu0 0.0
    %3463 = vmatpush2.msra.mxu0 0.0
    %3464 = vmatprep.subr.mxu0 0.0
    %3465 = vmatpush2.msra.mxu0 0.0
    %3466 = vmatprep.subr.mxu0 0.0
    %3467 = vmatpush2.msra.mxu0 0.0
    %3468 = vmatprep.subr.mxu0 0.0
    %3469 = vmatpush2.msra.mxu0 0.0
    %3470 = vmatprep.subr.mxu0 0.0
    %3471 = vmatpush2.msra.mxu0 0.0
    %3472 = vmatprep.subr.mxu0 0.0
    %3473 = vmatpush2.msra.mxu0 0.0
    %3474 = vmatprep.subr.mxu0 0.0
    %3475 = vmatpush2.msra.mxu0 0.0
    %3476 = vmatprep.subr.mxu0 0.0
    %3477 = vmatpush2.msra.mxu0 0.0
    %3478 = vmatprep.mubr.f32.mxu0 0.0
    %3479 = vmatmul.mubr.f32.gmra.mxu0 %v3390
    %v3480 = vpop.f32.mrf.mxu0
    %v3481 = vadd.f32 %v3412, %v3480
    %v3482 = vpop.f32.mrf.mxu0
    %3483 = vdwg.mxu0
    %3484 = vst [vmem:[#allocation12] sm:$0xff] %v3481
    // Predicated region
    $region54: #{tpu_custom_call.1} parent=1 // pred_check
      _
    $region55: #{tpu_custom_call.1} parent=1 // pred_check_branch
      %3486 = sbr.rel (0) target = $region57
    $region56: #{tpu_custom_call.1} parent=1 // pred_region
      %s3488 = ssub.s32 128, 128
      %3489 = vsyncadd [#allocation5], %s3488
      %s3491 = sshll.u32 [#allocation12], 4
      %s3492 = int_to_ptr.vmem [resolvable:$true] %s3491
      %3494 = dma.vmem_to_hbm [thread:$0]  %s3492, 128, %s8, [#allocation5]
    $region57: #{tpu_custom_call.1} parent=1 // pred_fallthru
      _
    // Predicated region
    $region58: #{tpu_custom_call.1} parent=1 // pred_check
      _
    $region59: #{tpu_custom_call.1} parent=1 // pred_check_branch
      %3496 = sbr.rel (0) target = $region61
    $region60: #{tpu_custom_call.1} parent=1 // pred_region
      %3497 = dma.done [#allocation5], 128
    $region61: #{tpu_custom_call.1} parent=1 // pred_fallthru
      _
    %3498 = vsyncpa [#allocation4], 1
    %3499 = vsyncpa [#allocation7], 1
    %3500 = vsyncpa [#allocation10], 1
    %3501 = vsyncpa [#allocation5], 1

</llo_original>
